<compile_context>
chip_gen: v5e
topology: v5e:2x2
jax: 0.10.0
libtpu: 0.0.40
codegen_flags: <defaults>
</compile_context>

<pallas_src>
from functools import partial

import jax
import jax.numpy as jnp
from jax.experimental import pallas as pl
from jax.experimental.pallas import tpu as pltpu

LANE = 128      # lane width (last-dim tiling unit)
SUBLANE = 8     # sublane width (second-to-last-dim tiling unit)
TN = 512        # output-column tile width (4 MiB weight stripe at K=2048 fp32)


def _round_up(x, m):
    return ((x + m - 1) // m) * m


# ---------------------------------------------------------------------------
# Single Linear (+ optional fused ReLU): full-K, wide-N tiles, no accumulator.
# Used for the first (784->2000) and last (2000->10) layers.
# ---------------------------------------------------------------------------
def _linear_kernel(x_ref, w_ref, b_ref, o_ref, *, apply_relu):
    out = jnp.dot(x_ref[...], w_ref[...], preferred_element_type=jnp.float32)
    out = out + b_ref[...]          # bias broadcast over rows
    if apply_relu:
        out = jnp.maximum(out, 0.0)
    o_ref[...] = out.astype(o_ref.dtype)


def linear_pallas(x, w, b, *, apply_relu, tn):
    """y = x @ w + b (optional fused ReLU).  All operands are pre-padded:
    x: (M, K), w: (K, N), b: (1, N) with M % 8 == 0, K % 128 == 0, N % tn == 0."""
    M, K = x.shape
    K2, N = w.shape
    assert K == K2 and N % tn == 0 and M % SUBLANE == 0 and K % LANE == 0

    return pl.pallas_call(
        partial(_linear_kernel, apply_relu=apply_relu),
        out_shape=jax.ShapeDtypeStruct((M, N), jnp.float32),
        grid_spec=pltpu.PrefetchScalarGridSpec(
            num_scalar_prefetch=0,
            grid=(N // tn,),
            in_specs=[
                pl.BlockSpec((M, K), lambda j: (0, 0)),    # activation, resident
                pl.BlockSpec((K, tn), lambda j: (0, j)),   # weight column stripe
                pl.BlockSpec((1, tn), lambda j: (0, j)),   # bias stripe
            ],
            out_specs=pl.BlockSpec((M, tn), lambda j: (0, j)),
        ),
        compiler_params=pltpu.CompilerParams(
            dimension_semantics=("parallel",)),
    )(x, w, b)


# ---------------------------------------------------------------------------
# Fused stack of L identical hidden layers: (Linear(H->H) + ReLU) x L in one
# pallas_call.  Grid = (L, H // tn); the current activation lives in a VMEM
# scratch across all grid steps, and only the final activation is written back.
# ---------------------------------------------------------------------------
def _fused_hidden_kernel(x_ref, w_ref, b_ref, o_ref, act_ref, nxt_ref, *, nt, tn):
    l = pl.program_id(0)
    n = pl.program_id(1)

    # First step of the whole grid: load the incoming activation into the
    # resident scratch buffer.
    @pl.when(jnp.logical_and(l == 0, n == 0))
    def _():
        act_ref[...] = x_ref[...]

    # One output-column stripe of the current layer.
    tile = jnp.dot(act_ref[...], w_ref[0], preferred_element_type=jnp.float32)
    tile = jnp.maximum(tile + b_ref[0], 0.0)
    nxt_ref[n] = tile                       # dynamic index on the leading axis

    # End of a layer: assemble the stripes into the resident activation
    # (static-slice copies, no dynamic lane offsets).
    @pl.when(n == nt - 1)
    def _():
        for t in range(nt):                 # static unroll
            act_ref[:, t * tn:(t + 1) * tn] = nxt_ref[t]

    # End of the last layer: write the full, lane-dense output once.
    @pl.when(jnp.logical_and(l == pl.num_programs(0) - 1, n == nt - 1))
    def _():
        o_ref[...] = act_ref[...]


def fused_hidden_pallas(x, w_stack, b_stack, *, tn):
    """Applies L layers of relu(x @ W[l] + b[l]).  x: (M, H) padded,
    w_stack: (L, H, H), b_stack: (L, 1, H)."""
    M, H = x.shape
    L, H2, H3 = w_stack.shape
    assert H == H2 == H3 and H % tn == 0 and M % SUBLANE == 0
    nt = H // tn

    return pl.pallas_call(
        partial(_fused_hidden_kernel, nt=nt, tn=tn),
        out_shape=jax.ShapeDtypeStruct((M, H), jnp.float32),
        grid_spec=pltpu.PrefetchScalarGridSpec(
            num_scalar_prefetch=0,
            grid=(L, nt),
            in_specs=[
                pl.BlockSpec((M, H), lambda l, n: (0, 0)),      # input act (fetched once)
                pl.BlockSpec((1, H, tn), lambda l, n: (l, 0, n)),  # weight stripe
                pl.BlockSpec((1, 1, tn), lambda l, n: (l, 0, n)),  # bias stripe
            ],
            out_specs=pl.BlockSpec((M, H), lambda l, n: (0, 0)),   # written once at end
            scratch_shapes=[
                pltpu.VMEM((M, H), jnp.float32),        # resident current activation
                pltpu.VMEM((nt, M, tn), jnp.float32),   # next-layer stripes
            ],
        ),
        compiler_params=pltpu.CompilerParams(
            # Both axes carry a dependency through the resident activation scratch.
            dimension_semantics=("arbitrary", "arbitrary")),
    )(x, w_stack, b_stack)


# ---------------------------------------------------------------------------
# Parameters
# ---------------------------------------------------------------------------
def init_params(key, input_size, num_classes, hidden=2000):
    """Kaiming-uniform (nonlinearity='relu') weights, zero bias, like Net.weight_init.
    Returns a list of (w_t, b) with w_t stored transposed as (in, out)."""
    dims = [input_size] + [hidden] * 6 + [num_classes]
    params = []
    for i in range(len(dims) - 1):
        fan_in, fan_out = dims[i], dims[i + 1]
        key, sub = jax.random.split(key)
        gain = jnp.sqrt(2.0)                     # relu gain
        bound = gain * jnp.sqrt(3.0 / fan_in)
        w_t = jax.random.uniform(
            sub, (fan_in, fan_out), minval=-bound, maxval=bound, dtype=jnp.float32
        )
        b = jnp.zeros((fan_out,), dtype=jnp.float32)
        params.append((w_t, b))
    return params


def pack_params(params):
    """Pad (to lane multiples) + stack parameters ONCE, so no per-forward padding."""
    (w0, b0) = params[0]
    hidden = params[1:-1]
    (wL, bL) = params[-1]

    K0, H = w0.shape
    NC = wL.shape[1]
    K0p = _round_up(K0, LANE)
    Hp = _round_up(H, LANE)
    NCp = _round_up(NC, LANE)

    w0p = jnp.pad(w0, ((0, K0p - K0), (0, Hp - H)))
    b0p = jnp.pad(b0, (0, Hp - H)).reshape(1, Hp)

    wh = jnp.stack([jnp.pad(w, ((0, Hp - H), (0, Hp - H))) for w, _ in hidden])
    bh = jnp.stack([jnp.pad(b, (0, Hp - H)).reshape(1, Hp) for _, b in hidden])

    wLp = jnp.pad(wL, ((0, Hp - H), (0, NCp - NC)))
    bLp = jnp.pad(bL, (0, NCp - NC)).reshape(1, NCp)

    # TODO(synk): optionally cast weights to bfloat16 here for ~2x HBM traffic
    # reduction (changes numerics vs the fp32 PyTorch reference).
    return dict(w0=w0p, b0=b0p, wh=wh, bh=bh, w_out=wLp, b_out=bLp)


# ---------------------------------------------------------------------------
# Forward pass
# ---------------------------------------------------------------------------
def net_forward(x, packed, *, num_classes):
    """Forward pass of Net: 6 x (Linear + ReLU) + final Linear."""
    B, K = x.shape
    Bp = _round_up(max(B, SUBLANE), SUBLANE)
    K0p = packed["w0"].shape[0]

    # Only the raw input needs padding at runtime (tiny: batch x 784 -> 896).
    xp = jnp.pad(x, ((0, Bp - B), (0, K0p - K)))

    h = linear_pallas(xp, packed["w0"], packed["b0"], apply_relu=True, tn=TN)
    h = fused_hidden_pallas(h, packed["wh"], packed["bh"], tn=TN)
    ncp = packed["w_out"].shape[1]
    out = linear_pallas(h, packed["w_out"], packed["b_out"],
                        apply_relu=False, tn=min(TN, ncp))
    return out[:B, :num_classes]


def net_forward_ref(x, params):
    h = x
    n = len(params)
    for idx, (w_t, b) in enumerate(params):
        h = h @ w_t + b
        if idx < n - 1:
            h = jnp.maximum(h, 0.0)
    return h


if __name__ == "__main__":
    input_size = 784   # flattened 28x28 MNIST image (per module docstring)
    num_classes = 10
    batch = 8

    key = jax.random.PRNGKey(0)
    key, xkey = jax.random.split(key)
    x = jax.random.normal(xkey, (batch, input_size), dtype=jnp.float32)

    params = init_params(key, input_size, num_classes)
    packed = pack_params(params)

    forward = jax.jit(partial(net_forward, num_classes=num_classes))

    y = forward(x, packed)
    y = jax.block_until_ready(y)

    y_ref = net_forward_ref(x, params)
    assert y.shape == (batch, num_classes)
    assert jnp.allclose(y, y_ref, rtol=1e-4, atol=1e-3), "mismatch vs JAX reference"

    print("KERNEL_OK")
</pallas_src>

<mosaic_0001>
module attributes {stable_mosaic.version = 11 : i64} {
  func.func @_linear_kernel(%arg0: i32, %arg1: memref<8x2048xf32, #tpu.memory_space<vmem>>, %arg2: memref<2048x128xf32, #tpu.memory_space<vmem>>, %arg3: memref<1x128xf32, #tpu.memory_space<vmem>>, %arg4: memref<8x128xf32, #tpu.memory_space<vmem>>) attributes {dimension_semantics = [#tpu.dimension_semantics<parallel>], iteration_bounds = array<i64: 1>, scalar_prefetch = 0 : i64, scratch_operands = 0 : i64, tpu.core_type = #tpu.core_type<tc>, window_params = [{pipeline_mode = #tpu.pipeline_mode<synchronous>, transform_indices = @transform_0, window_bounds = array<i64: 8, 2048>}, {transform_indices = @transform_1, window_bounds = array<i64: 2048, 128>}, {transform_indices = @transform_2, window_bounds = array<i64: 1, 128>}, {transform_indices = @transform_3, window_bounds = array<i64: 8, 128>}]} {
    %c0 = arith.constant 0 : index
    %c0_0 = arith.constant 0 : index
    %0 = vector.load %arg1[%c0, %c0_0] : memref<8x2048xf32, #tpu.memory_space<vmem>>, vector<8x2048xf32>
    %c0_1 = arith.constant 0 : index
    %c0_2 = arith.constant 0 : index
    %1 = vector.load %arg2[%c0_1, %c0_2] : memref<2048x128xf32, #tpu.memory_space<vmem>>, vector<2048x128xf32>
    %cst = arith.constant dense<0.000000e+00> : vector<8x128xf32>
    %2 = tpu.matmul %0, %1, %cst {dimension_numbers = #tpu.dot_dimension_numbers<[1], [0], [0], [1], [0, 0, 1, 1], [], []>} : vector<8x2048xf32>, vector<2048x128xf32>, vector<8x128xf32> -> vector<8x128xf32>
    %c0_3 = arith.constant 0 : index
    %c0_4 = arith.constant 0 : index
    %3 = vector.load %arg3[%c0_3, %c0_4] : memref<1x128xf32, #tpu.memory_space<vmem>>, vector<1x128xf32>
    %4 = vector.broadcast %3 : vector<1x128xf32> to vector<8x128xf32>
    %5 = arith.addf %2, %4 : vector<8x128xf32>
    %c0_5 = arith.constant 0 : index
    %c0_6 = arith.constant 0 : index
    %6 = vector.load %arg4[%c0_5, %c0_6] : memref<8x128xf32, #tpu.memory_space<vmem>>, vector<8x128xf32>
    tpu.vector_store %arg4[%c0_5, %c0_6], %5 {strides = array<i32>} : memref<8x128xf32, #tpu.memory_space<vmem>>, vector<8x128xf32>,
    return
  }
  func.func @transform_0(%arg0: i32) -> (i32, i32) {
    %c0_i32 = arith.constant 0 : i32
    %c0_i32_0 = arith.constant 0 : i32
    %c0_i32_1 = arith.constant 0 : i32
    return %c0_i32, %c0_i32_0 : i32, i32
  }
  func.func @transform_1(%arg0: i32) -> (i32, i32) {
    %c0_i32 = arith.constant 0 : i32
    %c0_i32_0 = arith.constant 0 : i32
    return %c0_i32, %arg0 : i32, i32
  }
  func.func @transform_2(%arg0: i32) -> (i32, i32) {
    %c0_i32 = arith.constant 0 : i32
    %c0_i32_0 = arith.constant 0 : i32
    return %c0_i32, %arg0 : i32, i32
  }
  func.func @transform_3(%arg0: i32) -> (i32, i32) {
    %c0_i32 = arith.constant 0 : i32
    %c0_i32_0 = arith.constant 0 : i32
    return %c0_i32, %arg0 : i32, i32
  }
}

module attributes {stable_mosaic.version = 11 : i64} {
  func.func @_fused_hidden_kernel(%arg0: i32, %arg1: i32, %arg2: memref<8x2048xf32, #tpu.memory_space<vmem>>, %arg3: memref<1x2048x512xf32, #tpu.memory_space<vmem>>, %arg4: memref<1x1x512xf32, #tpu.memory_space<vmem>>, %arg5: memref<8x2048xf32, #tpu.memory_space<vmem>>, %arg6: memref<8x2048xf32, #tpu.memory_space<vmem>>, %arg7: memref<4x8x512xf32, #tpu.memory_space<vmem>>) attributes {dimension_semantics = [#tpu.dimension_semantics<arbitrary>, #tpu.dimension_semantics<arbitrary>], iteration_bounds = array<i64: 5, 4>, scalar_prefetch = 0 : i64, scratch_operands = 2 : i64, tpu.core_type = #tpu.core_type<tc>, window_params = [{pipeline_mode = #tpu.pipeline_mode<synchronous>, transform_indices = @transform_0, window_bounds = array<i64: 8, 2048>}, {transform_indices = @transform_1, window_bounds = array<i64: 1, 2048, 512>}, {transform_indices = @transform_2, window_bounds = array<i64: 1, 1, 512>}, {pipeline_mode = #tpu.pipeline_mode<synchronous>, transform_indices = @transform_3, window_bounds = array<i64: 8, 2048>}]} {
    %c0_i32 = arith.constant 0 : i32
    %0 = arith.cmpi eq, %arg0, %c0_i32 : i32
    %c0_i32_0 = arith.constant 0 : i32
    %1 = arith.cmpi eq, %arg1, %c0_i32_0 : i32
    %2 = arith.andi %0, %1 : i1
    %3 = arith.extui %2 : i1 to i32
    %c0_i32_1 = arith.constant 0 : i32
    %4 = arith.cmpi ne, %3, %c0_i32_1 : i32
    scf.if %4 {
      %c0_15 = arith.constant 0 : index
      %c0_16 = arith.constant 0 : index
      %27 = vector.load %arg2[%c0_15, %c0_16] : memref<8x2048xf32, #tpu.memory_space<vmem>>, vector<8x2048xf32>
      %c0_17 = arith.constant 0 : index
      %c0_18 = arith.constant 0 : index
      %28 = vector.load %arg6[%c0_17, %c0_18] : memref<8x2048xf32, #tpu.memory_space<vmem>>, vector<8x2048xf32>
      tpu.vector_store %arg6[%c0_17, %c0_18], %27 {strides = array<i32>} : memref<8x2048xf32, #tpu.memory_space<vmem>>, vector<8x2048xf32>,
    } else {
    }
    %c0 = arith.constant 0 : index
    %c0_2 = arith.constant 0 : index
    %5 = vector.load %arg6[%c0, %c0_2] : memref<8x2048xf32, #tpu.memory_space<vmem>>, vector<8x2048xf32>
    %c0_3 = arith.constant 0 : index
    %c0_4 = arith.constant 0 : index
    %c0_5 = arith.constant 0 : index
    %6 = vector.load %arg3[%c0_3, %c0_4, %c0_5] : memref<1x2048x512xf32, #tpu.memory_space<vmem>>, vector<1x2048x512xf32>
    %7 = vector.shape_cast %6 : vector<1x2048x512xf32> to vector<2048x512xf32>
    %cst = arith.constant dense<0.000000e+00> : vector<8x512xf32>
    %8 = tpu.matmul %5, %7, %cst {dimension_numbers = #tpu.dot_dimension_numbers<[1], [0], [0], [1], [0, 0, 1, 1], [], []>} : vector<8x2048xf32>, vector<2048x512xf32>, vector<8x512xf32> -> vector<8x512xf32>
    %c0_6 = arith.constant 0 : index
    %c0_7 = arith.constant 0 : index
    %c0_8 = arith.constant 0 : index
    %9 = vector.load %arg4[%c0_6, %c0_7, %c0_8] : memref<1x1x512xf32, #tpu.memory_space<vmem>>, vector<1x1x512xf32>
    %10 = vector.shape_cast %9 : vector<1x1x512xf32> to vector<1x512xf32>
    %11 = vector.broadcast %10 : vector<1x512xf32> to vector<8x512xf32>
    %12 = arith.addf %8, %11 : vector<8x512xf32>
    %cst_9 = arith.constant 0.000000e+00 : f32
    %13 = vector.broadcast %cst_9 : f32 to vector<8x512xf32>
    %14 = arith.maximumf %12, %13 : vector<8x512xf32>
    %15 = arith.index_cast %arg1 : i32 to index
    %c0_10 = arith.constant 0 : index
    %c0_11 = arith.constant 0 : index
    %16 = vector.load %arg7[%15, %c0_10, %c0_11] : memref<4x8x512xf32, #tpu.memory_space<vmem>>, vector<1x8x512xf32>
    %17 = vector.shape_cast %16 : vector<1x8x512xf32> to vector<8x512xf32>
    %18 = vector.shape_cast %14 : vector<8x512xf32> to vector<1x8x512xf32>
    tpu.vector_store %arg7[%15, %c0_10, %c0_11], %18 {strides = array<i32>} : memref<4x8x512xf32, #tpu.memory_space<vmem>>, vector<1x8x512xf32>,
    %c3_i32 = arith.constant 3 : i32
    %19 = arith.cmpi eq, %arg1, %c3_i32 : i32
    %20 = arith.extui %19 : i1 to i32
    %c0_i32_12 = arith.constant 0 : i32
    %21 = arith.cmpi ne, %20, %c0_i32_12 : i32
    scf.if %21 {
      %c0_15 = arith.constant 0 : index
      %c0_16 = arith.constant 0 : index
      %c0_17 = arith.constant 0 : index
      %27 = vector.load %arg7[%c0_15, %c0_16, %c0_17] : memref<4x8x512xf32, #tpu.memory_space<vmem>>, vector<1x8x512xf32>
      %28 = vector.shape_cast %27 : vector<1x8x512xf32> to vector<8x512xf32>
      %c0_18 = arith.constant 0 : index
      %c0_19 = arith.constant 0 : index
      %29 = vector.load %arg6[%c0_18, %c0_19] : memref<8x2048xf32, #tpu.memory_space<vmem>>, vector<8x512xf32>
      tpu.vector_store %arg6[%c0_18, %c0_19], %28 {strides = array<i32>} : memref<8x2048xf32, #tpu.memory_space<vmem>>, vector<8x512xf32>,
      %c1 = arith.constant 1 : index
      %c0_20 = arith.constant 0 : index
      %c0_21 = arith.constant 0 : index
      %30 = vector.load %arg7[%c1, %c0_20, %c0_21] : memref<4x8x512xf32, #tpu.memory_space<vmem>>, vector<1x8x512xf32>
      %31 = vector.shape_cast %30 : vector<1x8x512xf32> to vector<8x512xf32>
      %c0_22 = arith.constant 0 : index
      %c512 = arith.constant 512 : index
      %32 = vector.load %arg6[%c0_22, %c512] : memref<8x2048xf32, #tpu.memory_space<vmem>>, vector<8x512xf32>
      tpu.vector_store %arg6[%c0_22, %c512], %31 {strides = array<i32>} : memref<8x2048xf32, #tpu.memory_space<vmem>>, vector<8x512xf32>,
      %c2 = arith.constant 2 : index
      %c0_23 = arith.constant 0 : index
      %c0_24 = arith.constant 0 : index
      %33 = vector.load %arg7[%c2, %c0_23, %c0_24] : memref<4x8x512xf32, #tpu.memory_space<vmem>>, vector<1x8x512xf32>
      %34 = vector.shape_cast %33 : vector<1x8x512xf32> to vector<8x512xf32>
      %c0_25 = arith.constant 0 : index
      %c1024 = arith.constant 1024 : index
      %35 = vector.load %arg6[%c0_25, %c1024] : memref<8x2048xf32, #tpu.memory_space<vmem>>, vector<8x512xf32>
      tpu.vector_store %arg6[%c0_25, %c1024], %34 {strides = array<i32>} : memref<8x2048xf32, #tpu.memory_space<vmem>>, vector<8x512xf32>,
      %c3 = arith.constant 3 : index
      %c0_26 = arith.constant 0 : index
      %c0_27 = arith.constant 0 : index
      %36 = vector.load %arg7[%c3, %c0_26, %c0_27] : memref<4x8x512xf32, #tpu.memory_space<vmem>>, vector<1x8x512xf32>
      %37 = vector.shape_cast %36 : vector<1x8x512xf32> to vector<8x512xf32>
      %c0_28 = arith.constant 0 : index
      %c1536 = arith.constant 1536 : index
      %38 = vector.load %arg6[%c0_28, %c1536] : memref<8x2048xf32, #tpu.memory_space<vmem>>, vector<8x512xf32>
      tpu.vector_store %arg6[%c0_28, %c1536], %37 {strides = array<i32>} : memref<8x2048xf32, #tpu.memory_space<vmem>>, vector<8x512xf32>,
    } else {
    }
    %c4_i32 = arith.constant 4 : i32
    %22 = arith.cmpi eq, %arg0, %c4_i32 : i32
    %c3_i32_13 = arith.constant 3 : i32
    %23 = arith.cmpi eq, %arg1, %c3_i32_13 : i32
    %24 = arith.andi %22, %23 : i1
    %25 = arith.extui %24 : i1 to i32
    %c0_i32_14 = arith.constant 0 : i32
    %26 = arith.cmpi ne, %25, %c0_i32_14 : i32
    scf.if %26 {
      %c0_15 = arith.constant 0 : index
      %c0_16 = arith.constant 0 : index
      %27 = vector.load %arg6[%c0_15, %c0_16] : memref<8x2048xf32, #tpu.memory_space<vmem>>, vector<8x2048xf32>
      %c0_17 = arith.constant 0 : index
      %c0_18 = arith.constant 0 : index
      %28 = vector.load %arg5[%c0_17, %c0_18] : memref<8x2048xf32, #tpu.memory_space<vmem>>, vector<8x2048xf32>
      tpu.vector_store %arg5[%c0_17, %c0_18], %27 {strides = array<i32>} : memref<8x2048xf32, #tpu.memory_space<vmem>>, vector<8x2048xf32>,
    } else {
    }
    return
  }
  func.func @transform_0(%arg0: i32, %arg1: i32) -> (i32, i32) {
    %c0_i32 = arith.constant 0 : i32
    %c0_i32_0 = arith.constant 0 : i32
    %c0_i32_1 = arith.constant 0 : i32
    return %c0_i32, %c0_i32_0 : i32, i32
  }
  func.func @transform_1(%arg0: i32, %arg1: i32) -> (i32, i32, i32) {
    %c0_i32 = arith.constant 0 : i32
    %c0_i32_0 = arith.constant 0 : i32
    return %arg0, %c0_i32, %arg1 : i32, i32, i32
  }
  func.func @transform_2(%arg0: i32, %arg1: i32) -> (i32, i32, i32) {
    %c0_i32 = arith.constant 0 : i32
    %c0_i32_0 = arith.constant 0 : i32
    return %arg0, %c0_i32, %arg1 : i32, i32, i32
  }
  func.func @transform_3(%arg0: i32, %arg1: i32) -> (i32, i32) {
    %c0_i32 = arith.constant 0 : i32
    %c0_i32_0 = arith.constant 0 : i32
    %c0_i32_1 = arith.constant 0 : i32
    return %c0_i32, %c0_i32_0 : i32, i32
  }
}

module attributes {stable_mosaic.version = 11 : i64} {
  func.func @_linear_kernel(%arg0: i32, %arg1: memref<8x896xf32, #tpu.memory_space<vmem>>, %arg2: memref<896x512xf32, #tpu.memory_space<vmem>>, %arg3: memref<1x512xf32, #tpu.memory_space<vmem>>, %arg4: memref<8x512xf32, #tpu.memory_space<vmem>>) attributes {dimension_semantics = [#tpu.dimension_semantics<parallel>], iteration_bounds = array<i64: 4>, scalar_prefetch = 0 : i64, scratch_operands = 0 : i64, tpu.core_type = #tpu.core_type<tc>, window_params = [{pipeline_mode = #tpu.pipeline_mode<synchronous>, transform_indices = @transform_0, window_bounds = array<i64: 8, 896>}, {transform_indices = @transform_1, window_bounds = array<i64: 896, 512>}, {transform_indices = @transform_2, window_bounds = array<i64: 1, 512>}, {transform_indices = @transform_3, window_bounds = array<i64: 8, 512>}]} {
    %c0 = arith.constant 0 : index
    %c0_0 = arith.constant 0 : index
    %0 = vector.load %arg1[%c0, %c0_0] : memref<8x896xf32, #tpu.memory_space<vmem>>, vector<8x896xf32>
    %c0_1 = arith.constant 0 : index
    %c0_2 = arith.constant 0 : index
    %1 = vector.load %arg2[%c0_1, %c0_2] : memref<896x512xf32, #tpu.memory_space<vmem>>, vector<896x512xf32>
    %cst = arith.constant dense<0.000000e+00> : vector<8x512xf32>
    %2 = tpu.matmul %0, %1, %cst {dimension_numbers = #tpu.dot_dimension_numbers<[1], [0], [0], [1], [0, 0, 1, 1], [], []>} : vector<8x896xf32>, vector<896x512xf32>, vector<8x512xf32> -> vector<8x512xf32>
    %c0_3 = arith.constant 0 : index
    %c0_4 = arith.constant 0 : index
    %3 = vector.load %arg3[%c0_3, %c0_4] : memref<1x512xf32, #tpu.memory_space<vmem>>, vector<1x512xf32>
    %4 = vector.broadcast %3 : vector<1x512xf32> to vector<8x512xf32>
    %5 = arith.addf %2, %4 : vector<8x512xf32>
    %cst_5 = arith.constant 0.000000e+00 : f32
    %6 = vector.broadcast %cst_5 : f32 to vector<8x512xf32>
    %7 = arith.maximumf %5, %6 : vector<8x512xf32>
    %c0_6 = arith.constant 0 : index
    %c0_7 = arith.constant 0 : index
    %8 = vector.load %arg4[%c0_6, %c0_7] : memref<8x512xf32, #tpu.memory_space<vmem>>, vector<8x512xf32>
    tpu.vector_store %arg4[%c0_6, %c0_7], %7 {strides = array<i32>} : memref<8x512xf32, #tpu.memory_space<vmem>>, vector<8x512xf32>,
    return
  }
  func.func @transform_0(%arg0: i32) -> (i32, i32) {
    %c0_i32 = arith.constant 0 : i32
    %c0_i32_0 = arith.constant 0 : i32
    %c0_i32_1 = arith.constant 0 : i32
    return %c0_i32, %c0_i32_0 : i32, i32
  }
  func.func @transform_1(%arg0: i32) -> (i32, i32) {
    %c0_i32 = arith.constant 0 : i32
    %c0_i32_0 = arith.constant 0 : i32
    return %c0_i32, %arg0 : i32, i32
  }
  func.func @transform_2(%arg0: i32) -> (i32, i32) {
    %c0_i32 = arith.constant 0 : i32
    %c0_i32_0 = arith.constant 0 : i32
    return %c0_i32, %arg0 : i32, i32
  }
  func.func @transform_3(%arg0: i32) -> (i32, i32) {
    %c0_i32 = arith.constant 0 : i32
    %c0_i32_0 = arith.constant 0 : i32
    return %c0_i32, %arg0 : i32, i32
  }
}

</mosaic_0001>

<llo_original>
// kernel: net_forward.5
$region0: #{net_forward.5}
  #allocation0 [shape = 'u32[]', space=smem, size = 0x4, offset = 0x4, fixed_abs, tag = 'smem constant byte address 0x4 - core index']
  #allocation1 [shape = 'u32[72,128]{1,0:T(1,128)}', space=vmem, size = 0x9000, scoped, tag = 'internal scratch']
  %s0 = inlined_call_operand.vmem [shape: f32[8,2048], index: 0, kind: input, shape index: {}]
  %s1 = inlined_call_operand.hbm [shape: f32[2048,128], index: 1, kind: input, shape index: {}]
  %s2 = inlined_call_operand.hbm [shape: f32[1,128], index: 2, kind: input, shape index: {}]
  %s3 = inlined_call_operand.hbm [shape: f32[8,128], index: 3, kind: output, shape index: {}]
  %s4 = sld [smem:[#allocation0]]
  $region30: #{net_forward.5} parent=0
    _
  %s6 = ssub.s32 1, %s4
  %s7 = scalar_select 0, %s6, %s4
  $region1: #{net_forward.5} parent=0
    #allocation2 [shape = 'u8[1048576]{0}', space=vmem, size = 0x100000, scoped, tag = 'input window, operand 1, single buffered']
    #allocation3 [shape = 's32[1]{0}', space=sflag, size = 0x4, scoped, tag = 'scoped memory for net_forward.5']
    #allocation4 [shape = 's32[1]{0}', space=sflag, size = 0x4, scoped, tag = 'scoped memory for net_forward.5']
    #allocation5 [shape = 'u8[512]{0}', space=vmem, size = 0x400, scoped, tag = 'input window, operand 2, single buffered']
    #allocation6 [shape = 's32[1]{0}', space=sflag, size = 0x4, scoped, tag = 'scoped memory for net_forward.5']
    #allocation7 [shape = 'u8[4096]{0}', space=vmem, size = 0x1000, scoped, tag = 'output window, operand 0, single buffered']
    %8 = vsyncpa [#allocation3], 0
    %9 = vsyncpa [#allocation6], 0
    %10 = vsyncpa [#allocation4], 0
    // Predicated region
    $region2: #{net_forward.5} parent=1 // pred_check
      _
    $region3: #{net_forward.5} parent=1 // pred_check_branch
      %12 = sbr.rel (0) target = $region5
    $region4: #{net_forward.5} parent=1 // pred_region
      _
    $region5: #{net_forward.5} parent=1 // pred_fallthru
      _
    // Predicated region
    $region6: #{net_forward.5} parent=1 // pred_check
      _
    $region7: #{net_forward.5} parent=1 // pred_check_branch
      %14 = sbr.rel (0) target = $region9
    $region8: #{net_forward.5} parent=1 // pred_region
      %16 = vsyncadd [#allocation3], 0
      %s17 = sshll.u32 %s1, 4
      %s18 = int_to_ptr.hbm [resolvable:$true] %s17
      %s19 = sshll.u32 [#allocation2], 4
      %s20 = int_to_ptr.vmem [resolvable:$true] %s19
      %25 = dma.hbm_to_vmem [thread:$0]  %s18, 32768, %s20, [#allocation3], 128, 128, 8
    $region9: #{net_forward.5} parent=1 // pred_fallthru
      _
    // Predicated region
    $region10: #{net_forward.5} parent=1 // pred_check
      _
    $region11: #{net_forward.5} parent=1 // pred_check_branch
      %27 = sbr.rel (0) target = $region13
    $region12: #{net_forward.5} parent=1 // pred_region
      %29 = vsyncadd [#allocation6], 0
      %s31 = sshll.u32 %s2, 4
      %s32 = int_to_ptr.hbm [resolvable:$true] %s31
      %s33 = sshll.u32 [#allocation5], 4
      %s34 = int_to_ptr.vmem [resolvable:$true] %s33
      %36 = dma.hbm_to_vmem [thread:$0]  %s32, 16, %s34, [#allocation6]
    $region13: #{net_forward.5} parent=1 // pred_fallthru
      _
    // Predicated region
    $region14: #{net_forward.5} parent=1 // pred_check
      _
    $region15: #{net_forward.5} parent=1 // pred_check_branch
      %38 = sbr.rel (0) target = $region17
    $region16: #{net_forward.5} parent=1 // pred_region
      %40 = dma.done [#allocation3], 32768
    $region17: #{net_forward.5} parent=1 // pred_fallthru
      _
    // Predicated region
    $region18: #{net_forward.5} parent=1 // pred_check
      _
    $region19: #{net_forward.5} parent=1 // pred_check_branch
      %42 = sbr.rel (0) target = $region21
    $region20: #{net_forward.5} parent=1 // pred_region
      %44 = dma.done [#allocation6], 16
    $region21: #{net_forward.5} parent=1 // pred_fallthru
      _
    %v45 = vld [vmem:[%s0] sm:$0xff]
    %v46 = vld [vmem:[%s0 + $0x8] sm:$0xff]
    %v47 = vld [vmem:[%s0 + $0x10] sm:$0xff]
    %v48 = vld [vmem:[%s0 + $0x18] sm:$0xff]
    %v49 = vld [vmem:[%s0 + $0x20] sm:$0xff]
    %v50 = vld [vmem:[%s0 + $0x28] sm:$0xff]
    %v51 = vld [vmem:[%s0 + $0x30] sm:$0xff]
    %v52 = vld [vmem:[%s0 + $0x38] sm:$0xff]
    %v53 = vld [vmem:[%s0 + $0x40] sm:$0xff]
    %v54 = vld [vmem:[%s0 + $0x48] sm:$0xff]
    %v55 = vld [vmem:[%s0 + $0x50] sm:$0xff]
    %v56 = vld [vmem:[%s0 + $0x58] sm:$0xff]
    %v57 = vld [vmem:[%s0 + $0x60] sm:$0xff]
    %v58 = vld [vmem:[%s0 + $0x68] sm:$0xff]
    %v59 = vld [vmem:[%s0 + $0x70] sm:$0xff]
    %v60 = vld [vmem:[%s0 + $0x78] sm:$0xff]
    %v61 = vld [vmem:[#allocation2] sm:$0xff]
    %v62 = vld [vmem:[#allocation2 + $0x8] sm:$0xff]
    %v63 = vld [vmem:[#allocation2 + $0x10] sm:$0xff]
    %v64 = vld [vmem:[#allocation2 + $0x18] sm:$0xff]
    %v65 = vld [vmem:[#allocation2 + $0x20] sm:$0xff]
    %v66 = vld [vmem:[#allocation2 + $0x28] sm:$0xff]
    %v67 = vld [vmem:[#allocation2 + $0x30] sm:$0xff]
    %v68 = vld [vmem:[#allocation2 + $0x38] sm:$0xff]
    %v69 = vld [vmem:[#allocation2 + $0x40] sm:$0xff]
    %v70 = vld [vmem:[#allocation2 + $0x48] sm:$0xff]
    %v71 = vld [vmem:[#allocation2 + $0x50] sm:$0xff]
    %v72 = vld [vmem:[#allocation2 + $0x58] sm:$0xff]
    %v73 = vld [vmem:[#allocation2 + $0x60] sm:$0xff]
    %v74 = vld [vmem:[#allocation2 + $0x68] sm:$0xff]
    %v75 = vld [vmem:[#allocation2 + $0x70] sm:$0xff]
    %v76 = vld [vmem:[#allocation2 + $0x78] sm:$0xff]
    %v77 = vld [vmem:[#allocation2 + $0x80] sm:$0xff]
    %v78 = vld [vmem:[#allocation2 + $0x88] sm:$0xff]
    %v79 = vld [vmem:[#allocation2 + $0x90] sm:$0xff]
    %v80 = vld [vmem:[#allocation2 + $0x98] sm:$0xff]
    %v81 = vld [vmem:[#allocation2 + $0xa0] sm:$0xff]
    %v82 = vld [vmem:[#allocation2 + $0xa8] sm:$0xff]
    %v83 = vld [vmem:[#allocation2 + $0xb0] sm:$0xff]
    %v84 = vld [vmem:[#allocation2 + $0xb8] sm:$0xff]
    %v85 = vld [vmem:[#allocation2 + $0xc0] sm:$0xff]
    %v86 = vld [vmem:[#allocation2 + $0xc8] sm:$0xff]
    %v87 = vld [vmem:[#allocation2 + $0xd0] sm:$0xff]
    %v88 = vld [vmem:[#allocation2 + $0xd8] sm:$0xff]
    %v89 = vld [vmem:[#allocation2 + $0xe0] sm:$0xff]
    %v90 = vld [vmem:[#allocation2 + $0xe8] sm:$0xff]
    %v91 = vld [vmem:[#allocation2 + $0xf0] sm:$0xff]
    %v92 = vld [vmem:[#allocation2 + $0xf8] sm:$0xff]
    %v93 = vld [vmem:[#allocation2 + $0x100] sm:$0xff]
    %v94 = vld [vmem:[#allocation2 + $0x108] sm:$0xff]
    %v95 = vld [vmem:[#allocation2 + $0x110] sm:$0xff]
    %v96 = vld [vmem:[#allocation2 + $0x118] sm:$0xff]
    %v97 = vld [vmem:[#allocation2 + $0x120] sm:$0xff]
    %v98 = vld [vmem:[#allocation2 + $0x128] sm:$0xff]
    %v99 = vld [vmem:[#allocation2 + $0x130] sm:$0xff]
    %v100 = vld [vmem:[#allocation2 + $0x138] sm:$0xff]
    %v101 = vld [vmem:[#allocation2 + $0x140] sm:$0xff]
    %v102 = vld [vmem:[#allocation2 + $0x148] sm:$0xff]
    %v103 = vld [vmem:[#allocation2 + $0x150] sm:$0xff]
    %v104 = vld [vmem:[#allocation2 + $0x158] sm:$0xff]
    %v105 = vld [vmem:[#allocation2 + $0x160] sm:$0xff]
    %v106 = vld [vmem:[#allocation2 + $0x168] sm:$0xff]
    %v107 = vld [vmem:[#allocation2 + $0x170] sm:$0xff]
    %v108 = vld [vmem:[#allocation2 + $0x178] sm:$0xff]
    %v109 = vld [vmem:[#allocation2 + $0x180] sm:$0xff]
    %v110 = vld [vmem:[#allocation2 + $0x188] sm:$0xff]
    %v111 = vld [vmem:[#allocation2 + $0x190] sm:$0xff]
    %v112 = vld [vmem:[#allocation2 + $0x198] sm:$0xff]
    %v113 = vld [vmem:[#allocation2 + $0x1a0] sm:$0xff]
    %v114 = vld [vmem:[#allocation2 + $0x1a8] sm:$0xff]
    %v115 = vld [vmem:[#allocation2 + $0x1b0] sm:$0xff]
    %v116 = vld [vmem:[#allocation2 + $0x1b8] sm:$0xff]
    %v117 = vld [vmem:[#allocation2 + $0x1c0] sm:$0xff]
    %v118 = vld [vmem:[#allocation2 + $0x1c8] sm:$0xff]
    %v119 = vld [vmem:[#allocation2 + $0x1d0] sm:$0xff]
    %v120 = vld [vmem:[#allocation2 + $0x1d8] sm:$0xff]
    %v121 = vld [vmem:[#allocation2 + $0x1e0] sm:$0xff]
    %v122 = vld [vmem:[#allocation2 + $0x1e8] sm:$0xff]
    %v123 = vld [vmem:[#allocation2 + $0x1f0] sm:$0xff]
    %v124 = vld [vmem:[#allocation2 + $0x1f8] sm:$0xff]
    %v125 = vld [vmem:[#allocation2 + $0x200] sm:$0xff]
    %v126 = vld [vmem:[#allocation2 + $0x208] sm:$0xff]
    %v127 = vld [vmem:[#allocation2 + $0x210] sm:$0xff]
    %v128 = vld [vmem:[#allocation2 + $0x218] sm:$0xff]
    %v129 = vld [vmem:[#allocation2 + $0x220] sm:$0xff]
    %v130 = vld [vmem:[#allocation2 + $0x228] sm:$0xff]
    %v131 = vld [vmem:[#allocation2 + $0x230] sm:$0xff]
    %v132 = vld [vmem:[#allocation2 + $0x238] sm:$0xff]
    %v133 = vld [vmem:[#allocation2 + $0x240] sm:$0xff]
    %v134 = vld [vmem:[#allocation2 + $0x248] sm:$0xff]
    %v135 = vld [vmem:[#allocation2 + $0x250] sm:$0xff]
    %v136 = vld [vmem:[#allocation2 + $0x258] sm:$0xff]
    %v137 = vld [vmem:[#allocation2 + $0x260] sm:$0xff]
    %v138 = vld [vmem:[#allocation2 + $0x268] sm:$0xff]
    %v139 = vld [vmem:[#allocation2 + $0x270] sm:$0xff]
    %v140 = vld [vmem:[#allocation2 + $0x278] sm:$0xff]
    %v141 = vld [vmem:[#allocation2 + $0x280] sm:$0xff]
    %v142 = vld [vmem:[#allocation2 + $0x288] sm:$0xff]
    %v143 = vld [vmem:[#allocation2 + $0x290] sm:$0xff]
    %v144 = vld [vmem:[#allocation2 + $0x298] sm:$0xff]
    %v145 = vld [vmem:[#allocation2 + $0x2a0] sm:$0xff]
    %v146 = vld [vmem:[#allocation2 + $0x2a8] sm:$0xff]
    %v147 = vld [vmem:[#allocation2 + $0x2b0] sm:$0xff]
    %v148 = vld [vmem:[#allocation2 + $0x2b8] sm:$0xff]
    %v149 = vld [vmem:[#allocation2 + $0x2c0] sm:$0xff]
    %v150 = vld [vmem:[#allocation2 + $0x2c8] sm:$0xff]
    %v151 = vld [vmem:[#allocation2 + $0x2d0] sm:$0xff]
    %v152 = vld [vmem:[#allocation2 + $0x2d8] sm:$0xff]
    %v153 = vld [vmem:[#allocation2 + $0x2e0] sm:$0xff]
    %v154 = vld [vmem:[#allocation2 + $0x2e8] sm:$0xff]
    %v155 = vld [vmem:[#allocation2 + $0x2f0] sm:$0xff]
    %v156 = vld [vmem:[#allocation2 + $0x2f8] sm:$0xff]
    %v157 = vld [vmem:[#allocation2 + $0x300] sm:$0xff]
    %v158 = vld [vmem:[#allocation2 + $0x308] sm:$0xff]
    %v159 = vld [vmem:[#allocation2 + $0x310] sm:$0xff]
    %v160 = vld [vmem:[#allocation2 + $0x318] sm:$0xff]
    %v161 = vld [vmem:[#allocation2 + $0x320] sm:$0xff]
    %v162 = vld [vmem:[#allocation2 + $0x328] sm:$0xff]
    %v163 = vld [vmem:[#allocation2 + $0x330] sm:$0xff]
    %v164 = vld [vmem:[#allocation2 + $0x338] sm:$0xff]
    %v165 = vld [vmem:[#allocation2 + $0x340] sm:$0xff]
    %v166 = vld [vmem:[#allocation2 + $0x348] sm:$0xff]
    %v167 = vld [vmem:[#allocation2 + $0x350] sm:$0xff]
    %v168 = vld [vmem:[#allocation2 + $0x358] sm:$0xff]
    %v169 = vld [vmem:[#allocation2 + $0x360] sm:$0xff]
    %v170 = vld [vmem:[#allocation2 + $0x368] sm:$0xff]
    %v171 = vld [vmem:[#allocation2 + $0x370] sm:$0xff]
    %v172 = vld [vmem:[#allocation2 + $0x378] sm:$0xff]
    %v173 = vld [vmem:[#allocation2 + $0x380] sm:$0xff]
    %v174 = vld [vmem:[#allocation2 + $0x388] sm:$0xff]
    %v175 = vld [vmem:[#allocation2 + $0x390] sm:$0xff]
    %v176 = vld [vmem:[#allocation2 + $0x398] sm:$0xff]
    %v177 = vld [vmem:[#allocation2 + $0x3a0] sm:$0xff]
    %v178 = vld [vmem:[#allocation2 + $0x3a8] sm:$0xff]
    %v179 = vld [vmem:[#allocation2 + $0x3b0] sm:$0xff]
    %v180 = vld [vmem:[#allocation2 + $0x3b8] sm:$0xff]
    %v181 = vld [vmem:[#allocation2 + $0x3c0] sm:$0xff]
    %v182 = vld [vmem:[#allocation2 + $0x3c8] sm:$0xff]
    %v183 = vld [vmem:[#allocation2 + $0x3d0] sm:$0xff]
    %v184 = vld [vmem:[#allocation2 + $0x3d8] sm:$0xff]
    %v185 = vld [vmem:[#allocation2 + $0x3e0] sm:$0xff]
    %v186 = vld [vmem:[#allocation2 + $0x3e8] sm:$0xff]
    %v187 = vld [vmem:[#allocation2 + $0x3f0] sm:$0xff]
    %v188 = vld [vmem:[#allocation2 + $0x3f8] sm:$0xff]
    %v189 = vld [vmem:[#allocation2 + $0x400] sm:$0xff]
    %v190 = vld [vmem:[#allocation2 + $0x408] sm:$0xff]
    %v191 = vld [vmem:[#allocation2 + $0x410] sm:$0xff]
    %v192 = vld [vmem:[#allocation2 + $0x418] sm:$0xff]
    %v193 = vld [vmem:[#allocation2 + $0x420] sm:$0xff]
    %v194 = vld [vmem:[#allocation2 + $0x428] sm:$0xff]
    %v195 = vld [vmem:[#allocation2 + $0x430] sm:$0xff]
    %v196 = vld [vmem:[#allocation2 + $0x438] sm:$0xff]
    %v197 = vld [vmem:[#allocation2 + $0x440] sm:$0xff]
    %v198 = vld [vmem:[#allocation2 + $0x448] sm:$0xff]
    %v199 = vld [vmem:[#allocation2 + $0x450] sm:$0xff]
    %v200 = vld [vmem:[#allocation2 + $0x458] sm:$0xff]
    %v201 = vld [vmem:[#allocation2 + $0x460] sm:$0xff]
    %v202 = vld [vmem:[#allocation2 + $0x468] sm:$0xff]
    %v203 = vld [vmem:[#allocation2 + $0x470] sm:$0xff]
    %v204 = vld [vmem:[#allocation2 + $0x478] sm:$0xff]
    %v205 = vld [vmem:[#allocation2 + $0x480] sm:$0xff]
    %v206 = vld [vmem:[#allocation2 + $0x488] sm:$0xff]
    %v207 = vld [vmem:[#allocation2 + $0x490] sm:$0xff]
    %v208 = vld [vmem:[#allocation2 + $0x498] sm:$0xff]
    %v209 = vld [vmem:[#allocation2 + $0x4a0] sm:$0xff]
    %v210 = vld [vmem:[#allocation2 + $0x4a8] sm:$0xff]
    %v211 = vld [vmem:[#allocation2 + $0x4b0] sm:$0xff]
    %v212 = vld [vmem:[#allocation2 + $0x4b8] sm:$0xff]
    %v213 = vld [vmem:[#allocation2 + $0x4c0] sm:$0xff]
    %v214 = vld [vmem:[#allocation2 + $0x4c8] sm:$0xff]
    %v215 = vld [vmem:[#allocation2 + $0x4d0] sm:$0xff]
    %v216 = vld [vmem:[#allocation2 + $0x4d8] sm:$0xff]
    %v217 = vld [vmem:[#allocation2 + $0x4e0] sm:$0xff]
    %v218 = vld [vmem:[#allocation2 + $0x4e8] sm:$0xff]
    %v219 = vld [vmem:[#allocation2 + $0x4f0] sm:$0xff]
    %v220 = vld [vmem:[#allocation2 + $0x4f8] sm:$0xff]
    %v221 = vld [vmem:[#allocation2 + $0x500] sm:$0xff]
    %v222 = vld [vmem:[#allocation2 + $0x508] sm:$0xff]
    %v223 = vld [vmem:[#allocation2 + $0x510] sm:$0xff]
    %v224 = vld [vmem:[#allocation2 + $0x518] sm:$0xff]
    %v225 = vld [vmem:[#allocation2 + $0x520] sm:$0xff]
    %v226 = vld [vmem:[#allocation2 + $0x528] sm:$0xff]
    %v227 = vld [vmem:[#allocation2 + $0x530] sm:$0xff]
    %v228 = vld [vmem:[#allocation2 + $0x538] sm:$0xff]
    %v229 = vld [vmem:[#allocation2 + $0x540] sm:$0xff]
    %v230 = vld [vmem:[#allocation2 + $0x548] sm:$0xff]
    %v231 = vld [vmem:[#allocation2 + $0x550] sm:$0xff]
    %v232 = vld [vmem:[#allocation2 + $0x558] sm:$0xff]
    %v233 = vld [vmem:[#allocation2 + $0x560] sm:$0xff]
    %v234 = vld [vmem:[#allocation2 + $0x568] sm:$0xff]
    %v235 = vld [vmem:[#allocation2 + $0x570] sm:$0xff]
    %v236 = vld [vmem:[#allocation2 + $0x578] sm:$0xff]
    %v237 = vld [vmem:[#allocation2 + $0x580] sm:$0xff]
    %v238 = vld [vmem:[#allocation2 + $0x588] sm:$0xff]
    %v239 = vld [vmem:[#allocation2 + $0x590] sm:$0xff]
    %v240 = vld [vmem:[#allocation2 + $0x598] sm:$0xff]
    %v241 = vld [vmem:[#allocation2 + $0x5a0] sm:$0xff]
    %v242 = vld [vmem:[#allocation2 + $0x5a8] sm:$0xff]
    %v243 = vld [vmem:[#allocation2 + $0x5b0] sm:$0xff]
    %v244 = vld [vmem:[#allocation2 + $0x5b8] sm:$0xff]
    %v245 = vld [vmem:[#allocation2 + $0x5c0] sm:$0xff]
    %v246 = vld [vmem:[#allocation2 + $0x5c8] sm:$0xff]
    %v247 = vld [vmem:[#allocation2 + $0x5d0] sm:$0xff]
    %v248 = vld [vmem:[#allocation2 + $0x5d8] sm:$0xff]
    %v249 = vld [vmem:[#allocation2 + $0x5e0] sm:$0xff]
    %v250 = vld [vmem:[#allocation2 + $0x5e8] sm:$0xff]
    %v251 = vld [vmem:[#allocation2 + $0x5f0] sm:$0xff]
    %v252 = vld [vmem:[#allocation2 + $0x5f8] sm:$0xff]
    %v253 = vld [vmem:[#allocation2 + $0x600] sm:$0xff]
    %v254 = vld [vmem:[#allocation2 + $0x608] sm:$0xff]
    %v255 = vld [vmem:[#allocation2 + $0x610] sm:$0xff]
    %v256 = vld [vmem:[#allocation2 + $0x618] sm:$0xff]
    %v257 = vld [vmem:[#allocation2 + $0x620] sm:$0xff]
    %v258 = vld [vmem:[#allocation2 + $0x628] sm:$0xff]
    %v259 = vld [vmem:[#allocation2 + $0x630] sm:$0xff]
    %v260 = vld [vmem:[#allocation2 + $0x638] sm:$0xff]
    %v261 = vld [vmem:[#allocation2 + $0x640] sm:$0xff]
    %v262 = vld [vmem:[#allocation2 + $0x648] sm:$0xff]
    %v263 = vld [vmem:[#allocation2 + $0x650] sm:$0xff]
    %v264 = vld [vmem:[#allocation2 + $0x658] sm:$0xff]
    %v265 = vld [vmem:[#allocation2 + $0x660] sm:$0xff]
    %v266 = vld [vmem:[#allocation2 + $0x668] sm:$0xff]
    %v267 = vld [vmem:[#allocation2 + $0x670] sm:$0xff]
    %v268 = vld [vmem:[#allocation2 + $0x678] sm:$0xff]
    %v269 = vld [vmem:[#allocation2 + $0x680] sm:$0xff]
    %v270 = vld [vmem:[#allocation2 + $0x688] sm:$0xff]
    %v271 = vld [vmem:[#allocation2 + $0x690] sm:$0xff]
    %v272 = vld [vmem:[#allocation2 + $0x698] sm:$0xff]
    %v273 = vld [vmem:[#allocation2 + $0x6a0] sm:$0xff]
    %v274 = vld [vmem:[#allocation2 + $0x6a8] sm:$0xff]
    %v275 = vld [vmem:[#allocation2 + $0x6b0] sm:$0xff]
    %v276 = vld [vmem:[#allocation2 + $0x6b8] sm:$0xff]
    %v277 = vld [vmem:[#allocation2 + $0x6c0] sm:$0xff]
    %v278 = vld [vmem:[#allocation2 + $0x6c8] sm:$0xff]
    %v279 = vld [vmem:[#allocation2 + $0x6d0] sm:$0xff]
    %v280 = vld [vmem:[#allocation2 + $0x6d8] sm:$0xff]
    %v281 = vld [vmem:[#allocation2 + $0x6e0] sm:$0xff]
    %v282 = vld [vmem:[#allocation2 + $0x6e8] sm:$0xff]
    %v283 = vld [vmem:[#allocation2 + $0x6f0] sm:$0xff]
    %v284 = vld [vmem:[#allocation2 + $0x6f8] sm:$0xff]
    %v285 = vld [vmem:[#allocation2 + $0x700] sm:$0xff]
    %v286 = vld [vmem:[#allocation2 + $0x708] sm:$0xff]
    %v287 = vld [vmem:[#allocation2 + $0x710] sm:$0xff]
    %v288 = vld [vmem:[#allocation2 + $0x718] sm:$0xff]
    %v289 = vld [vmem:[#allocation2 + $0x720] sm:$0xff]
    %v290 = vld [vmem:[#allocation2 + $0x728] sm:$0xff]
    %v291 = vld [vmem:[#allocation2 + $0x730] sm:$0xff]
    %v292 = vld [vmem:[#allocation2 + $0x738] sm:$0xff]
    %v293 = vld [vmem:[#allocation2 + $0x740] sm:$0xff]
    %v294 = vld [vmem:[#allocation2 + $0x748] sm:$0xff]
    %v295 = vld [vmem:[#allocation2 + $0x750] sm:$0xff]
    %v296 = vld [vmem:[#allocation2 + $0x758] sm:$0xff]
    %v297 = vld [vmem:[#allocation2 + $0x760] sm:$0xff]
    %v298 = vld [vmem:[#allocation2 + $0x768] sm:$0xff]
    %v299 = vld [vmem:[#allocation2 + $0x770] sm:$0xff]
    %v300 = vld [vmem:[#allocation2 + $0x778] sm:$0xff]
    %v301 = vld [vmem:[#allocation2 + $0x780] sm:$0xff]
    %v302 = vld [vmem:[#allocation2 + $0x788] sm:$0xff]
    %v303 = vld [vmem:[#allocation2 + $0x790] sm:$0xff]
    %v304 = vld [vmem:[#allocation2 + $0x798] sm:$0xff]
    %v305 = vld [vmem:[#allocation2 + $0x7a0] sm:$0xff]
    %v306 = vld [vmem:[#allocation2 + $0x7a8] sm:$0xff]
    %v307 = vld [vmem:[#allocation2 + $0x7b0] sm:$0xff]
    %v308 = vld [vmem:[#allocation2 + $0x7b8] sm:$0xff]
    %v309 = vld [vmem:[#allocation2 + $0x7c0] sm:$0xff]
    %v310 = vld [vmem:[#allocation2 + $0x7c8] sm:$0xff]
    %v311 = vld [vmem:[#allocation2 + $0x7d0] sm:$0xff]
    %v312 = vld [vmem:[#allocation2 + $0x7d8] sm:$0xff]
    %v313 = vld [vmem:[#allocation2 + $0x7e0] sm:$0xff]
    %v314 = vld [vmem:[#allocation2 + $0x7e8] sm:$0xff]
    %v315 = vld [vmem:[#allocation2 + $0x7f0] sm:$0xff]
    %v316 = vld [vmem:[#allocation2 + $0x7f8] sm:$0xff]
    %v317 = vld [vmem:[#allocation5] sm:$0x1]
    %v319 = vperm.slane %v317, 0
    %321 = vmatpush.msra.mxu0 %v76
    %322 = vmatpush.msra.mxu0 %v75
    %323 = vmatpush.msra.mxu0 %v74
    %324 = vmatpush.msra.mxu0 %v73
    %325 = vmatpush.msra.mxu0 %v72
    %326 = vmatpush.msra.mxu0 %v71
    %327 = vmatpush.msra.mxu0 %v70
    %328 = vmatpush.msra.mxu0 %v69
    %329 = vmatpush.msra.mxu0 %v68
    %330 = vmatpush.msra.mxu0 %v67
    %331 = vmatpush.msra.mxu0 %v66
    %332 = vmatpush.msra.mxu0 %v65
    %333 = vmatpush.msra.mxu0 %v64
    %334 = vmatpush.msra.mxu0 %v63
    %335 = vmatpush.msra.mxu0 %v62
    %336 = vmatpush.msra.mxu0 %v61
    %337 = vmatmul.f32.gmra.mxu0 %v45
    %v338 = vpop.f32.mrf.mxu0
    %v339 = vadd.f32 %v319, %v338
    %340 = vdwg.mxu0
    %341 = vmatpush.msra.mxu0 %v92
    %342 = vmatpush.msra.mxu0 %v91
    %343 = vmatpush.msra.mxu0 %v90
    %344 = vmatpush.msra.mxu0 %v89
    %345 = vmatpush.msra.mxu0 %v88
    %346 = vmatpush.msra.mxu0 %v87
    %347 = vmatpush.msra.mxu0 %v86
    %348 = vmatpush.msra.mxu0 %v85
    %349 = vmatpush.msra.mxu0 %v84
    %350 = vmatpush.msra.mxu0 %v83
    %351 = vmatpush.msra.mxu0 %v82
    %352 = vmatpush.msra.mxu0 %v81
    %353 = vmatpush.msra.mxu0 %v80
    %354 = vmatpush.msra.mxu0 %v79
    %355 = vmatpush.msra.mxu0 %v78
    %356 = vmatpush.msra.mxu0 %v77
    %357 = vmatmul.f32.gmra.mxu0 %v46
    %v358 = vpop.f32.mrf.mxu0
    %v359 = vadd.f32 %v339, %v358
    %360 = vdwg.mxu0
    %361 = vmatpush.msra.mxu0 %v108
    %362 = vmatpush.msra.mxu0 %v107
    %363 = vmatpush.msra.mxu0 %v106
    %364 = vmatpush.msra.mxu0 %v105
    %365 = vmatpush.msra.mxu0 %v104
    %366 = vmatpush.msra.mxu0 %v103
    %367 = vmatpush.msra.mxu0 %v102
    %368 = vmatpush.msra.mxu0 %v101
    %369 = vmatpush.msra.mxu0 %v100
    %370 = vmatpush.msra.mxu0 %v99
    %371 = vmatpush.msra.mxu0 %v98
    %372 = vmatpush.msra.mxu0 %v97
    %373 = vmatpush.msra.mxu0 %v96
    %374 = vmatpush.msra.mxu0 %v95
    %375 = vmatpush.msra.mxu0 %v94
    %376 = vmatpush.msra.mxu0 %v93
    %377 = vmatmul.f32.gmra.mxu0 %v47
    %v378 = vpop.f32.mrf.mxu0
    %v379 = vadd.f32 %v359, %v378
    %380 = vdwg.mxu0
    %381 = vmatpush.msra.mxu0 %v124
    %382 = vmatpush.msra.mxu0 %v123
    %383 = vmatpush.msra.mxu0 %v122
    %384 = vmatpush.msra.mxu0 %v121
    %385 = vmatpush.msra.mxu0 %v120
    %386 = vmatpush.msra.mxu0 %v119
    %387 = vmatpush.msra.mxu0 %v118
    %388 = vmatpush.msra.mxu0 %v117
    %389 = vmatpush.msra.mxu0 %v116
    %390 = vmatpush.msra.mxu0 %v115
    %391 = vmatpush.msra.mxu0 %v114
    %392 = vmatpush.msra.mxu0 %v113
    %393 = vmatpush.msra.mxu0 %v112
    %394 = vmatpush.msra.mxu0 %v111
    %395 = vmatpush.msra.mxu0 %v110
    %396 = vmatpush.msra.mxu0 %v109
    %397 = vmatmul.f32.gmra.mxu0 %v48
    %v398 = vpop.f32.mrf.mxu0
    %v399 = vadd.f32 %v379, %v398
    %400 = vdwg.mxu0
    %401 = vmatpush.msra.mxu0 %v140
    %402 = vmatpush.msra.mxu0 %v139
    %403 = vmatpush.msra.mxu0 %v138
    %404 = vmatpush.msra.mxu0 %v137
    %405 = vmatpush.msra.mxu0 %v136
    %406 = vmatpush.msra.mxu0 %v135
    %407 = vmatpush.msra.mxu0 %v134
    %408 = vmatpush.msra.mxu0 %v133
    %409 = vmatpush.msra.mxu0 %v132
    %410 = vmatpush.msra.mxu0 %v131
    %411 = vmatpush.msra.mxu0 %v130
    %412 = vmatpush.msra.mxu0 %v129
    %413 = vmatpush.msra.mxu0 %v128
    %414 = vmatpush.msra.mxu0 %v127
    %415 = vmatpush.msra.mxu0 %v126
    %416 = vmatpush.msra.mxu0 %v125
    %417 = vmatmul.f32.gmra.mxu0 %v49
    %v418 = vpop.f32.mrf.mxu0
    %v419 = vadd.f32 %v399, %v418
    %420 = vdwg.mxu0
    %421 = vmatpush.msra.mxu0 %v156
    %422 = vmatpush.msra.mxu0 %v155
    %423 = vmatpush.msra.mxu0 %v154
    %424 = vmatpush.msra.mxu0 %v153
    %425 = vmatpush.msra.mxu0 %v152
    %426 = vmatpush.msra.mxu0 %v151
    %427 = vmatpush.msra.mxu0 %v150
    %428 = vmatpush.msra.mxu0 %v149
    %429 = vmatpush.msra.mxu0 %v148
    %430 = vmatpush.msra.mxu0 %v147
    %431 = vmatpush.msra.mxu0 %v146
    %432 = vmatpush.msra.mxu0 %v145
    %433 = vmatpush.msra.mxu0 %v144
    %434 = vmatpush.msra.mxu0 %v143
    %435 = vmatpush.msra.mxu0 %v142
    %436 = vmatpush.msra.mxu0 %v141
    %437 = vmatmul.f32.gmra.mxu0 %v50
    %v438 = vpop.f32.mrf.mxu0
    %v439 = vadd.f32 %v419, %v438
    %440 = vdwg.mxu0
    %441 = vmatpush.msra.mxu0 %v172
    %442 = vmatpush.msra.mxu0 %v171
    %443 = vmatpush.msra.mxu0 %v170
    %444 = vmatpush.msra.mxu0 %v169
    %445 = vmatpush.msra.mxu0 %v168
    %446 = vmatpush.msra.mxu0 %v167
    %447 = vmatpush.msra.mxu0 %v166
    %448 = vmatpush.msra.mxu0 %v165
    %449 = vmatpush.msra.mxu0 %v164
    %450 = vmatpush.msra.mxu0 %v163
    %451 = vmatpush.msra.mxu0 %v162
    %452 = vmatpush.msra.mxu0 %v161
    %453 = vmatpush.msra.mxu0 %v160
    %454 = vmatpush.msra.mxu0 %v159
    %455 = vmatpush.msra.mxu0 %v158
    %456 = vmatpush.msra.mxu0 %v157
    %457 = vmatmul.f32.gmra.mxu0 %v51
    %v458 = vpop.f32.mrf.mxu0
    %v459 = vadd.f32 %v439, %v458
    %460 = vdwg.mxu0
    %461 = vmatpush.msra.mxu0 %v188
    %462 = vmatpush.msra.mxu0 %v187
    %463 = vmatpush.msra.mxu0 %v186
    %464 = vmatpush.msra.mxu0 %v185
    %465 = vmatpush.msra.mxu0 %v184
    %466 = vmatpush.msra.mxu0 %v183
    %467 = vmatpush.msra.mxu0 %v182
    %468 = vmatpush.msra.mxu0 %v181
    %469 = vmatpush.msra.mxu0 %v180
    %470 = vmatpush.msra.mxu0 %v179
    %471 = vmatpush.msra.mxu0 %v178
    %472 = vmatpush.msra.mxu0 %v177
    %473 = vmatpush.msra.mxu0 %v176
    %474 = vmatpush.msra.mxu0 %v175
    %475 = vmatpush.msra.mxu0 %v174
    %476 = vmatpush.msra.mxu0 %v173
    %477 = vmatmul.f32.gmra.mxu0 %v52
    %v478 = vpop.f32.mrf.mxu0
    %v479 = vadd.f32 %v459, %v478
    %480 = vdwg.mxu0
    %481 = vmatpush.msra.mxu0 %v204
    %482 = vmatpush.msra.mxu0 %v203
    %483 = vmatpush.msra.mxu0 %v202
    %484 = vmatpush.msra.mxu0 %v201
    %485 = vmatpush.msra.mxu0 %v200
    %486 = vmatpush.msra.mxu0 %v199
    %487 = vmatpush.msra.mxu0 %v198
    %488 = vmatpush.msra.mxu0 %v197
    %489 = vmatpush.msra.mxu0 %v196
    %490 = vmatpush.msra.mxu0 %v195
    %491 = vmatpush.msra.mxu0 %v194
    %492 = vmatpush.msra.mxu0 %v193
    %493 = vmatpush.msra.mxu0 %v192
    %494 = vmatpush.msra.mxu0 %v191
    %495 = vmatpush.msra.mxu0 %v190
    %496 = vmatpush.msra.mxu0 %v189
    %497 = vmatmul.f32.gmra.mxu0 %v53
    %v498 = vpop.f32.mrf.mxu0
    %v499 = vadd.f32 %v479, %v498
    %500 = vdwg.mxu0
    %501 = vmatpush.msra.mxu0 %v220
    %502 = vmatpush.msra.mxu0 %v219
    %503 = vmatpush.msra.mxu0 %v218
    %504 = vmatpush.msra.mxu0 %v217
    %505 = vmatpush.msra.mxu0 %v216
    %506 = vmatpush.msra.mxu0 %v215
    %507 = vmatpush.msra.mxu0 %v214
    %508 = vmatpush.msra.mxu0 %v213
    %509 = vmatpush.msra.mxu0 %v212
    %510 = vmatpush.msra.mxu0 %v211
    %511 = vmatpush.msra.mxu0 %v210
    %512 = vmatpush.msra.mxu0 %v209
    %513 = vmatpush.msra.mxu0 %v208
    %514 = vmatpush.msra.mxu0 %v207
    %515 = vmatpush.msra.mxu0 %v206
    %516 = vmatpush.msra.mxu0 %v205
    %517 = vmatmul.f32.gmra.mxu0 %v54
    %v518 = vpop.f32.mrf.mxu0
    %v519 = vadd.f32 %v499, %v518
    %520 = vdwg.mxu0
    %521 = vmatpush.msra.mxu0 %v236
    %522 = vmatpush.msra.mxu0 %v235
    %523 = vmatpush.msra.mxu0 %v234
    %524 = vmatpush.msra.mxu0 %v233
    %525 = vmatpush.msra.mxu0 %v232
    %526 = vmatpush.msra.mxu0 %v231
    %527 = vmatpush.msra.mxu0 %v230
    %528 = vmatpush.msra.mxu0 %v229
    %529 = vmatpush.msra.mxu0 %v228
    %530 = vmatpush.msra.mxu0 %v227
    %531 = vmatpush.msra.mxu0 %v226
    %532 = vmatpush.msra.mxu0 %v225
    %533 = vmatpush.msra.mxu0 %v224
    %534 = vmatpush.msra.mxu0 %v223
    %535 = vmatpush.msra.mxu0 %v222
    %536 = vmatpush.msra.mxu0 %v221
    %537 = vmatmul.f32.gmra.mxu0 %v55
    %v538 = vpop.f32.mrf.mxu0
    %v539 = vadd.f32 %v519, %v538
    %540 = vdwg.mxu0
    %541 = vmatpush.msra.mxu0 %v252
    %542 = vmatpush.msra.mxu0 %v251
    %543 = vmatpush.msra.mxu0 %v250
    %544 = vmatpush.msra.mxu0 %v249
    %545 = vmatpush.msra.mxu0 %v248
    %546 = vmatpush.msra.mxu0 %v247
    %547 = vmatpush.msra.mxu0 %v246
    %548 = vmatpush.msra.mxu0 %v245
    %549 = vmatpush.msra.mxu0 %v244
    %550 = vmatpush.msra.mxu0 %v243
    %551 = vmatpush.msra.mxu0 %v242
    %552 = vmatpush.msra.mxu0 %v241
    %553 = vmatpush.msra.mxu0 %v240
    %554 = vmatpush.msra.mxu0 %v239
    %555 = vmatpush.msra.mxu0 %v238
    %556 = vmatpush.msra.mxu0 %v237
    %557 = vmatmul.f32.gmra.mxu0 %v56
    %v558 = vpop.f32.mrf.mxu0
    %v559 = vadd.f32 %v539, %v558
    %560 = vdwg.mxu0
    %561 = vmatpush.msra.mxu0 %v268
    %562 = vmatpush.msra.mxu0 %v267
    %563 = vmatpush.msra.mxu0 %v266
    %564 = vmatpush.msra.mxu0 %v265
    %565 = vmatpush.msra.mxu0 %v264
    %566 = vmatpush.msra.mxu0 %v263
    %567 = vmatpush.msra.mxu0 %v262
    %568 = vmatpush.msra.mxu0 %v261
    %569 = vmatpush.msra.mxu0 %v260
    %570 = vmatpush.msra.mxu0 %v259
    %571 = vmatpush.msra.mxu0 %v258
    %572 = vmatpush.msra.mxu0 %v257
    %573 = vmatpush.msra.mxu0 %v256
    %574 = vmatpush.msra.mxu0 %v255
    %575 = vmatpush.msra.mxu0 %v254
    %576 = vmatpush.msra.mxu0 %v253
    %577 = vmatmul.f32.gmra.mxu0 %v57
    %v578 = vpop.f32.mrf.mxu0
    %v579 = vadd.f32 %v559, %v578
    %580 = vdwg.mxu0
    %581 = vmatpush.msra.mxu0 %v284
    %582 = vmatpush.msra.mxu0 %v283
    %583 = vmatpush.msra.mxu0 %v282
    %584 = vmatpush.msra.mxu0 %v281
    %585 = vmatpush.msra.mxu0 %v280
    %586 = vmatpush.msra.mxu0 %v279
    %587 = vmatpush.msra.mxu0 %v278
    %588 = vmatpush.msra.mxu0 %v277
    %589 = vmatpush.msra.mxu0 %v276
    %590 = vmatpush.msra.mxu0 %v275
    %591 = vmatpush.msra.mxu0 %v274
    %592 = vmatpush.msra.mxu0 %v273
    %593 = vmatpush.msra.mxu0 %v272
    %594 = vmatpush.msra.mxu0 %v271
    %595 = vmatpush.msra.mxu0 %v270
    %596 = vmatpush.msra.mxu0 %v269
    %597 = vmatmul.f32.gmra.mxu0 %v58
    %v598 = vpop.f32.mrf.mxu0
    %v599 = vadd.f32 %v579, %v598
    %600 = vdwg.mxu0
    %601 = vmatpush.msra.mxu0 %v300
    %602 = vmatpush.msra.mxu0 %v299
    %603 = vmatpush.msra.mxu0 %v298
    %604 = vmatpush.msra.mxu0 %v297
    %605 = vmatpush.msra.mxu0 %v296
    %606 = vmatpush.msra.mxu0 %v295
    %607 = vmatpush.msra.mxu0 %v294
    %608 = vmatpush.msra.mxu0 %v293
    %609 = vmatpush.msra.mxu0 %v292
    %610 = vmatpush.msra.mxu0 %v291
    %611 = vmatpush.msra.mxu0 %v290
    %612 = vmatpush.msra.mxu0 %v289
    %613 = vmatpush.msra.mxu0 %v288
    %614 = vmatpush.msra.mxu0 %v287
    %615 = vmatpush.msra.mxu0 %v286
    %616 = vmatpush.msra.mxu0 %v285
    %617 = vmatmul.f32.gmra.mxu0 %v59
    %v618 = vpop.f32.mrf.mxu0
    %v619 = vadd.f32 %v599, %v618
    %620 = vdwg.mxu0
    %621 = vmatpush.msra.mxu0 %v316
    %622 = vmatpush.msra.mxu0 %v315
    %623 = vmatpush.msra.mxu0 %v314
    %624 = vmatpush.msra.mxu0 %v313
    %625 = vmatpush.msra.mxu0 %v312
    %626 = vmatpush.msra.mxu0 %v311
    %627 = vmatpush.msra.mxu0 %v310
    %628 = vmatpush.msra.mxu0 %v309
    %629 = vmatpush.msra.mxu0 %v308
    %630 = vmatpush.msra.mxu0 %v307
    %631 = vmatpush.msra.mxu0 %v306
    %632 = vmatpush.msra.mxu0 %v305
    %633 = vmatpush.msra.mxu0 %v304
    %634 = vmatpush.msra.mxu0 %v303
    %635 = vmatpush.msra.mxu0 %v302
    %636 = vmatpush.msra.mxu0 %v301
    %637 = vmatmul.f32.gmra.mxu0 %v60
    %v638 = vpop.f32.mrf.mxu0
    %v639 = vadd.f32 %v619, %v638
    %640 = vdwg.mxu0
    %641 = vst [vmem:[#allocation7] sm:$0xff] %v639
    // Predicated region
    $region22: #{net_forward.5} parent=1 // pred_check
      _
    $region23: #{net_forward.5} parent=1 // pred_check_branch
      %643 = sbr.rel (0) target = $region25
    $region24: #{net_forward.5} parent=1 // pred_region
      %645 = vsyncadd [#allocation4], 0
      %s647 = sshll.u32 [#allocation7], 4
      %s648 = int_to_ptr.vmem [resolvable:$true] %s647
      %s649 = sshll.u32 %s3, 4
      %s650 = int_to_ptr.hbm [resolvable:$true] %s649
      %652 = dma.vmem_to_hbm [thread:$0]  %s648, 128, %s650, [#allocation4]
    $region25: #{net_forward.5} parent=1 // pred_fallthru
      _
    // Predicated region
    $region26: #{net_forward.5} parent=1 // pred_check
      _
    $region27: #{net_forward.5} parent=1 // pred_check_branch
      %654 = sbr.rel (0) target = $region29
    $region28: #{net_forward.5} parent=1 // pred_region
      %656 = dma.done [#allocation4], 128
    $region29: #{net_forward.5} parent=1 // pred_fallthru
      _
    %657 = vsyncpa [#allocation3], 1
    %658 = vsyncpa [#allocation6], 1
    %659 = vsyncpa [#allocation4], 1

// kernel: net_forward.3
$region0: #{net_forward.3}
  #allocation0 [shape = 'u32[]', space=smem, size = 0x4, offset = 0x4, fixed_abs, tag = 'smem constant byte address 0x4 - core index']
  #allocation1 [shape = 'u32[72,128]{1,0:T(1,128)}', space=vmem, size = 0x9000, scoped, tag = 'internal scratch']
  %s0 = inlined_call_operand.vmem [shape: f32[8,896], index: 0, kind: input, shape index: {}]
  %s1 = inlined_call_operand.hbm [shape: f32[896,2048], index: 1, kind: input, shape index: {}]
  %s2 = inlined_call_operand.hbm [shape: f32[1,2048], index: 2, kind: input, shape index: {}]
  %s3 = inlined_call_operand.vmem [shape: f32[8,2048], index: 3, kind: output, shape index: {}]
  %s4 = sld [smem:[#allocation0]]
  $region53: #{net_forward.3} parent=0
    _
  %s6 = ssub.s32 1, %s4
  %s7 = scalar_select 0, %s6, %s4
  $region1: #{net_forward.3} parent=0
    #allocation2 [shape = 'u8[3670016]{0}', space=vmem, size = 0x380000, scoped, tag = 'input window, operand 1']
    #allocation3 [shape = 's32[2]{0}', space=sflag, size = 0x8, scoped, tag = 'scoped memory for net_forward.3']
    #allocation4 [shape = 'u8[4096]{0}', space=vmem, size = 0x1000, scoped, tag = 'input window, operand 2']
    #allocation5 [shape = 's32[2]{0}', space=sflag, size = 0x8, scoped, tag = 'scoped memory for net_forward.3']
    %8 = vsyncpa [#allocation3], 0
    %s9 = scalar_lea.sflag [#allocation3], 1
    %10 = vsyncpa %s9, 0
    %11 = vsyncpa [#allocation5], 0
    %s12 = scalar_lea.sflag [#allocation5], 1
    %13 = vsyncpa %s12, 0
    loop: start=0, step=1, limit=6
    $region2: #{net_forward.3} parent=1 // loop_pre_header
      _
    $region3: #{net_forward.3} parent=1 // loop_header
      %s15 = sphi 0, %s19
      %p16 = scmp.ge.s32.totalorder %s15, 6
      %s23 = sphi 0, %s23
      %s25 = sphi 0, %s23
      %s26 = sphi 0, %s25
      %s40 = sphi 0, %s26
      %s46 = sphi 0, %s48
      %s49 = sphi 0, %s46
      %s50 = sphi 0, %s49
      %s66 = sphi 0, %s50
      %s72 = sphi 0, %s74
      %s75 = sphi 0, %s72
      %s76 = sphi 0, %s75
      %s92 = sphi 0, %s76
      %s98 = sphi 0, %s100
      %s101 = sphi 0, %s98
      %s102 = sphi 0, %s101
      %s118 = sphi 0, %s102
    $region4: #{net_forward.3} parent=1 // loop_header_branch
      %18 = sbr.rel (%p16) target = $region8
    $region5: #{net_forward.3} parent=1 // loop_body
      %s20 = ssub.s32 %s15, 1
      %s21 = ssub.s32 %s15, 2
      %s22 = sadd.s32 %s15, 1
      %s24 = sadd.s32 %s23, 1
      %p27 = scmp.eq.s32.totalorder %s15, 3
      %p28 = scmp.ne.s32.totalorder %s23, %s25
      %p29 = scmp.eq.s32.totalorder %s15, 0
      %p30 = por %p28, %p29
      %p31 = scmp.ne.s32.totalorder %s23, %s25
      %p32 = scmp.eq.s32.totalorder %s20, 3
      %p33 = por %p31, %p32
      %p34 = scmp.ne.s32.totalorder %s25, %s26
      %p35 = scmp.eq.s32.totalorder %s20, 0
      %p36 = por %p34, %p35
      %p37 = scmp.ne.s32.totalorder %s25, %s26
      %p38 = scmp.eq.s32.totalorder %s21, 3
      %p39 = por %p37, %p38
      %p41 = scmp.ne.s32.totalorder %s26, %s40
      %p42 = scmp.eq.s32.totalorder %s21, 0
      %p43 = por %p41, %p42
      %s44 = ssub.s32 %s15, %s22
      %p45 = scmp.eq.s32.totalorder %s44, 0
      %s47 = sadd.s32 %s46, 1
      %s48 = scalar_select %p45, %s46, %s47
      %p51 = pneg %p45
      %p52 = scmp.eq.s32.totalorder %s15, 3
      %p53 = por %p51, %p52
      %p54 = scmp.ne.s32.totalorder %s46, %s49
      %p55 = scmp.eq.s32.totalorder %s15, 0
      %p56 = por %p54, %p55
      %p57 = scmp.ne.s32.totalorder %s46, %s49
      %p58 = scmp.eq.s32.totalorder %s20, 3
      %p59 = por %p57, %p58
      %p60 = scmp.ne.s32.totalorder %s49, %s50
      %p61 = scmp.eq.s32.totalorder %s20, 0
      %p62 = por %p60, %p61
      %p63 = scmp.ne.s32.totalorder %s49, %s50
      %p64 = scmp.eq.s32.totalorder %s21, 3
      %p65 = por %p63, %p64
      %p67 = scmp.ne.s32.totalorder %s50, %s66
      %p68 = scmp.eq.s32.totalorder %s21, 0
      %p69 = por %p67, %p68
      %s70 = ssub.s32 %s15, %s22
      %p71 = scmp.eq.s32.totalorder %s70, 0
      %s73 = sadd.s32 %s72, 1
      %s74 = scalar_select %p71, %s72, %s73
      %p77 = pneg %p71
      %p78 = scmp.eq.s32.totalorder %s15, 3
      %p79 = por %p77, %p78
      %p80 = scmp.ne.s32.totalorder %s72, %s75
      %p81 = scmp.eq.s32.totalorder %s15, 0
      %p82 = por %p80, %p81
      %p83 = scmp.ne.s32.totalorder %s72, %s75
      %p84 = scmp.eq.s32.totalorder %s20, 3
      %p85 = por %p83, %p84
      %p86 = scmp.ne.s32.totalorder %s75, %s76
      %p87 = scmp.eq.s32.totalorder %s20, 0
      %p88 = por %p86, %p87
      %p89 = scmp.ne.s32.totalorder %s75, %s76
      %p90 = scmp.eq.s32.totalorder %s21, 3
      %p91 = por %p89, %p90
      %p93 = scmp.ne.s32.totalorder %s76, %s92
      %p94 = scmp.eq.s32.totalorder %s21, 0
      %p95 = por %p93, %p94
      %s96 = ssub.s32 %s15, %s22
      %p97 = scmp.eq.s32.totalorder %s96, 0
      %s99 = sadd.s32 %s98, 1
      %s100 = scalar_select %p97, %s98, %s99
      %p103 = pneg %p97
      %p104 = scmp.eq.s32.totalorder %s15, 3
      %p105 = por %p103, %p104
      %p106 = scmp.ne.s32.totalorder %s98, %s101
      %p107 = scmp.eq.s32.totalorder %s15, 0
      %p108 = por %p106, %p107
      %p109 = scmp.ne.s32.totalorder %s98, %s101
      %p110 = scmp.eq.s32.totalorder %s20, 3
      %p111 = por %p109, %p110
      %p112 = scmp.ne.s32.totalorder %s101, %s102
      %p113 = scmp.eq.s32.totalorder %s20, 0
      %p114 = por %p112, %p113
      %p115 = scmp.ne.s32.totalorder %s101, %s102
      %p116 = scmp.eq.s32.totalorder %s21, 3
      %p117 = por %p115, %p116
      %p119 = scmp.ne.s32.totalorder %s102, %s118
      %p120 = scmp.eq.s32.totalorder %s21, 0
      %p121 = por %p119, %p120
      %p122 = scmp.le.s32.totalorder 1, %s15
      %p123 = scmp.lt.s32.totalorder %s15, 5
      %p124 = pnand %p122, %p123
      %p125 = pneg %p124
      // Predicated region
      $region9: #{net_forward.3} parent=5 // pred_check
        _
      $region10: #{net_forward.3} parent=5 // pred_check_branch
        %127 = sbr.rel (%p124) target = $region12
      $region11: #{net_forward.3} parent=5 // pred_region
        %s128 = ssub.s32 %s15, 1
        // Predicated region
        $region13: #{net_forward.3} parent=11 // pred_check
          %p129 = pneg %p36
        $region14: #{net_forward.3} parent=11 // pred_check_branch
          %131 = sbr.rel (%p129) target = $region16
        $region15: #{net_forward.3} parent=11 // pred_region
          _
        $region16: #{net_forward.3} parent=11 // pred_fallthru
          _
      $region12: #{net_forward.3} parent=5 // pred_fallthru
        _
      %p132 = scmp.lt.s32.totalorder %s15, 4
      // Predicated region
      $region17: #{net_forward.3} parent=5 // pred_check
        %p133 = pneg %p132
      $region18: #{net_forward.3} parent=5 // pred_check_branch
        %135 = sbr.rel (%p133) target = $region20
      $region19: #{net_forward.3} parent=5 // pred_region
        // Predicated region
        $region21: #{net_forward.3} parent=19 // pred_check
          %p136 = pneg %p56
        $region22: #{net_forward.3} parent=19 // pred_check_branch
          %138 = sbr.rel (%p136) target = $region24
        $region23: #{net_forward.3} parent=19 // pred_region
          %s139 = sand.u32 %s46, 1
          %s140 = scalar_lea.sflag [#allocation3], %s139
          %s141 = sand.u32 %s46, 1
          %s142 = smul.addr %s141, 3584
          %s143 = scalar_lea.vmem [#allocation2], %s142
          %s144 = smul.u32 4, %s15
          %146 = vsyncadd %s140, 0
          %s147 = smul.addr %s144, 8
          %s148 = scalar_lea.hbm %s1, %s147
          %s149 = sshll.u32 %s148, 4
          %s150 = int_to_ptr.hbm [resolvable:$true] %s149
          %s151 = sshll.u32 %s143, 4
          %s152 = int_to_ptr.vmem [resolvable:$true] %s151
          %157 = dma.hbm_to_vmem [thread:$0]  %s150, 57344, %s152, %s140, 2048, 512, 32
        $region24: #{net_forward.3} parent=19 // pred_fallthru
          _
        // Predicated region
        $region25: #{net_forward.3} parent=19 // pred_check
          %p158 = pneg %p82
        $region26: #{net_forward.3} parent=19 // pred_check_branch
          %160 = sbr.rel (%p158) target = $region28
        $region27: #{net_forward.3} parent=19 // pred_region
          %s161 = sand.u32 %s72, 1
          %s162 = scalar_lea.sflag [#allocation5], %s161
          %s163 = sand.u32 %s72, 1
          %s164 = smul.addr %s163, 4
          %s165 = scalar_lea.vmem [#allocation4], %s164
          %s166 = smul.u32 4, %s15
          %168 = vsyncadd %s162, 0
          %s169 = scalar_lea.hbm %s2, %s166
          %s171 = sshll.u32 %s169, 4
          %s172 = int_to_ptr.hbm [resolvable:$true] %s171
          %s173 = sshll.u32 %s165, 4
          %s174 = int_to_ptr.vmem [resolvable:$true] %s173
          %176 = dma.hbm_to_vmem [thread:$0]  %s172, 64, %s174, %s162
        $region28: #{net_forward.3} parent=19 // pred_fallthru
          _
      $region20: #{net_forward.3} parent=5 // pred_fallthru
        _
      %p177 = scmp.le.s32.totalorder 1, %s15
      %p178 = scmp.lt.s32.totalorder %s15, 5
      %p179 = pnand %p177, %p178
      %p180 = pneg %p179
      // Predicated region
      $region29: #{net_forward.3} parent=5 // pred_check
        _
      $region30: #{net_forward.3} parent=5 // pred_check_branch
        %182 = sbr.rel (%p179) target = $region32
      $region31: #{net_forward.3} parent=5 // pred_region
        %s183 = ssub.s32 %s15, 1
        %s184 = sand.u32 %s49, 1
        %s185 = scalar_lea.sflag [#allocation3], %s184
        %s186 = sand.u32 %s49, 1
        %s187 = smul.addr %s186, 3584
        %s188 = scalar_lea.vmem [#allocation2], %s187
        // Predicated region
        $region33: #{net_forward.3} parent=31 // pred_check
          %p189 = pneg %p62
        $region34: #{net_forward.3} parent=31 // pred_check_branch
          %191 = sbr.rel (%p189) target = $region36
        $region35: #{net_forward.3} parent=31 // pred_region
          %193 = dma.done %s185, 57344
        $region36: #{net_forward.3} parent=31 // pred_fallthru
          _
        %s194 = sand.u32 %s75, 1
        %s195 = scalar_lea.sflag [#allocation5], %s194
        %s196 = sand.u32 %s75, 1
        %s197 = smul.addr %s196, 4
        %s198 = scalar_lea.vmem [#allocation4], %s197
        // Predicated region
        $region37: #{net_forward.3} parent=31 // pred_check
          %p199 = pneg %p88
        $region38: #{net_forward.3} parent=31 // pred_check_branch
          %201 = sbr.rel (%p199) target = $region40
        $region39: #{net_forward.3} parent=31 // pred_region
          %203 = dma.done %s195, 64
        $region40: #{net_forward.3} parent=31 // pred_fallthru
          _
        %p204 = pneg %p36
        %p205 = pneg %p33
        %s206 = sand.u32 %s49, 1
        %s207 = scalar_lea.sflag [#allocation3], %s206
        %s208 = sand.u32 %s49, 1
        %s209 = smul.addr %s208, 3584
        %s210 = scalar_lea.vmem [#allocation2], %s209
        %p211 = pneg %p62
        %p212 = pneg %p59
        %s213 = sand.u32 %s75, 1
        %s214 = scalar_lea.sflag [#allocation5], %s213
        %s215 = sand.u32 %s75, 1
        %s216 = smul.addr %s215, 4
        %s217 = scalar_lea.vmem [#allocation4], %s216
        %p218 = pneg %p88
        %p219 = pneg %p85
        %p220 = pneg %p114
        %p221 = pneg %p111
        %s222 = smul.u32 4, %s20
        %p223 = scmp.lt.s32.totalorder %s222, 15
        %s224 = scalar_select %p223, %s222, 15
        %s225 = smul.addr %s224, 8
        %s226 = scalar_lea.vmem %s3, %s225
        %s227 = smul.u32 4, %s20
        %s228 = smul.u32 4, %s20
        %s229 = smul.u32 4, %s20
        %p230 = scmp.lt.s32.totalorder %s229, 15
        %s231 = scalar_select %p230, %s229, 15
        %s232 = smul.addr %s231, 8
        %s233 = scalar_lea.vmem %s3, %s232
        %s234 = smul.u32 4, %s20
        %v235 = vld [vmem:[%s0] sm:$0xff]
        %v236 = vld [vmem:[%s0 + $0x8] sm:$0xff]
        %v237 = vld [vmem:[%s0 + $0x10] sm:$0xff]
        %v238 = vld [vmem:[%s0 + $0x18] sm:$0xff]
        %v239 = vld [vmem:[%s0 + $0x20] sm:$0xff]
        %v240 = vld [vmem:[%s0 + $0x28] sm:$0xff]
        %v241 = vld [vmem:[%s0 + $0x30] sm:$0xff]
        %v242 = vld [vmem:[%s188] sm:$0xff]
        %v243 = vld [vmem:[%s188 + $0x8] sm:$0xff]
        %v244 = vld [vmem:[%s188 + $0x10] sm:$0xff]
        %v245 = vld [vmem:[%s188 + $0x18] sm:$0xff]
        %v246 = vld [vmem:[%s188 + $0x20] sm:$0xff]
        %v247 = vld [vmem:[%s188 + $0x28] sm:$0xff]
        %v248 = vld [vmem:[%s188 + $0x30] sm:$0xff]
        %v249 = vld [vmem:[%s188 + $0x38] sm:$0xff]
        %v250 = vld [vmem:[%s188 + $0x40] sm:$0xff]
        %v251 = vld [vmem:[%s188 + $0x48] sm:$0xff]
        %v252 = vld [vmem:[%s188 + $0x50] sm:$0xff]
        %v253 = vld [vmem:[%s188 + $0x58] sm:$0xff]
        %v254 = vld [vmem:[%s188 + $0x60] sm:$0xff]
        %v255 = vld [vmem:[%s188 + $0x68] sm:$0xff]
        %v256 = vld [vmem:[%s188 + $0x70] sm:$0xff]
        %v257 = vld [vmem:[%s188 + $0x78] sm:$0xff]
        %v258 = vld [vmem:[%s188 + $0x80] sm:$0xff]
        %v259 = vld [vmem:[%s188 + $0x88] sm:$0xff]
        %v260 = vld [vmem:[%s188 + $0x90] sm:$0xff]
        %v261 = vld [vmem:[%s188 + $0x98] sm:$0xff]
        %v262 = vld [vmem:[%s188 + $0xa0] sm:$0xff]
        %v263 = vld [vmem:[%s188 + $0xa8] sm:$0xff]
        %v264 = vld [vmem:[%s188 + $0xb0] sm:$0xff]
        %v265 = vld [vmem:[%s188 + $0xb8] sm:$0xff]
        %v266 = vld [vmem:[%s188 + $0xc0] sm:$0xff]
        %v267 = vld [vmem:[%s188 + $0xc8] sm:$0xff]
        %v268 = vld [vmem:[%s188 + $0xd0] sm:$0xff]
        %v269 = vld [vmem:[%s188 + $0xd8] sm:$0xff]
        %v270 = vld [vmem:[%s188 + $0xe0] sm:$0xff]
        %v271 = vld [vmem:[%s188 + $0xe8] sm:$0xff]
        %v272 = vld [vmem:[%s188 + $0xf0] sm:$0xff]
        %v273 = vld [vmem:[%s188 + $0xf8] sm:$0xff]
        %v274 = vld [vmem:[%s188 + $0x100] sm:$0xff]
        %v275 = vld [vmem:[%s188 + $0x108] sm:$0xff]
        %v276 = vld [vmem:[%s188 + $0x110] sm:$0xff]
        %v277 = vld [vmem:[%s188 + $0x118] sm:$0xff]
        %v278 = vld [vmem:[%s188 + $0x120] sm:$0xff]
        %v279 = vld [vmem:[%s188 + $0x128] sm:$0xff]
        %v280 = vld [vmem:[%s188 + $0x130] sm:$0xff]
        %v281 = vld [vmem:[%s188 + $0x138] sm:$0xff]
        %v282 = vld [vmem:[%s188 + $0x140] sm:$0xff]
        %v283 = vld [vmem:[%s188 + $0x148] sm:$0xff]
        %v284 = vld [vmem:[%s188 + $0x150] sm:$0xff]
        %v285 = vld [vmem:[%s188 + $0x158] sm:$0xff]
        %v286 = vld [vmem:[%s188 + $0x160] sm:$0xff]
        %v287 = vld [vmem:[%s188 + $0x168] sm:$0xff]
        %v288 = vld [vmem:[%s188 + $0x170] sm:$0xff]
        %v289 = vld [vmem:[%s188 + $0x178] sm:$0xff]
        %v290 = vld [vmem:[%s188 + $0x180] sm:$0xff]
        %v291 = vld [vmem:[%s188 + $0x188] sm:$0xff]
        %v292 = vld [vmem:[%s188 + $0x190] sm:$0xff]
        %v293 = vld [vmem:[%s188 + $0x198] sm:$0xff]
        %v294 = vld [vmem:[%s188 + $0x1a0] sm:$0xff]
        %v295 = vld [vmem:[%s188 + $0x1a8] sm:$0xff]
        %v296 = vld [vmem:[%s188 + $0x1b0] sm:$0xff]
        %v297 = vld [vmem:[%s188 + $0x1b8] sm:$0xff]
        %v298 = vld [vmem:[%s188 + $0x1c0] sm:$0xff]
        %v299 = vld [vmem:[%s188 + $0x1c8] sm:$0xff]
        %v300 = vld [vmem:[%s188 + $0x1d0] sm:$0xff]
        %v301 = vld [vmem:[%s188 + $0x1d8] sm:$0xff]
        %v302 = vld [vmem:[%s188 + $0x1e0] sm:$0xff]
        %v303 = vld [vmem:[%s188 + $0x1e8] sm:$0xff]
        %v304 = vld [vmem:[%s188 + $0x1f0] sm:$0xff]
        %v305 = vld [vmem:[%s188 + $0x1f8] sm:$0xff]
        %v306 = vld [vmem:[%s188 + $0x200] sm:$0xff]
        %v307 = vld [vmem:[%s188 + $0x208] sm:$0xff]
        %v308 = vld [vmem:[%s188 + $0x210] sm:$0xff]
        %v309 = vld [vmem:[%s188 + $0x218] sm:$0xff]
        %v310 = vld [vmem:[%s188 + $0x220] sm:$0xff]
        %v311 = vld [vmem:[%s188 + $0x228] sm:$0xff]
        %v312 = vld [vmem:[%s188 + $0x230] sm:$0xff]
        %v313 = vld [vmem:[%s188 + $0x238] sm:$0xff]
        %v314 = vld [vmem:[%s188 + $0x240] sm:$0xff]
        %v315 = vld [vmem:[%s188 + $0x248] sm:$0xff]
        %v316 = vld [vmem:[%s188 + $0x250] sm:$0xff]
        %v317 = vld [vmem:[%s188 + $0x258] sm:$0xff]
        %v318 = vld [vmem:[%s188 + $0x260] sm:$0xff]
        %v319 = vld [vmem:[%s188 + $0x268] sm:$0xff]
        %v320 = vld [vmem:[%s188 + $0x270] sm:$0xff]
        %v321 = vld [vmem:[%s188 + $0x278] sm:$0xff]
        %v322 = vld [vmem:[%s188 + $0x280] sm:$0xff]
        %v323 = vld [vmem:[%s188 + $0x288] sm:$0xff]
        %v324 = vld [vmem:[%s188 + $0x290] sm:$0xff]
        %v325 = vld [vmem:[%s188 + $0x298] sm:$0xff]
        %v326 = vld [vmem:[%s188 + $0x2a0] sm:$0xff]
        %v327 = vld [vmem:[%s188 + $0x2a8] sm:$0xff]
        %v328 = vld [vmem:[%s188 + $0x2b0] sm:$0xff]
        %v329 = vld [vmem:[%s188 + $0x2b8] sm:$0xff]
        %v330 = vld [vmem:[%s188 + $0x2c0] sm:$0xff]
        %v331 = vld [vmem:[%s188 + $0x2c8] sm:$0xff]
        %v332 = vld [vmem:[%s188 + $0x2d0] sm:$0xff]
        %v333 = vld [vmem:[%s188 + $0x2d8] sm:$0xff]
        %v334 = vld [vmem:[%s188 + $0x2e0] sm:$0xff]
        %v335 = vld [vmem:[%s188 + $0x2e8] sm:$0xff]
        %v336 = vld [vmem:[%s188 + $0x2f0] sm:$0xff]
        %v337 = vld [vmem:[%s188 + $0x2f8] sm:$0xff]
        %v338 = vld [vmem:[%s188 + $0x300] sm:$0xff]
        %v339 = vld [vmem:[%s188 + $0x308] sm:$0xff]
        %v340 = vld [vmem:[%s188 + $0x310] sm:$0xff]
        %v341 = vld [vmem:[%s188 + $0x318] sm:$0xff]
        %v342 = vld [vmem:[%s188 + $0x320] sm:$0xff]
        %v343 = vld [vmem:[%s188 + $0x328] sm:$0xff]
        %v344 = vld [vmem:[%s188 + $0x330] sm:$0xff]
        %v345 = vld [vmem:[%s188 + $0x338] sm:$0xff]
        %v346 = vld [vmem:[%s188 + $0x340] sm:$0xff]
        %v347 = vld [vmem:[%s188 + $0x348] sm:$0xff]
        %v348 = vld [vmem:[%s188 + $0x350] sm:$0xff]
        %v349 = vld [vmem:[%s188 + $0x358] sm:$0xff]
        %v350 = vld [vmem:[%s188 + $0x360] sm:$0xff]
        %v351 = vld [vmem:[%s188 + $0x368] sm:$0xff]
        %v352 = vld [vmem:[%s188 + $0x370] sm:$0xff]
        %v353 = vld [vmem:[%s188 + $0x378] sm:$0xff]
        %v354 = vld [vmem:[%s188 + $0x380] sm:$0xff]
        %v355 = vld [vmem:[%s188 + $0x388] sm:$0xff]
        %v356 = vld [vmem:[%s188 + $0x390] sm:$0xff]
        %v357 = vld [vmem:[%s188 + $0x398] sm:$0xff]
        %v358 = vld [vmem:[%s188 + $0x3a0] sm:$0xff]
        %v359 = vld [vmem:[%s188 + $0x3a8] sm:$0xff]
        %v360 = vld [vmem:[%s188 + $0x3b0] sm:$0xff]
        %v361 = vld [vmem:[%s188 + $0x3b8] sm:$0xff]
        %v362 = vld [vmem:[%s188 + $0x3c0] sm:$0xff]
        %v363 = vld [vmem:[%s188 + $0x3c8] sm:$0xff]
        %v364 = vld [vmem:[%s188 + $0x3d0] sm:$0xff]
        %v365 = vld [vmem:[%s188 + $0x3d8] sm:$0xff]
        %v366 = vld [vmem:[%s188 + $0x3e0] sm:$0xff]
        %v367 = vld [vmem:[%s188 + $0x3e8] sm:$0xff]
        %v368 = vld [vmem:[%s188 + $0x3f0] sm:$0xff]
        %v369 = vld [vmem:[%s188 + $0x3f8] sm:$0xff]
        %v370 = vld [vmem:[%s188 + $0x400] sm:$0xff]
        %v371 = vld [vmem:[%s188 + $0x408] sm:$0xff]
        %v372 = vld [vmem:[%s188 + $0x410] sm:$0xff]
        %v373 = vld [vmem:[%s188 + $0x418] sm:$0xff]
        %v374 = vld [vmem:[%s188 + $0x420] sm:$0xff]
        %v375 = vld [vmem:[%s188 + $0x428] sm:$0xff]
        %v376 = vld [vmem:[%s188 + $0x430] sm:$0xff]
        %v377 = vld [vmem:[%s188 + $0x438] sm:$0xff]
        %v378 = vld [vmem:[%s188 + $0x440] sm:$0xff]
        %v379 = vld [vmem:[%s188 + $0x448] sm:$0xff]
        %v380 = vld [vmem:[%s188 + $0x450] sm:$0xff]
        %v381 = vld [vmem:[%s188 + $0x458] sm:$0xff]
        %v382 = vld [vmem:[%s188 + $0x460] sm:$0xff]
        %v383 = vld [vmem:[%s188 + $0x468] sm:$0xff]
        %v384 = vld [vmem:[%s188 + $0x470] sm:$0xff]
        %v385 = vld [vmem:[%s188 + $0x478] sm:$0xff]
        %v386 = vld [vmem:[%s188 + $0x480] sm:$0xff]
        %v387 = vld [vmem:[%s188 + $0x488] sm:$0xff]
        %v388 = vld [vmem:[%s188 + $0x490] sm:$0xff]
        %v389 = vld [vmem:[%s188 + $0x498] sm:$0xff]
        %v390 = vld [vmem:[%s188 + $0x4a0] sm:$0xff]
        %v391 = vld [vmem:[%s188 + $0x4a8] sm:$0xff]
        %v392 = vld [vmem:[%s188 + $0x4b0] sm:$0xff]
        %v393 = vld [vmem:[%s188 + $0x4b8] sm:$0xff]
        %v394 = vld [vmem:[%s188 + $0x4c0] sm:$0xff]
        %v395 = vld [vmem:[%s188 + $0x4c8] sm:$0xff]
        %v396 = vld [vmem:[%s188 + $0x4d0] sm:$0xff]
        %v397 = vld [vmem:[%s188 + $0x4d8] sm:$0xff]
        %v398 = vld [vmem:[%s188 + $0x4e0] sm:$0xff]
        %v399 = vld [vmem:[%s188 + $0x4e8] sm:$0xff]
        %v400 = vld [vmem:[%s188 + $0x4f0] sm:$0xff]
        %v401 = vld [vmem:[%s188 + $0x4f8] sm:$0xff]
        %v402 = vld [vmem:[%s188 + $0x500] sm:$0xff]
        %v403 = vld [vmem:[%s188 + $0x508] sm:$0xff]
        %v404 = vld [vmem:[%s188 + $0x510] sm:$0xff]
        %v405 = vld [vmem:[%s188 + $0x518] sm:$0xff]
        %v406 = vld [vmem:[%s188 + $0x520] sm:$0xff]
        %v407 = vld [vmem:[%s188 + $0x528] sm:$0xff]
        %v408 = vld [vmem:[%s188 + $0x530] sm:$0xff]
        %v409 = vld [vmem:[%s188 + $0x538] sm:$0xff]
        %v410 = vld [vmem:[%s188 + $0x540] sm:$0xff]
        %v411 = vld [vmem:[%s188 + $0x548] sm:$0xff]
        %v412 = vld [vmem:[%s188 + $0x550] sm:$0xff]
        %v413 = vld [vmem:[%s188 + $0x558] sm:$0xff]
        %v414 = vld [vmem:[%s188 + $0x560] sm:$0xff]
        %v415 = vld [vmem:[%s188 + $0x568] sm:$0xff]
        %v416 = vld [vmem:[%s188 + $0x570] sm:$0xff]
        %v417 = vld [vmem:[%s188 + $0x578] sm:$0xff]
        %v418 = vld [vmem:[%s188 + $0x580] sm:$0xff]
        %v419 = vld [vmem:[%s188 + $0x588] sm:$0xff]
        %v420 = vld [vmem:[%s188 + $0x590] sm:$0xff]
        %v421 = vld [vmem:[%s188 + $0x598] sm:$0xff]
        %v422 = vld [vmem:[%s188 + $0x5a0] sm:$0xff]
        %v423 = vld [vmem:[%s188 + $0x5a8] sm:$0xff]
        %v424 = vld [vmem:[%s188 + $0x5b0] sm:$0xff]
        %v425 = vld [vmem:[%s188 + $0x5b8] sm:$0xff]
        %v426 = vld [vmem:[%s188 + $0x5c0] sm:$0xff]
        %v427 = vld [vmem:[%s188 + $0x5c8] sm:$0xff]
        %v428 = vld [vmem:[%s188 + $0x5d0] sm:$0xff]
        %v429 = vld [vmem:[%s188 + $0x5d8] sm:$0xff]
        %v430 = vld [vmem:[%s188 + $0x5e0] sm:$0xff]
        %v431 = vld [vmem:[%s188 + $0x5e8] sm:$0xff]
        %v432 = vld [vmem:[%s188 + $0x5f0] sm:$0xff]
        %v433 = vld [vmem:[%s188 + $0x5f8] sm:$0xff]
        %v434 = vld [vmem:[%s188 + $0x600] sm:$0xff]
        %v435 = vld [vmem:[%s188 + $0x608] sm:$0xff]
        %v436 = vld [vmem:[%s188 + $0x610] sm:$0xff]
        %v437 = vld [vmem:[%s188 + $0x618] sm:$0xff]
        %v438 = vld [vmem:[%s188 + $0x620] sm:$0xff]
        %v439 = vld [vmem:[%s188 + $0x628] sm:$0xff]
        %v440 = vld [vmem:[%s188 + $0x630] sm:$0xff]
        %v441 = vld [vmem:[%s188 + $0x638] sm:$0xff]
        %v442 = vld [vmem:[%s188 + $0x640] sm:$0xff]
        %v443 = vld [vmem:[%s188 + $0x648] sm:$0xff]
        %v444 = vld [vmem:[%s188 + $0x650] sm:$0xff]
        %v445 = vld [vmem:[%s188 + $0x658] sm:$0xff]
        %v446 = vld [vmem:[%s188 + $0x660] sm:$0xff]
        %v447 = vld [vmem:[%s188 + $0x668] sm:$0xff]
        %v448 = vld [vmem:[%s188 + $0x670] sm:$0xff]
        %v449 = vld [vmem:[%s188 + $0x678] sm:$0xff]
        %v450 = vld [vmem:[%s188 + $0x680] sm:$0xff]
        %v451 = vld [vmem:[%s188 + $0x688] sm:$0xff]
        %v452 = vld [vmem:[%s188 + $0x690] sm:$0xff]
        %v453 = vld [vmem:[%s188 + $0x698] sm:$0xff]
        %v454 = vld [vmem:[%s188 + $0x6a0] sm:$0xff]
        %v455 = vld [vmem:[%s188 + $0x6a8] sm:$0xff]
        %v456 = vld [vmem:[%s188 + $0x6b0] sm:$0xff]
        %v457 = vld [vmem:[%s188 + $0x6b8] sm:$0xff]
        %v458 = vld [vmem:[%s188 + $0x6c0] sm:$0xff]
        %v459 = vld [vmem:[%s188 + $0x6c8] sm:$0xff]
        %v460 = vld [vmem:[%s188 + $0x6d0] sm:$0xff]
        %v461 = vld [vmem:[%s188 + $0x6d8] sm:$0xff]
        %v462 = vld [vmem:[%s188 + $0x6e0] sm:$0xff]
        %v463 = vld [vmem:[%s188 + $0x6e8] sm:$0xff]
        %v464 = vld [vmem:[%s188 + $0x6f0] sm:$0xff]
        %v465 = vld [vmem:[%s188 + $0x6f8] sm:$0xff]
        %v466 = vld [vmem:[%s188 + $0x700] sm:$0xff]
        %v467 = vld [vmem:[%s188 + $0x708] sm:$0xff]
        %v468 = vld [vmem:[%s188 + $0x710] sm:$0xff]
        %v469 = vld [vmem:[%s188 + $0x718] sm:$0xff]
        %v470 = vld [vmem:[%s188 + $0x720] sm:$0xff]
        %v471 = vld [vmem:[%s188 + $0x728] sm:$0xff]
        %v472 = vld [vmem:[%s188 + $0x730] sm:$0xff]
        %v473 = vld [vmem:[%s188 + $0x738] sm:$0xff]
        %v474 = vld [vmem:[%s188 + $0x740] sm:$0xff]
        %v475 = vld [vmem:[%s188 + $0x748] sm:$0xff]
        %v476 = vld [vmem:[%s188 + $0x750] sm:$0xff]
        %v477 = vld [vmem:[%s188 + $0x758] sm:$0xff]
        %v478 = vld [vmem:[%s188 + $0x760] sm:$0xff]
        %v479 = vld [vmem:[%s188 + $0x768] sm:$0xff]
        %v480 = vld [vmem:[%s188 + $0x770] sm:$0xff]
        %v481 = vld [vmem:[%s188 + $0x778] sm:$0xff]
        %v482 = vld [vmem:[%s188 + $0x780] sm:$0xff]
        %v483 = vld [vmem:[%s188 + $0x788] sm:$0xff]
        %v484 = vld [vmem:[%s188 + $0x790] sm:$0xff]
        %v485 = vld [vmem:[%s188 + $0x798] sm:$0xff]
        %v486 = vld [vmem:[%s188 + $0x7a0] sm:$0xff]
        %v487 = vld [vmem:[%s188 + $0x7a8] sm:$0xff]
        %v488 = vld [vmem:[%s188 + $0x7b0] sm:$0xff]
        %v489 = vld [vmem:[%s188 + $0x7b8] sm:$0xff]
        %v490 = vld [vmem:[%s188 + $0x7c0] sm:$0xff]
        %v491 = vld [vmem:[%s188 + $0x7c8] sm:$0xff]
        %v492 = vld [vmem:[%s188 + $0x7d0] sm:$0xff]
        %v493 = vld [vmem:[%s188 + $0x7d8] sm:$0xff]
        %v494 = vld [vmem:[%s188 + $0x7e0] sm:$0xff]
        %v495 = vld [vmem:[%s188 + $0x7e8] sm:$0xff]
        %v496 = vld [vmem:[%s188 + $0x7f0] sm:$0xff]
        %v497 = vld [vmem:[%s188 + $0x7f8] sm:$0xff]
        %v498 = vld [vmem:[%s188 + $0x800] sm:$0xff]
        %v499 = vld [vmem:[%s188 + $0x808] sm:$0xff]
        %v500 = vld [vmem:[%s188 + $0x810] sm:$0xff]
        %v501 = vld [vmem:[%s188 + $0x818] sm:$0xff]
        %v502 = vld [vmem:[%s188 + $0x820] sm:$0xff]
        %v503 = vld [vmem:[%s188 + $0x828] sm:$0xff]
        %v504 = vld [vmem:[%s188 + $0x830] sm:$0xff]
        %v505 = vld [vmem:[%s188 + $0x838] sm:$0xff]
        %v506 = vld [vmem:[%s188 + $0x840] sm:$0xff]
        %v507 = vld [vmem:[%s188 + $0x848] sm:$0xff]
        %v508 = vld [vmem:[%s188 + $0x850] sm:$0xff]
        %v509 = vld [vmem:[%s188 + $0x858] sm:$0xff]
        %v510 = vld [vmem:[%s188 + $0x860] sm:$0xff]
        %v511 = vld [vmem:[%s188 + $0x868] sm:$0xff]
        %v512 = vld [vmem:[%s188 + $0x870] sm:$0xff]
        %v513 = vld [vmem:[%s188 + $0x878] sm:$0xff]
        %v514 = vld [vmem:[%s188 + $0x880] sm:$0xff]
        %v515 = vld [vmem:[%s188 + $0x888] sm:$0xff]
        %v516 = vld [vmem:[%s188 + $0x890] sm:$0xff]
        %v517 = vld [vmem:[%s188 + $0x898] sm:$0xff]
        %v518 = vld [vmem:[%s188 + $0x8a0] sm:$0xff]
        %v519 = vld [vmem:[%s188 + $0x8a8] sm:$0xff]
        %v520 = vld [vmem:[%s188 + $0x8b0] sm:$0xff]
        %v521 = vld [vmem:[%s188 + $0x8b8] sm:$0xff]
        %v522 = vld [vmem:[%s188 + $0x8c0] sm:$0xff]
        %v523 = vld [vmem:[%s188 + $0x8c8] sm:$0xff]
        %v524 = vld [vmem:[%s188 + $0x8d0] sm:$0xff]
        %v525 = vld [vmem:[%s188 + $0x8d8] sm:$0xff]
        %v526 = vld [vmem:[%s188 + $0x8e0] sm:$0xff]
        %v527 = vld [vmem:[%s188 + $0x8e8] sm:$0xff]
        %v528 = vld [vmem:[%s188 + $0x8f0] sm:$0xff]
        %v529 = vld [vmem:[%s188 + $0x8f8] sm:$0xff]
        %v530 = vld [vmem:[%s188 + $0x900] sm:$0xff]
        %v531 = vld [vmem:[%s188 + $0x908] sm:$0xff]
        %v532 = vld [vmem:[%s188 + $0x910] sm:$0xff]
        %v533 = vld [vmem:[%s188 + $0x918] sm:$0xff]
        %v534 = vld [vmem:[%s188 + $0x920] sm:$0xff]
        %v535 = vld [vmem:[%s188 + $0x928] sm:$0xff]
        %v536 = vld [vmem:[%s188 + $0x930] sm:$0xff]
        %v537 = vld [vmem:[%s188 + $0x938] sm:$0xff]
        %v538 = vld [vmem:[%s188 + $0x940] sm:$0xff]
        %v539 = vld [vmem:[%s188 + $0x948] sm:$0xff]
        %v540 = vld [vmem:[%s188 + $0x950] sm:$0xff]
        %v541 = vld [vmem:[%s188 + $0x958] sm:$0xff]
        %v542 = vld [vmem:[%s188 + $0x960] sm:$0xff]
        %v543 = vld [vmem:[%s188 + $0x968] sm:$0xff]
        %v544 = vld [vmem:[%s188 + $0x970] sm:$0xff]
        %v545 = vld [vmem:[%s188 + $0x978] sm:$0xff]
        %v546 = vld [vmem:[%s188 + $0x980] sm:$0xff]
        %v547 = vld [vmem:[%s188 + $0x988] sm:$0xff]
        %v548 = vld [vmem:[%s188 + $0x990] sm:$0xff]
        %v549 = vld [vmem:[%s188 + $0x998] sm:$0xff]
        %v550 = vld [vmem:[%s188 + $0x9a0] sm:$0xff]
        %v551 = vld [vmem:[%s188 + $0x9a8] sm:$0xff]
        %v552 = vld [vmem:[%s188 + $0x9b0] sm:$0xff]
        %v553 = vld [vmem:[%s188 + $0x9b8] sm:$0xff]
        %v554 = vld [vmem:[%s188 + $0x9c0] sm:$0xff]
        %v555 = vld [vmem:[%s188 + $0x9c8] sm:$0xff]
        %v556 = vld [vmem:[%s188 + $0x9d0] sm:$0xff]
        %v557 = vld [vmem:[%s188 + $0x9d8] sm:$0xff]
        %v558 = vld [vmem:[%s188 + $0x9e0] sm:$0xff]
        %v559 = vld [vmem:[%s188 + $0x9e8] sm:$0xff]
        %v560 = vld [vmem:[%s188 + $0x9f0] sm:$0xff]
        %v561 = vld [vmem:[%s188 + $0x9f8] sm:$0xff]
        %v562 = vld [vmem:[%s188 + $0xa00] sm:$0xff]
        %v563 = vld [vmem:[%s188 + $0xa08] sm:$0xff]
        %v564 = vld [vmem:[%s188 + $0xa10] sm:$0xff]
        %v565 = vld [vmem:[%s188 + $0xa18] sm:$0xff]
        %v566 = vld [vmem:[%s188 + $0xa20] sm:$0xff]
        %v567 = vld [vmem:[%s188 + $0xa28] sm:$0xff]
        %v568 = vld [vmem:[%s188 + $0xa30] sm:$0xff]
        %v569 = vld [vmem:[%s188 + $0xa38] sm:$0xff]
        %v570 = vld [vmem:[%s188 + $0xa40] sm:$0xff]
        %v571 = vld [vmem:[%s188 + $0xa48] sm:$0xff]
        %v572 = vld [vmem:[%s188 + $0xa50] sm:$0xff]
        %v573 = vld [vmem:[%s188 + $0xa58] sm:$0xff]
        %v574 = vld [vmem:[%s188 + $0xa60] sm:$0xff]
        %v575 = vld [vmem:[%s188 + $0xa68] sm:$0xff]
        %v576 = vld [vmem:[%s188 + $0xa70] sm:$0xff]
        %v577 = vld [vmem:[%s188 + $0xa78] sm:$0xff]
        %v578 = vld [vmem:[%s188 + $0xa80] sm:$0xff]
        %v579 = vld [vmem:[%s188 + $0xa88] sm:$0xff]
        %v580 = vld [vmem:[%s188 + $0xa90] sm:$0xff]
        %v581 = vld [vmem:[%s188 + $0xa98] sm:$0xff]
        %v582 = vld [vmem:[%s188 + $0xaa0] sm:$0xff]
        %v583 = vld [vmem:[%s188 + $0xaa8] sm:$0xff]
        %v584 = vld [vmem:[%s188 + $0xab0] sm:$0xff]
        %v585 = vld [vmem:[%s188 + $0xab8] sm:$0xff]
        %v586 = vld [vmem:[%s188 + $0xac0] sm:$0xff]
        %v587 = vld [vmem:[%s188 + $0xac8] sm:$0xff]
        %v588 = vld [vmem:[%s188 + $0xad0] sm:$0xff]
        %v589 = vld [vmem:[%s188 + $0xad8] sm:$0xff]
        %v590 = vld [vmem:[%s188 + $0xae0] sm:$0xff]
        %v591 = vld [vmem:[%s188 + $0xae8] sm:$0xff]
        %v592 = vld [vmem:[%s188 + $0xaf0] sm:$0xff]
        %v593 = vld [vmem:[%s188 + $0xaf8] sm:$0xff]
        %v594 = vld [vmem:[%s188 + $0xb00] sm:$0xff]
        %v595 = vld [vmem:[%s188 + $0xb08] sm:$0xff]
        %v596 = vld [vmem:[%s188 + $0xb10] sm:$0xff]
        %v597 = vld [vmem:[%s188 + $0xb18] sm:$0xff]
        %v598 = vld [vmem:[%s188 + $0xb20] sm:$0xff]
        %v599 = vld [vmem:[%s188 + $0xb28] sm:$0xff]
        %v600 = vld [vmem:[%s188 + $0xb30] sm:$0xff]
        %v601 = vld [vmem:[%s188 + $0xb38] sm:$0xff]
        %v602 = vld [vmem:[%s188 + $0xb40] sm:$0xff]
        %v603 = vld [vmem:[%s188 + $0xb48] sm:$0xff]
        %v604 = vld [vmem:[%s188 + $0xb50] sm:$0xff]
        %v605 = vld [vmem:[%s188 + $0xb58] sm:$0xff]
        %v606 = vld [vmem:[%s188 + $0xb60] sm:$0xff]
        %v607 = vld [vmem:[%s188 + $0xb68] sm:$0xff]
        %v608 = vld [vmem:[%s188 + $0xb70] sm:$0xff]
        %v609 = vld [vmem:[%s188 + $0xb78] sm:$0xff]
        %v610 = vld [vmem:[%s188 + $0xb80] sm:$0xff]
        %v611 = vld [vmem:[%s188 + $0xb88] sm:$0xff]
        %v612 = vld [vmem:[%s188 + $0xb90] sm:$0xff]
        %v613 = vld [vmem:[%s188 + $0xb98] sm:$0xff]
        %v614 = vld [vmem:[%s188 + $0xba0] sm:$0xff]
        %v615 = vld [vmem:[%s188 + $0xba8] sm:$0xff]
        %v616 = vld [vmem:[%s188 + $0xbb0] sm:$0xff]
        %v617 = vld [vmem:[%s188 + $0xbb8] sm:$0xff]
        %v618 = vld [vmem:[%s188 + $0xbc0] sm:$0xff]
        %v619 = vld [vmem:[%s188 + $0xbc8] sm:$0xff]
        %v620 = vld [vmem:[%s188 + $0xbd0] sm:$0xff]
        %v621 = vld [vmem:[%s188 + $0xbd8] sm:$0xff]
        %v622 = vld [vmem:[%s188 + $0xbe0] sm:$0xff]
        %v623 = vld [vmem:[%s188 + $0xbe8] sm:$0xff]
        %v624 = vld [vmem:[%s188 + $0xbf0] sm:$0xff]
        %v625 = vld [vmem:[%s188 + $0xbf8] sm:$0xff]
        %v626 = vld [vmem:[%s188 + $0xc00] sm:$0xff]
        %v627 = vld [vmem:[%s188 + $0xc08] sm:$0xff]
        %v628 = vld [vmem:[%s188 + $0xc10] sm:$0xff]
        %v629 = vld [vmem:[%s188 + $0xc18] sm:$0xff]
        %v630 = vld [vmem:[%s188 + $0xc20] sm:$0xff]
        %v631 = vld [vmem:[%s188 + $0xc28] sm:$0xff]
        %v632 = vld [vmem:[%s188 + $0xc30] sm:$0xff]
        %v633 = vld [vmem:[%s188 + $0xc38] sm:$0xff]
        %v634 = vld [vmem:[%s188 + $0xc40] sm:$0xff]
        %v635 = vld [vmem:[%s188 + $0xc48] sm:$0xff]
        %v636 = vld [vmem:[%s188 + $0xc50] sm:$0xff]
        %v637 = vld [vmem:[%s188 + $0xc58] sm:$0xff]
        %v638 = vld [vmem:[%s188 + $0xc60] sm:$0xff]
        %v639 = vld [vmem:[%s188 + $0xc68] sm:$0xff]
        %v640 = vld [vmem:[%s188 + $0xc70] sm:$0xff]
        %v641 = vld [vmem:[%s188 + $0xc78] sm:$0xff]
        %v642 = vld [vmem:[%s188 + $0xc80] sm:$0xff]
        %v643 = vld [vmem:[%s188 + $0xc88] sm:$0xff]
        %v644 = vld [vmem:[%s188 + $0xc90] sm:$0xff]
        %v645 = vld [vmem:[%s188 + $0xc98] sm:$0xff]
        %v646 = vld [vmem:[%s188 + $0xca0] sm:$0xff]
        %v647 = vld [vmem:[%s188 + $0xca8] sm:$0xff]
        %v648 = vld [vmem:[%s188 + $0xcb0] sm:$0xff]
        %v649 = vld [vmem:[%s188 + $0xcb8] sm:$0xff]
        %v650 = vld [vmem:[%s188 + $0xcc0] sm:$0xff]
        %v651 = vld [vmem:[%s188 + $0xcc8] sm:$0xff]
        %v652 = vld [vmem:[%s188 + $0xcd0] sm:$0xff]
        %v653 = vld [vmem:[%s188 + $0xcd8] sm:$0xff]
        %v654 = vld [vmem:[%s188 + $0xce0] sm:$0xff]
        %v655 = vld [vmem:[%s188 + $0xce8] sm:$0xff]
        %v656 = vld [vmem:[%s188 + $0xcf0] sm:$0xff]
        %v657 = vld [vmem:[%s188 + $0xcf8] sm:$0xff]
        %v658 = vld [vmem:[%s188 + $0xd00] sm:$0xff]
        %v659 = vld [vmem:[%s188 + $0xd08] sm:$0xff]
        %v660 = vld [vmem:[%s188 + $0xd10] sm:$0xff]
        %v661 = vld [vmem:[%s188 + $0xd18] sm:$0xff]
        %v662 = vld [vmem:[%s188 + $0xd20] sm:$0xff]
        %v663 = vld [vmem:[%s188 + $0xd28] sm:$0xff]
        %v664 = vld [vmem:[%s188 + $0xd30] sm:$0xff]
        %v665 = vld [vmem:[%s188 + $0xd38] sm:$0xff]
        %v666 = vld [vmem:[%s188 + $0xd40] sm:$0xff]
        %v667 = vld [vmem:[%s188 + $0xd48] sm:$0xff]
        %v668 = vld [vmem:[%s188 + $0xd50] sm:$0xff]
        %v669 = vld [vmem:[%s188 + $0xd58] sm:$0xff]
        %v670 = vld [vmem:[%s188 + $0xd60] sm:$0xff]
        %v671 = vld [vmem:[%s188 + $0xd68] sm:$0xff]
        %v672 = vld [vmem:[%s188 + $0xd70] sm:$0xff]
        %v673 = vld [vmem:[%s188 + $0xd78] sm:$0xff]
        %v674 = vld [vmem:[%s188 + $0xd80] sm:$0xff]
        %v675 = vld [vmem:[%s188 + $0xd88] sm:$0xff]
        %v676 = vld [vmem:[%s188 + $0xd90] sm:$0xff]
        %v677 = vld [vmem:[%s188 + $0xd98] sm:$0xff]
        %v678 = vld [vmem:[%s188 + $0xda0] sm:$0xff]
        %v679 = vld [vmem:[%s188 + $0xda8] sm:$0xff]
        %v680 = vld [vmem:[%s188 + $0xdb0] sm:$0xff]
        %v681 = vld [vmem:[%s188 + $0xdb8] sm:$0xff]
        %v682 = vld [vmem:[%s188 + $0xdc0] sm:$0xff]
        %v683 = vld [vmem:[%s188 + $0xdc8] sm:$0xff]
        %v684 = vld [vmem:[%s188 + $0xdd0] sm:$0xff]
        %v685 = vld [vmem:[%s188 + $0xdd8] sm:$0xff]
        %v686 = vld [vmem:[%s188 + $0xde0] sm:$0xff]
        %v687 = vld [vmem:[%s188 + $0xde8] sm:$0xff]
        %v688 = vld [vmem:[%s188 + $0xdf0] sm:$0xff]
        %v689 = vld [vmem:[%s188 + $0xdf8] sm:$0xff]
        %v690 = vld [vmem:[%s198] sm:$0xf]
        %v692 = vperm.slane %v690, 0
        %v693 = vperm.slane %v690, 1
        %v694 = vperm.slane %v690, 2
        %v695 = vperm.slane %v690, 3
        %700 = vmatpush.msra.mxu0 %v302
        %701 = vmatpush.msra.mxu0 %v298
        %702 = vmatpush.msra.mxu0 %v294
        %703 = vmatpush.msra.mxu0 %v290
        %704 = vmatpush.msra.mxu0 %v286
        %705 = vmatpush.msra.mxu0 %v282
        %706 = vmatpush.msra.mxu0 %v278
        %707 = vmatpush.msra.mxu0 %v274
        %708 = vmatpush.msra.mxu0 %v270
        %709 = vmatpush.msra.mxu0 %v266
        %710 = vmatpush.msra.mxu0 %v262
        %711 = vmatpush.msra.mxu0 %v258
        %712 = vmatpush.msra.mxu0 %v254
        %713 = vmatpush.msra.mxu0 %v250
        %714 = vmatpush.msra.mxu0 %v246
        %715 = vmatpush.msra.mxu0 %v242
        %716 = vmatmul.f32.gmra.mxu0 %v235
        %v717 = vpop.f32.mrf.mxu0
        %v718 = vadd.f32 %v692, %v717
        %719 = vdwg.mxu0
        %720 = vmatpush.msra.mxu0 %v366
        %721 = vmatpush.msra.mxu0 %v362
        %722 = vmatpush.msra.mxu0 %v358
        %723 = vmatpush.msra.mxu0 %v354
        %724 = vmatpush.msra.mxu0 %v350
        %725 = vmatpush.msra.mxu0 %v346
        %726 = vmatpush.msra.mxu0 %v342
        %727 = vmatpush.msra.mxu0 %v338
        %728 = vmatpush.msra.mxu0 %v334
        %729 = vmatpush.msra.mxu0 %v330
        %730 = vmatpush.msra.mxu0 %v326
        %731 = vmatpush.msra.mxu0 %v322
        %732 = vmatpush.msra.mxu0 %v318
        %733 = vmatpush.msra.mxu0 %v314
        %734 = vmatpush.msra.mxu0 %v310
        %735 = vmatpush.msra.mxu0 %v306
        %736 = vmatmul.f32.gmra.mxu0 %v236
        %v737 = vpop.f32.mrf.mxu0
        %v738 = vadd.f32 %v718, %v737
        %739 = vdwg.mxu0
        %740 = vmatpush.msra.mxu0 %v430
        %741 = vmatpush.msra.mxu0 %v426
        %742 = vmatpush.msra.mxu0 %v422
        %743 = vmatpush.msra.mxu0 %v418
        %744 = vmatpush.msra.mxu0 %v414
        %745 = vmatpush.msra.mxu0 %v410
        %746 = vmatpush.msra.mxu0 %v406
        %747 = vmatpush.msra.mxu0 %v402
        %748 = vmatpush.msra.mxu0 %v398
        %749 = vmatpush.msra.mxu0 %v394
        %750 = vmatpush.msra.mxu0 %v390
        %751 = vmatpush.msra.mxu0 %v386
        %752 = vmatpush.msra.mxu0 %v382
        %753 = vmatpush.msra.mxu0 %v378
        %754 = vmatpush.msra.mxu0 %v374
        %755 = vmatpush.msra.mxu0 %v370
        %756 = vmatmul.f32.gmra.mxu0 %v237
        %v757 = vpop.f32.mrf.mxu0
        %v758 = vadd.f32 %v738, %v757
        %759 = vdwg.mxu0
        %760 = vmatpush.msra.mxu0 %v494
        %761 = vmatpush.msra.mxu0 %v490
        %762 = vmatpush.msra.mxu0 %v486
        %763 = vmatpush.msra.mxu0 %v482
        %764 = vmatpush.msra.mxu0 %v478
        %765 = vmatpush.msra.mxu0 %v474
        %766 = vmatpush.msra.mxu0 %v470
        %767 = vmatpush.msra.mxu0 %v466
        %768 = vmatpush.msra.mxu0 %v462
        %769 = vmatpush.msra.mxu0 %v458
        %770 = vmatpush.msra.mxu0 %v454
        %771 = vmatpush.msra.mxu0 %v450
        %772 = vmatpush.msra.mxu0 %v446
        %773 = vmatpush.msra.mxu0 %v442
        %774 = vmatpush.msra.mxu0 %v438
        %775 = vmatpush.msra.mxu0 %v434
        %776 = vmatmul.f32.gmra.mxu0 %v238
        %v777 = vpop.f32.mrf.mxu0
        %v778 = vadd.f32 %v758, %v777
        %779 = vdwg.mxu0
        %780 = vmatpush.msra.mxu0 %v558
        %781 = vmatpush.msra.mxu0 %v554
        %782 = vmatpush.msra.mxu0 %v550
        %783 = vmatpush.msra.mxu0 %v546
        %784 = vmatpush.msra.mxu0 %v542
        %785 = vmatpush.msra.mxu0 %v538
        %786 = vmatpush.msra.mxu0 %v534
        %787 = vmatpush.msra.mxu0 %v530
        %788 = vmatpush.msra.mxu0 %v526
        %789 = vmatpush.msra.mxu0 %v522
        %790 = vmatpush.msra.mxu0 %v518
        %791 = vmatpush.msra.mxu0 %v514
        %792 = vmatpush.msra.mxu0 %v510
        %793 = vmatpush.msra.mxu0 %v506
        %794 = vmatpush.msra.mxu0 %v502
        %795 = vmatpush.msra.mxu0 %v498
        %796 = vmatmul.f32.gmra.mxu0 %v239
        %v797 = vpop.f32.mrf.mxu0
        %v798 = vadd.f32 %v778, %v797
        %799 = vdwg.mxu0
        %800 = vmatpush.msra.mxu0 %v622
        %801 = vmatpush.msra.mxu0 %v618
        %802 = vmatpush.msra.mxu0 %v614
        %803 = vmatpush.msra.mxu0 %v610
        %804 = vmatpush.msra.mxu0 %v606
        %805 = vmatpush.msra.mxu0 %v602
        %806 = vmatpush.msra.mxu0 %v598
        %807 = vmatpush.msra.mxu0 %v594
        %808 = vmatpush.msra.mxu0 %v590
        %809 = vmatpush.msra.mxu0 %v586
        %810 = vmatpush.msra.mxu0 %v582
        %811 = vmatpush.msra.mxu0 %v578
        %812 = vmatpush.msra.mxu0 %v574
        %813 = vmatpush.msra.mxu0 %v570
        %814 = vmatpush.msra.mxu0 %v566
        %815 = vmatpush.msra.mxu0 %v562
        %816 = vmatmul.f32.gmra.mxu0 %v240
        %v817 = vpop.f32.mrf.mxu0
        %v818 = vadd.f32 %v798, %v817
        %819 = vdwg.mxu0
        %820 = vmatpush.msra.mxu0 %v686
        %821 = vmatpush.msra.mxu0 %v682
        %822 = vmatpush.msra.mxu0 %v678
        %823 = vmatpush.msra.mxu0 %v674
        %824 = vmatpush.msra.mxu0 %v670
        %825 = vmatpush.msra.mxu0 %v666
        %826 = vmatpush.msra.mxu0 %v662
        %827 = vmatpush.msra.mxu0 %v658
        %828 = vmatpush.msra.mxu0 %v654
        %829 = vmatpush.msra.mxu0 %v650
        %830 = vmatpush.msra.mxu0 %v646
        %831 = vmatpush.msra.mxu0 %v642
        %832 = vmatpush.msra.mxu0 %v638
        %833 = vmatpush.msra.mxu0 %v634
        %834 = vmatpush.msra.mxu0 %v630
        %835 = vmatpush.msra.mxu0 %v626
        %836 = vmatmul.f32.gmra.mxu0 %v241
        %v837 = vpop.f32.mrf.mxu0
        %v838 = vadd.f32 %v818, %v837
        %839 = vdwg.mxu0
        %840 = vmatpush.msra.mxu0 %v303
        %841 = vmatpush.msra.mxu0 %v299
        %842 = vmatpush.msra.mxu0 %v295
        %843 = vmatpush.msra.mxu0 %v291
        %844 = vmatpush.msra.mxu0 %v287
        %845 = vmatpush.msra.mxu0 %v283
        %846 = vmatpush.msra.mxu0 %v279
        %847 = vmatpush.msra.mxu0 %v275
        %848 = vmatpush.msra.mxu0 %v271
        %849 = vmatpush.msra.mxu0 %v267
        %850 = vmatpush.msra.mxu0 %v263
        %851 = vmatpush.msra.mxu0 %v259
        %852 = vmatpush.msra.mxu0 %v255
        %853 = vmatpush.msra.mxu0 %v251
        %854 = vmatpush.msra.mxu0 %v247
        %855 = vmatpush.msra.mxu0 %v243
        %856 = vmatmul.f32.gmra.mxu0 %v235
        %v857 = vpop.f32.mrf.mxu0
        %v858 = vadd.f32 %v693, %v857
        %859 = vdwg.mxu0
        %860 = vmatpush.msra.mxu0 %v367
        %861 = vmatpush.msra.mxu0 %v363
        %862 = vmatpush.msra.mxu0 %v359
        %863 = vmatpush.msra.mxu0 %v355
        %864 = vmatpush.msra.mxu0 %v351
        %865 = vmatpush.msra.mxu0 %v347
        %866 = vmatpush.msra.mxu0 %v343
        %867 = vmatpush.msra.mxu0 %v339
        %868 = vmatpush.msra.mxu0 %v335
        %869 = vmatpush.msra.mxu0 %v331
        %870 = vmatpush.msra.mxu0 %v327
        %871 = vmatpush.msra.mxu0 %v323
        %872 = vmatpush.msra.mxu0 %v319
        %873 = vmatpush.msra.mxu0 %v315
        %874 = vmatpush.msra.mxu0 %v311
        %875 = vmatpush.msra.mxu0 %v307
        %876 = vmatmul.f32.gmra.mxu0 %v236
        %v877 = vpop.f32.mrf.mxu0
        %v878 = vadd.f32 %v858, %v877
        %879 = vdwg.mxu0
        %880 = vmatpush.msra.mxu0 %v431
        %881 = vmatpush.msra.mxu0 %v427
        %882 = vmatpush.msra.mxu0 %v423
        %883 = vmatpush.msra.mxu0 %v419
        %884 = vmatpush.msra.mxu0 %v415
        %885 = vmatpush.msra.mxu0 %v411
        %886 = vmatpush.msra.mxu0 %v407
        %887 = vmatpush.msra.mxu0 %v403
        %888 = vmatpush.msra.mxu0 %v399
        %889 = vmatpush.msra.mxu0 %v395
        %890 = vmatpush.msra.mxu0 %v391
        %891 = vmatpush.msra.mxu0 %v387
        %892 = vmatpush.msra.mxu0 %v383
        %893 = vmatpush.msra.mxu0 %v379
        %894 = vmatpush.msra.mxu0 %v375
        %895 = vmatpush.msra.mxu0 %v371
        %896 = vmatmul.f32.gmra.mxu0 %v237
        %v897 = vpop.f32.mrf.mxu0
        %v898 = vadd.f32 %v878, %v897
        %899 = vdwg.mxu0
        %900 = vmatpush.msra.mxu0 %v495
        %901 = vmatpush.msra.mxu0 %v491
        %902 = vmatpush.msra.mxu0 %v487
        %903 = vmatpush.msra.mxu0 %v483
        %904 = vmatpush.msra.mxu0 %v479
        %905 = vmatpush.msra.mxu0 %v475
        %906 = vmatpush.msra.mxu0 %v471
        %907 = vmatpush.msra.mxu0 %v467
        %908 = vmatpush.msra.mxu0 %v463
        %909 = vmatpush.msra.mxu0 %v459
        %910 = vmatpush.msra.mxu0 %v455
        %911 = vmatpush.msra.mxu0 %v451
        %912 = vmatpush.msra.mxu0 %v447
        %913 = vmatpush.msra.mxu0 %v443
        %914 = vmatpush.msra.mxu0 %v439
        %915 = vmatpush.msra.mxu0 %v435
        %916 = vmatmul.f32.gmra.mxu0 %v238
        %v917 = vpop.f32.mrf.mxu0
        %v918 = vadd.f32 %v898, %v917
        %919 = vdwg.mxu0
        %920 = vmatpush.msra.mxu0 %v559
        %921 = vmatpush.msra.mxu0 %v555
        %922 = vmatpush.msra.mxu0 %v551
        %923 = vmatpush.msra.mxu0 %v547
        %924 = vmatpush.msra.mxu0 %v543
        %925 = vmatpush.msra.mxu0 %v539
        %926 = vmatpush.msra.mxu0 %v535
        %927 = vmatpush.msra.mxu0 %v531
        %928 = vmatpush.msra.mxu0 %v527
        %929 = vmatpush.msra.mxu0 %v523
        %930 = vmatpush.msra.mxu0 %v519
        %931 = vmatpush.msra.mxu0 %v515
        %932 = vmatpush.msra.mxu0 %v511
        %933 = vmatpush.msra.mxu0 %v507
        %934 = vmatpush.msra.mxu0 %v503
        %935 = vmatpush.msra.mxu0 %v499
        %936 = vmatmul.f32.gmra.mxu0 %v239
        %v937 = vpop.f32.mrf.mxu0
        %v938 = vadd.f32 %v918, %v937
        %939 = vdwg.mxu0
        %940 = vmatpush.msra.mxu0 %v623
        %941 = vmatpush.msra.mxu0 %v619
        %942 = vmatpush.msra.mxu0 %v615
        %943 = vmatpush.msra.mxu0 %v611
        %944 = vmatpush.msra.mxu0 %v607
        %945 = vmatpush.msra.mxu0 %v603
        %946 = vmatpush.msra.mxu0 %v599
        %947 = vmatpush.msra.mxu0 %v595
        %948 = vmatpush.msra.mxu0 %v591
        %949 = vmatpush.msra.mxu0 %v587
        %950 = vmatpush.msra.mxu0 %v583
        %951 = vmatpush.msra.mxu0 %v579
        %952 = vmatpush.msra.mxu0 %v575
        %953 = vmatpush.msra.mxu0 %v571
        %954 = vmatpush.msra.mxu0 %v567
        %955 = vmatpush.msra.mxu0 %v563
        %956 = vmatmul.f32.gmra.mxu0 %v240
        %v957 = vpop.f32.mrf.mxu0
        %v958 = vadd.f32 %v938, %v957
        %959 = vdwg.mxu0
        %960 = vmatpush.msra.mxu0 %v687
        %961 = vmatpush.msra.mxu0 %v683
        %962 = vmatpush.msra.mxu0 %v679
        %963 = vmatpush.msra.mxu0 %v675
        %964 = vmatpush.msra.mxu0 %v671
        %965 = vmatpush.msra.mxu0 %v667
        %966 = vmatpush.msra.mxu0 %v663
        %967 = vmatpush.msra.mxu0 %v659
        %968 = vmatpush.msra.mxu0 %v655
        %969 = vmatpush.msra.mxu0 %v651
        %970 = vmatpush.msra.mxu0 %v647
        %971 = vmatpush.msra.mxu0 %v643
        %972 = vmatpush.msra.mxu0 %v639
        %973 = vmatpush.msra.mxu0 %v635
        %974 = vmatpush.msra.mxu0 %v631
        %975 = vmatpush.msra.mxu0 %v627
        %976 = vmatmul.f32.gmra.mxu0 %v241
        %v977 = vpop.f32.mrf.mxu0
        %v978 = vadd.f32 %v958, %v977
        %979 = vdwg.mxu0
        %980 = vmatpush.msra.mxu0 %v304
        %981 = vmatpush.msra.mxu0 %v300
        %982 = vmatpush.msra.mxu0 %v296
        %983 = vmatpush.msra.mxu0 %v292
        %984 = vmatpush.msra.mxu0 %v288
        %985 = vmatpush.msra.mxu0 %v284
        %986 = vmatpush.msra.mxu0 %v280
        %987 = vmatpush.msra.mxu0 %v276
        %988 = vmatpush.msra.mxu0 %v272
        %989 = vmatpush.msra.mxu0 %v268
        %990 = vmatpush.msra.mxu0 %v264
        %991 = vmatpush.msra.mxu0 %v260
        %992 = vmatpush.msra.mxu0 %v256
        %993 = vmatpush.msra.mxu0 %v252
        %994 = vmatpush.msra.mxu0 %v248
        %995 = vmatpush.msra.mxu0 %v244
        %996 = vmatmul.f32.gmra.mxu0 %v235
        %v997 = vpop.f32.mrf.mxu0
        %v998 = vadd.f32 %v694, %v997
        %999 = vdwg.mxu0
        %1000 = vmatpush.msra.mxu0 %v368
        %1001 = vmatpush.msra.mxu0 %v364
        %1002 = vmatpush.msra.mxu0 %v360
        %1003 = vmatpush.msra.mxu0 %v356
        %1004 = vmatpush.msra.mxu0 %v352
        %1005 = vmatpush.msra.mxu0 %v348
        %1006 = vmatpush.msra.mxu0 %v344
        %1007 = vmatpush.msra.mxu0 %v340
        %1008 = vmatpush.msra.mxu0 %v336
        %1009 = vmatpush.msra.mxu0 %v332
        %1010 = vmatpush.msra.mxu0 %v328
        %1011 = vmatpush.msra.mxu0 %v324
        %1012 = vmatpush.msra.mxu0 %v320
        %1013 = vmatpush.msra.mxu0 %v316
        %1014 = vmatpush.msra.mxu0 %v312
        %1015 = vmatpush.msra.mxu0 %v308
        %1016 = vmatmul.f32.gmra.mxu0 %v236
        %v1017 = vpop.f32.mrf.mxu0
        %v1018 = vadd.f32 %v998, %v1017
        %1019 = vdwg.mxu0
        %1020 = vmatpush.msra.mxu0 %v432
        %1021 = vmatpush.msra.mxu0 %v428
        %1022 = vmatpush.msra.mxu0 %v424
        %1023 = vmatpush.msra.mxu0 %v420
        %1024 = vmatpush.msra.mxu0 %v416
        %1025 = vmatpush.msra.mxu0 %v412
        %1026 = vmatpush.msra.mxu0 %v408
        %1027 = vmatpush.msra.mxu0 %v404
        %1028 = vmatpush.msra.mxu0 %v400
        %1029 = vmatpush.msra.mxu0 %v396
        %1030 = vmatpush.msra.mxu0 %v392
        %1031 = vmatpush.msra.mxu0 %v388
        %1032 = vmatpush.msra.mxu0 %v384
        %1033 = vmatpush.msra.mxu0 %v380
        %1034 = vmatpush.msra.mxu0 %v376
        %1035 = vmatpush.msra.mxu0 %v372
        %1036 = vmatmul.f32.gmra.mxu0 %v237
        %v1037 = vpop.f32.mrf.mxu0
        %v1038 = vadd.f32 %v1018, %v1037
        %1039 = vdwg.mxu0
        %1040 = vmatpush.msra.mxu0 %v496
        %1041 = vmatpush.msra.mxu0 %v492
        %1042 = vmatpush.msra.mxu0 %v488
        %1043 = vmatpush.msra.mxu0 %v484
        %1044 = vmatpush.msra.mxu0 %v480
        %1045 = vmatpush.msra.mxu0 %v476
        %1046 = vmatpush.msra.mxu0 %v472
        %1047 = vmatpush.msra.mxu0 %v468
        %1048 = vmatpush.msra.mxu0 %v464
        %1049 = vmatpush.msra.mxu0 %v460
        %1050 = vmatpush.msra.mxu0 %v456
        %1051 = vmatpush.msra.mxu0 %v452
        %1052 = vmatpush.msra.mxu0 %v448
        %1053 = vmatpush.msra.mxu0 %v444
        %1054 = vmatpush.msra.mxu0 %v440
        %1055 = vmatpush.msra.mxu0 %v436
        %1056 = vmatmul.f32.gmra.mxu0 %v238
        %v1057 = vpop.f32.mrf.mxu0
        %v1058 = vadd.f32 %v1038, %v1057
        %1059 = vdwg.mxu0
        %1060 = vmatpush.msra.mxu0 %v560
        %1061 = vmatpush.msra.mxu0 %v556
        %1062 = vmatpush.msra.mxu0 %v552
        %1063 = vmatpush.msra.mxu0 %v548
        %1064 = vmatpush.msra.mxu0 %v544
        %1065 = vmatpush.msra.mxu0 %v540
        %1066 = vmatpush.msra.mxu0 %v536
        %1067 = vmatpush.msra.mxu0 %v532
        %1068 = vmatpush.msra.mxu0 %v528
        %1069 = vmatpush.msra.mxu0 %v524
        %1070 = vmatpush.msra.mxu0 %v520
        %1071 = vmatpush.msra.mxu0 %v516
        %1072 = vmatpush.msra.mxu0 %v512
        %1073 = vmatpush.msra.mxu0 %v508
        %1074 = vmatpush.msra.mxu0 %v504
        %1075 = vmatpush.msra.mxu0 %v500
        %1076 = vmatmul.f32.gmra.mxu0 %v239
        %v1077 = vpop.f32.mrf.mxu0
        %v1078 = vadd.f32 %v1058, %v1077
        %1079 = vdwg.mxu0
        %1080 = vmatpush.msra.mxu0 %v624
        %1081 = vmatpush.msra.mxu0 %v620
        %1082 = vmatpush.msra.mxu0 %v616
        %1083 = vmatpush.msra.mxu0 %v612
        %1084 = vmatpush.msra.mxu0 %v608
        %1085 = vmatpush.msra.mxu0 %v604
        %1086 = vmatpush.msra.mxu0 %v600
        %1087 = vmatpush.msra.mxu0 %v596
        %1088 = vmatpush.msra.mxu0 %v592
        %1089 = vmatpush.msra.mxu0 %v588
        %1090 = vmatpush.msra.mxu0 %v584
        %1091 = vmatpush.msra.mxu0 %v580
        %1092 = vmatpush.msra.mxu0 %v576
        %1093 = vmatpush.msra.mxu0 %v572
        %1094 = vmatpush.msra.mxu0 %v568
        %1095 = vmatpush.msra.mxu0 %v564
        %1096 = vmatmul.f32.gmra.mxu0 %v240
        %v1097 = vpop.f32.mrf.mxu0
        %v1098 = vadd.f32 %v1078, %v1097
        %1099 = vdwg.mxu0
        %1100 = vmatpush.msra.mxu0 %v688
        %1101 = vmatpush.msra.mxu0 %v684
        %1102 = vmatpush.msra.mxu0 %v680
        %1103 = vmatpush.msra.mxu0 %v676
        %1104 = vmatpush.msra.mxu0 %v672
        %1105 = vmatpush.msra.mxu0 %v668
        %1106 = vmatpush.msra.mxu0 %v664
        %1107 = vmatpush.msra.mxu0 %v660
        %1108 = vmatpush.msra.mxu0 %v656
        %1109 = vmatpush.msra.mxu0 %v652
        %1110 = vmatpush.msra.mxu0 %v648
        %1111 = vmatpush.msra.mxu0 %v644
        %1112 = vmatpush.msra.mxu0 %v640
        %1113 = vmatpush.msra.mxu0 %v636
        %1114 = vmatpush.msra.mxu0 %v632
        %1115 = vmatpush.msra.mxu0 %v628
        %1116 = vmatmul.f32.gmra.mxu0 %v241
        %v1117 = vpop.f32.mrf.mxu0
        %v1118 = vadd.f32 %v1098, %v1117
        %1119 = vdwg.mxu0
        %1120 = vmatpush.msra.mxu0 %v305
        %1121 = vmatpush.msra.mxu0 %v301
        %1122 = vmatpush.msra.mxu0 %v297
        %1123 = vmatpush.msra.mxu0 %v293
        %1124 = vmatpush.msra.mxu0 %v289
        %1125 = vmatpush.msra.mxu0 %v285
        %1126 = vmatpush.msra.mxu0 %v281
        %1127 = vmatpush.msra.mxu0 %v277
        %1128 = vmatpush.msra.mxu0 %v273
        %1129 = vmatpush.msra.mxu0 %v269
        %1130 = vmatpush.msra.mxu0 %v265
        %1131 = vmatpush.msra.mxu0 %v261
        %1132 = vmatpush.msra.mxu0 %v257
        %1133 = vmatpush.msra.mxu0 %v253
        %1134 = vmatpush.msra.mxu0 %v249
        %1135 = vmatpush.msra.mxu0 %v245
        %1136 = vmatmul.f32.gmra.mxu0 %v235
        %v1137 = vpop.f32.mrf.mxu0
        %v1138 = vadd.f32 %v695, %v1137
        %1139 = vdwg.mxu0
        %1140 = vmatpush.msra.mxu0 %v369
        %1141 = vmatpush.msra.mxu0 %v365
        %1142 = vmatpush.msra.mxu0 %v361
        %1143 = vmatpush.msra.mxu0 %v357
        %1144 = vmatpush.msra.mxu0 %v353
        %1145 = vmatpush.msra.mxu0 %v349
        %1146 = vmatpush.msra.mxu0 %v345
        %1147 = vmatpush.msra.mxu0 %v341
        %1148 = vmatpush.msra.mxu0 %v337
        %1149 = vmatpush.msra.mxu0 %v333
        %1150 = vmatpush.msra.mxu0 %v329
        %1151 = vmatpush.msra.mxu0 %v325
        %1152 = vmatpush.msra.mxu0 %v321
        %1153 = vmatpush.msra.mxu0 %v317
        %1154 = vmatpush.msra.mxu0 %v313
        %1155 = vmatpush.msra.mxu0 %v309
        %1156 = vmatmul.f32.gmra.mxu0 %v236
        %v1157 = vpop.f32.mrf.mxu0
        %v1158 = vadd.f32 %v1138, %v1157
        %1159 = vdwg.mxu0
        %1160 = vmatpush.msra.mxu0 %v433
        %1161 = vmatpush.msra.mxu0 %v429
        %1162 = vmatpush.msra.mxu0 %v425
        %1163 = vmatpush.msra.mxu0 %v421
        %1164 = vmatpush.msra.mxu0 %v417
        %1165 = vmatpush.msra.mxu0 %v413
        %1166 = vmatpush.msra.mxu0 %v409
        %1167 = vmatpush.msra.mxu0 %v405
        %1168 = vmatpush.msra.mxu0 %v401
        %1169 = vmatpush.msra.mxu0 %v397
        %1170 = vmatpush.msra.mxu0 %v393
        %1171 = vmatpush.msra.mxu0 %v389
        %1172 = vmatpush.msra.mxu0 %v385
        %1173 = vmatpush.msra.mxu0 %v381
        %1174 = vmatpush.msra.mxu0 %v377
        %1175 = vmatpush.msra.mxu0 %v373
        %1176 = vmatmul.f32.gmra.mxu0 %v237
        %v1177 = vpop.f32.mrf.mxu0
        %v1178 = vadd.f32 %v1158, %v1177
        %1179 = vdwg.mxu0
        %1180 = vmatpush.msra.mxu0 %v497
        %1181 = vmatpush.msra.mxu0 %v493
        %1182 = vmatpush.msra.mxu0 %v489
        %1183 = vmatpush.msra.mxu0 %v485
        %1184 = vmatpush.msra.mxu0 %v481
        %1185 = vmatpush.msra.mxu0 %v477
        %1186 = vmatpush.msra.mxu0 %v473
        %1187 = vmatpush.msra.mxu0 %v469
        %1188 = vmatpush.msra.mxu0 %v465
        %1189 = vmatpush.msra.mxu0 %v461
        %1190 = vmatpush.msra.mxu0 %v457
        %1191 = vmatpush.msra.mxu0 %v453
        %1192 = vmatpush.msra.mxu0 %v449
        %1193 = vmatpush.msra.mxu0 %v445
        %1194 = vmatpush.msra.mxu0 %v441
        %1195 = vmatpush.msra.mxu0 %v437
        %1196 = vmatmul.f32.gmra.mxu0 %v238
        %v1197 = vpop.f32.mrf.mxu0
        %v1198 = vadd.f32 %v1178, %v1197
        %1199 = vdwg.mxu0
        %1200 = vmatpush.msra.mxu0 %v561
        %1201 = vmatpush.msra.mxu0 %v557
        %1202 = vmatpush.msra.mxu0 %v553
        %1203 = vmatpush.msra.mxu0 %v549
        %1204 = vmatpush.msra.mxu0 %v545
        %1205 = vmatpush.msra.mxu0 %v541
        %1206 = vmatpush.msra.mxu0 %v537
        %1207 = vmatpush.msra.mxu0 %v533
        %1208 = vmatpush.msra.mxu0 %v529
        %1209 = vmatpush.msra.mxu0 %v525
        %1210 = vmatpush.msra.mxu0 %v521
        %1211 = vmatpush.msra.mxu0 %v517
        %1212 = vmatpush.msra.mxu0 %v513
        %1213 = vmatpush.msra.mxu0 %v509
        %1214 = vmatpush.msra.mxu0 %v505
        %1215 = vmatpush.msra.mxu0 %v501
        %1216 = vmatmul.f32.gmra.mxu0 %v239
        %v1217 = vpop.f32.mrf.mxu0
        %v1218 = vadd.f32 %v1198, %v1217
        %1219 = vdwg.mxu0
        %1220 = vmatpush.msra.mxu0 %v625
        %1221 = vmatpush.msra.mxu0 %v621
        %1222 = vmatpush.msra.mxu0 %v617
        %1223 = vmatpush.msra.mxu0 %v613
        %1224 = vmatpush.msra.mxu0 %v609
        %1225 = vmatpush.msra.mxu0 %v605
        %1226 = vmatpush.msra.mxu0 %v601
        %1227 = vmatpush.msra.mxu0 %v597
        %1228 = vmatpush.msra.mxu0 %v593
        %1229 = vmatpush.msra.mxu0 %v589
        %1230 = vmatpush.msra.mxu0 %v585
        %1231 = vmatpush.msra.mxu0 %v581
        %1232 = vmatpush.msra.mxu0 %v577
        %1233 = vmatpush.msra.mxu0 %v573
        %1234 = vmatpush.msra.mxu0 %v569
        %1235 = vmatpush.msra.mxu0 %v565
        %1236 = vmatmul.f32.gmra.mxu0 %v240
        %v1237 = vpop.f32.mrf.mxu0
        %v1238 = vadd.f32 %v1218, %v1237
        %1239 = vdwg.mxu0
        %1240 = vmatpush.msra.mxu0 %v689
        %1241 = vmatpush.msra.mxu0 %v685
        %1242 = vmatpush.msra.mxu0 %v681
        %1243 = vmatpush.msra.mxu0 %v677
        %1244 = vmatpush.msra.mxu0 %v673
        %1245 = vmatpush.msra.mxu0 %v669
        %1246 = vmatpush.msra.mxu0 %v665
        %1247 = vmatpush.msra.mxu0 %v661
        %1248 = vmatpush.msra.mxu0 %v657
        %1249 = vmatpush.msra.mxu0 %v653
        %1250 = vmatpush.msra.mxu0 %v649
        %1251 = vmatpush.msra.mxu0 %v645
        %1252 = vmatpush.msra.mxu0 %v641
        %1253 = vmatpush.msra.mxu0 %v637
        %1254 = vmatpush.msra.mxu0 %v633
        %1255 = vmatpush.msra.mxu0 %v629
        %1256 = vmatmul.f32.gmra.mxu0 %v241
        %v1257 = vpop.f32.mrf.mxu0
        %v1258 = vadd.f32 %v1238, %v1257
        %1259 = vdwg.mxu0
        %v1260 = vmax.f32 %v838, 0.0
        %v1261 = vmax.f32 %v978, 0.0
        %v1262 = vmax.f32 %v1118, 0.0
        %v1263 = vmax.f32 %v1258, 0.0
        %1264 = vst [vmem:[%s233] sm:$0xff] %v1260
        %1265 = vst [vmem:[%s233 + $0x8] sm:$0xff] %v1261
        %1266 = vst [vmem:[%s233 + $0x10] sm:$0xff] %v1262
        %1267 = vst [vmem:[%s233 + $0x18] sm:$0xff] %v1263
        %s1268 = smul.u32 4, %s20
        %p1269 = scmp.lt.s32.totalorder %s1268, 15
        %s1270 = scalar_select %p1269, %s1268, 15
        %s1271 = smul.addr %s1270, 8
        %s1272 = scalar_lea.vmem %s3, %s1271
        // Predicated region
        $region41: #{net_forward.3} parent=31 // pred_check
          %p1273 = pneg %p111
        $region42: #{net_forward.3} parent=31 // pred_check_branch
          %1275 = sbr.rel (%p1273) target = $region44
        $region43: #{net_forward.3} parent=31 // pred_region
          %s1276 = smul.u32 4, %s20
        $region44: #{net_forward.3} parent=31 // pred_fallthru
          _
      $region32: #{net_forward.3} parent=5 // pred_fallthru
        _
      %p1277 = scmp.le.s32.totalorder 2, %s15
      // Predicated region
      $region45: #{net_forward.3} parent=5 // pred_check
        %p1278 = pneg %p1277
      $region46: #{net_forward.3} parent=5 // pred_check_branch
        %1280 = sbr.rel (%p1278) target = $region48
      $region47: #{net_forward.3} parent=5 // pred_region
        %s1281 = ssub.s32 %s15, 2
        // Predicated region
        $region49: #{net_forward.3} parent=47 // pred_check
          %p1282 = pneg %p117
        $region50: #{net_forward.3} parent=47 // pred_check_branch
          %1284 = sbr.rel (%p1282) target = $region52
        $region51: #{net_forward.3} parent=47 // pred_region
          %s1285 = smul.u32 4, %s21
          %p1286 = scmp.lt.s32.totalorder %s1285, 15
          %s1287 = scalar_select %p1286, %s1285, 15
          %s1288 = smul.addr %s1287, 8
          %s1289 = scalar_lea.vmem %s3, %s1288
        $region52: #{net_forward.3} parent=47 // pred_fallthru
          _
      $region48: #{net_forward.3} parent=5 // pred_fallthru
        _
    $region6: #{net_forward.3} parent=1 // loop_footer
      %s19 = sadd.s32 1, %s15
    $region7: #{net_forward.3} parent=1 // loop_footer_branch
      %14 = sbr.rel target = $region3
    $region8: #{net_forward.3} parent=1 // loop_exit
      _
    %1290 = vsyncpa [#allocation3], 1
    %s1291 = scalar_lea.sflag [#allocation3], 1
    %1292 = vsyncpa %s1291, 1
    %1293 = vsyncpa [#allocation5], 1
    %s1294 = scalar_lea.sflag [#allocation5], 1
    %1295 = vsyncpa %s1294, 1

// kernel: net_forward.4
$region0: #{net_forward.4}
  #allocation0 [shape = 'u32[]', space=smem, size = 0x4, offset = 0x4, fixed_abs, tag = 'smem constant byte address 0x4 - core index']
  #allocation1 [shape = 'u32[72,128]{1,0:T(1,128)}', space=vmem, size = 0x9000, scoped, tag = 'internal scratch']
  #allocation2 [shape = 'f32[8,2048]{1,0:T(8,128)}', space=vmem, size = 0x10000, scoped, tag = 'scratch operand']
  #allocation3 [shape = 'f32[4,8,512]{2,1,0:T(8,128)}', space=vmem, size = 0x10000, scoped, tag = 'scratch operand']
  %s0 = inlined_call_operand.vmem [shape: f32[8,2048], index: 0, kind: input, shape index: {}]
  %s1 = inlined_call_operand.hbm [shape: f32[5,2048,2048], index: 1, kind: input, shape index: {}]
  %s2 = inlined_call_operand.hbm [shape: f32[5,1,2048], index: 2, kind: input, shape index: {}]
  %s3 = inlined_call_operand.vmem [shape: f32[8,2048], index: 3, kind: output, shape index: {}]
  %s4 = sld [smem:[#allocation0]]
  $region65: #{net_forward.4} parent=0
    _
  %s6 = ssub.s32 1, %s4
  %s7 = scalar_select 0, %s6, %s4
  $region1: #{net_forward.4} parent=0
    #allocation4 [shape = 'u8[8388608]{0}', space=vmem, size = 0x800000, scoped, tag = 'input window, operand 1']
    #allocation5 [shape = 's32[2]{0}', space=sflag, size = 0x8, scoped, tag = 'scoped memory for net_forward.4']
    #allocation6 [shape = 'u8[4096]{0}', space=vmem, size = 0x1000, scoped, tag = 'input window, operand 2']
    #allocation7 [shape = 's32[2]{0}', space=sflag, size = 0x8, scoped, tag = 'scoped memory for net_forward.4']
    %8 = vsyncpa [#allocation5], 0
    %s9 = scalar_lea.sflag [#allocation5], 1
    %10 = vsyncpa %s9, 0
    %11 = vsyncpa [#allocation7], 0
    %s12 = scalar_lea.sflag [#allocation7], 1
    %13 = vsyncpa %s12, 0
    loop: start=0, step=1, limit=22
    $region2: #{net_forward.4} parent=1 // loop_pre_header
      _
    $region3: #{net_forward.4} parent=1 // loop_header
      %s15 = sphi 0, %s19
      %p16 = scmp.ge.s32.totalorder %s15, 22
      %s22 = sphi 0, %s34
      %s23 = sphi 0, %s30
      %s24 = sphi 0, %s22
      %s25 = sphi 0, %s23
      %s26 = sphi 0, %s24
      %s27 = sphi 0, %s25
      %s35 = sphi 0, %s35
      %s37 = sphi 0, %s35
      %s38 = sphi 0, %s37
      %s52 = sphi 0, %s38
      %s60 = sphi 0, %s62
      %s63 = sphi 0, %s60
      %s64 = sphi 0, %s63
      %s80 = sphi 0, %s64
      %s88 = sphi 0, %s90
      %s91 = sphi 0, %s88
      %s92 = sphi 0, %s91
      %s108 = sphi 0, %s92
      %s112 = sphi 0, %s112
      %s114 = sphi 0, %s112
      %s115 = sphi 0, %s114
      %s129 = sphi 0, %s115
    $region4: #{net_forward.4} parent=1 // loop_header_branch
      %18 = sbr.rel (%p16) target = $region8
    $region5: #{net_forward.4} parent=1 // loop_body
      %s20 = ssub.s32 %s15, 1
      %s21 = ssub.s32 %s15, 2
      %s28 = sadd.s32 1, %s23
      %p29 = scmp.ge.s32.totalorder %s28, 4
      %s30 = scalar_select %p29, 0, %s28
      %s31 = sadd.s32 1, %s22
      %s32 = scalar_select %p29, %s31, %s22
      %p33 = scmp.ge.s32.totalorder %s32, 5
      %s34 = scalar_select %p33, 0, %s32
      %s36 = sadd.s32 %s35, 1
      %p39 = scmp.eq.s32.totalorder %s15, 19
      %p40 = scmp.ne.s32.totalorder %s35, %s37
      %p41 = scmp.eq.s32.totalorder %s15, 0
      %p42 = por %p40, %p41
      %p43 = scmp.ne.s32.totalorder %s35, %s37
      %p44 = scmp.eq.s32.totalorder %s20, 19
      %p45 = por %p43, %p44
      %p46 = scmp.ne.s32.totalorder %s37, %s38
      %p47 = scmp.eq.s32.totalorder %s20, 0
      %p48 = por %p46, %p47
      %p49 = scmp.ne.s32.totalorder %s37, %s38
      %p50 = scmp.eq.s32.totalorder %s21, 19
      %p51 = por %p49, %p50
      %p53 = scmp.ne.s32.totalorder %s38, %s52
      %p54 = scmp.eq.s32.totalorder %s21, 0
      %p55 = por %p53, %p54
      %s56 = ssub.s32 %s22, %s34
      %s57 = ssub.s32 %s23, %s30
      %s58 = sor.u32 %s56, %s57
      %p59 = scmp.eq.s32.totalorder %s58, 0
      %s61 = sadd.s32 %s60, 1
      %s62 = scalar_select %p59, %s60, %s61
      %p65 = pneg %p59
      %p66 = scmp.eq.s32.totalorder %s15, 19
      %p67 = por %p65, %p66
      %p68 = scmp.ne.s32.totalorder %s60, %s63
      %p69 = scmp.eq.s32.totalorder %s15, 0
      %p70 = por %p68, %p69
      %p71 = scmp.ne.s32.totalorder %s60, %s63
      %p72 = scmp.eq.s32.totalorder %s20, 19
      %p73 = por %p71, %p72
      %p74 = scmp.ne.s32.totalorder %s63, %s64
      %p75 = scmp.eq.s32.totalorder %s20, 0
      %p76 = por %p74, %p75
      %p77 = scmp.ne.s32.totalorder %s63, %s64
      %p78 = scmp.eq.s32.totalorder %s21, 19
      %p79 = por %p77, %p78
      %p81 = scmp.ne.s32.totalorder %s64, %s80
      %p82 = scmp.eq.s32.totalorder %s21, 0
      %p83 = por %p81, %p82
      %s84 = ssub.s32 %s22, %s34
      %s85 = ssub.s32 %s23, %s30
      %s86 = sor.u32 %s84, %s85
      %p87 = scmp.eq.s32.totalorder %s86, 0
      %s89 = sadd.s32 %s88, 1
      %s90 = scalar_select %p87, %s88, %s89
      %p93 = pneg %p87
      %p94 = scmp.eq.s32.totalorder %s15, 19
      %p95 = por %p93, %p94
      %p96 = scmp.ne.s32.totalorder %s88, %s91
      %p97 = scmp.eq.s32.totalorder %s15, 0
      %p98 = por %p96, %p97
      %p99 = scmp.ne.s32.totalorder %s88, %s91
      %p100 = scmp.eq.s32.totalorder %s20, 19
      %p101 = por %p99, %p100
      %p102 = scmp.ne.s32.totalorder %s91, %s92
      %p103 = scmp.eq.s32.totalorder %s20, 0
      %p104 = por %p102, %p103
      %p105 = scmp.ne.s32.totalorder %s91, %s92
      %p106 = scmp.eq.s32.totalorder %s21, 19
      %p107 = por %p105, %p106
      %p109 = scmp.ne.s32.totalorder %s92, %s108
      %p110 = scmp.eq.s32.totalorder %s21, 0
      %p111 = por %p109, %p110
      %s113 = sadd.s32 %s112, 1
      %p116 = scmp.eq.s32.totalorder %s15, 19
      %p117 = scmp.ne.s32.totalorder %s112, %s114
      %p118 = scmp.eq.s32.totalorder %s15, 0
      %p119 = por %p117, %p118
      %p120 = scmp.ne.s32.totalorder %s112, %s114
      %p121 = scmp.eq.s32.totalorder %s20, 19
      %p122 = por %p120, %p121
      %p123 = scmp.ne.s32.totalorder %s114, %s115
      %p124 = scmp.eq.s32.totalorder %s20, 0
      %p125 = por %p123, %p124
      %p126 = scmp.ne.s32.totalorder %s114, %s115
      %p127 = scmp.eq.s32.totalorder %s21, 19
      %p128 = por %p126, %p127
      %p130 = scmp.ne.s32.totalorder %s115, %s129
      %p131 = scmp.eq.s32.totalorder %s21, 0
      %p132 = por %p130, %p131
      %p133 = scmp.le.s32.totalorder 1, %s15
      %p134 = scmp.lt.s32.totalorder %s15, 21
      %p135 = pnand %p133, %p134
      %p136 = pneg %p135
      // Predicated region
      $region9: #{net_forward.4} parent=5 // pred_check
        _
      $region10: #{net_forward.4} parent=5 // pred_check_branch
        %138 = sbr.rel (%p135) target = $region12
      $region11: #{net_forward.4} parent=5 // pred_region
        %s139 = ssub.s32 %s15, 1
        // Predicated region
        $region13: #{net_forward.4} parent=11 // pred_check
          %p140 = pneg %p48
        $region14: #{net_forward.4} parent=11 // pred_check_branch
          %142 = sbr.rel (%p140) target = $region16
        $region15: #{net_forward.4} parent=11 // pred_region
          _
        $region16: #{net_forward.4} parent=11 // pred_fallthru
          _
      $region12: #{net_forward.4} parent=5 // pred_fallthru
        _
      %p143 = scmp.lt.s32.totalorder %s15, 20
      // Predicated region
      $region17: #{net_forward.4} parent=5 // pred_check
        %p144 = pneg %p143
      $region18: #{net_forward.4} parent=5 // pred_check_branch
        %146 = sbr.rel (%p144) target = $region20
      $region19: #{net_forward.4} parent=5 // pred_region
        // Predicated region
        $region21: #{net_forward.4} parent=19 // pred_check
          %p147 = pneg %p70
        $region22: #{net_forward.4} parent=19 // pred_check_branch
          %149 = sbr.rel (%p147) target = $region24
        $region23: #{net_forward.4} parent=19 // pred_region
          %s150 = sand.u32 %s60, 1
          %s151 = scalar_lea.sflag [#allocation5], %s150
          %s152 = sand.u32 %s60, 1
          %s153 = smul.addr %s152, 8192
          %s154 = scalar_lea.vmem [#allocation4], %s153
          %s155 = smul.u32 4, %s23
          %157 = vsyncadd %s151, 0
          %s158 = smul.addr %s22, 4096
          %s159 = sadd.s32 %s155, %s158
          %s160 = smul.addr %s159, 8
          %s161 = scalar_lea.hbm %s1, %s160
          %s162 = sshll.u32 %s161, 4
          %s163 = int_to_ptr.hbm [resolvable:$true] %s162
          %s164 = sshll.u32 %s154, 4
          %s165 = int_to_ptr.vmem [resolvable:$true] %s164
          %170 = dma.hbm_to_vmem [thread:$0]  %s163, 131072, %s165, %s151, 2048, 512, 32
        $region24: #{net_forward.4} parent=19 // pred_fallthru
          _
        // Predicated region
        $region25: #{net_forward.4} parent=19 // pred_check
          %p171 = pneg %p98
        $region26: #{net_forward.4} parent=19 // pred_check_branch
          %173 = sbr.rel (%p171) target = $region28
        $region27: #{net_forward.4} parent=19 // pred_region
          %s174 = sand.u32 %s88, 1
          %s175 = scalar_lea.sflag [#allocation7], %s174
          %s176 = sand.u32 %s88, 1
          %s177 = smul.addr %s176, 4
          %s178 = scalar_lea.vmem [#allocation6], %s177
          %s179 = smul.u32 4, %s23
          %181 = vsyncadd %s175, 0
          %s182 = smul.addr %s22, 16
          %s183 = sadd.s32 %s179, %s182
          %s184 = scalar_lea.hbm %s2, %s183
          %s186 = sshll.u32 %s184, 4
          %s187 = int_to_ptr.hbm [resolvable:$true] %s186
          %s188 = sshll.u32 %s178, 4
          %s189 = int_to_ptr.vmem [resolvable:$true] %s188
          %191 = dma.hbm_to_vmem [thread:$0]  %s187, 64, %s189, %s175
        $region28: #{net_forward.4} parent=19 // pred_fallthru
          _
      $region20: #{net_forward.4} parent=5 // pred_fallthru
        _
      %p192 = scmp.le.s32.totalorder 1, %s15
      %p193 = scmp.lt.s32.totalorder %s15, 21
      %p194 = pnand %p192, %p193
      %p195 = pneg %p194
      // Predicated region
      $region29: #{net_forward.4} parent=5 // pred_check
        _
      $region30: #{net_forward.4} parent=5 // pred_check_branch
        %197 = sbr.rel (%p194) target = $region32
      $region31: #{net_forward.4} parent=5 // pred_region
        %s198 = ssub.s32 %s15, 1
        %s199 = sand.u32 %s63, 1
        %s200 = scalar_lea.sflag [#allocation5], %s199
        %s201 = sand.u32 %s63, 1
        %s202 = smul.addr %s201, 8192
        %s203 = scalar_lea.vmem [#allocation4], %s202
        // Predicated region
        $region33: #{net_forward.4} parent=31 // pred_check
          %p204 = pneg %p76
        $region34: #{net_forward.4} parent=31 // pred_check_branch
          %206 = sbr.rel (%p204) target = $region36
        $region35: #{net_forward.4} parent=31 // pred_region
          %208 = dma.done %s200, 131072
        $region36: #{net_forward.4} parent=31 // pred_fallthru
          _
        %s209 = sand.u32 %s91, 1
        %s210 = scalar_lea.sflag [#allocation7], %s209
        %s211 = sand.u32 %s91, 1
        %s212 = smul.addr %s211, 4
        %s213 = scalar_lea.vmem [#allocation6], %s212
        // Predicated region
        $region37: #{net_forward.4} parent=31 // pred_check
          %p214 = pneg %p104
        $region38: #{net_forward.4} parent=31 // pred_check_branch
          %216 = sbr.rel (%p214) target = $region40
        $region39: #{net_forward.4} parent=31 // pred_region
          %218 = dma.done %s210, 64
        $region40: #{net_forward.4} parent=31 // pred_fallthru
          _
        %p219 = pneg %p48
        %p220 = pneg %p45
        %s221 = sand.u32 %s63, 1
        %s222 = scalar_lea.sflag [#allocation5], %s221
        %s223 = sand.u32 %s63, 1
        %s224 = smul.addr %s223, 8192
        %s225 = scalar_lea.vmem [#allocation4], %s224
        %p226 = pneg %p76
        %p227 = pneg %p73
        %s228 = sand.u32 %s91, 1
        %s229 = scalar_lea.sflag [#allocation7], %s228
        %s230 = sand.u32 %s91, 1
        %s231 = smul.addr %s230, 4
        %s232 = scalar_lea.vmem [#allocation6], %s231
        %p233 = pneg %p104
        %p234 = pneg %p101
        %p235 = pneg %p125
        %p236 = pneg %p122
        %s237 = smul.u32 4, %s25
        %s238 = smul.u32 4, %s25
        %p239 = scmp.eq.s32.totalorder %s24, 0
        %p240 = scmp.eq.s32.totalorder %s25, 0
        %p241 = pnand %p239, %p240
        %p242 = pneg %p241
        // Predicated region
        $region41: #{net_forward.4} parent=31 // pred_check
          _
        $region42: #{net_forward.4} parent=31 // pred_check_branch
          %244 = sbr.rel (%p241) target = $region44
        $region43: #{net_forward.4} parent=31 // pred_region
          %v245 = vld [vmem:[%s0] sm:$0xff]
          %v246 = vld [vmem:[%s0 + $0x8] sm:$0xff]
          %v247 = vld [vmem:[%s0 + $0x10] sm:$0xff]
          %v248 = vld [vmem:[%s0 + $0x18] sm:$0xff]
          %v249 = vld [vmem:[%s0 + $0x20] sm:$0xff]
          %v250 = vld [vmem:[%s0 + $0x28] sm:$0xff]
          %v251 = vld [vmem:[%s0 + $0x30] sm:$0xff]
          %v252 = vld [vmem:[%s0 + $0x38] sm:$0xff]
          %v253 = vld [vmem:[%s0 + $0x40] sm:$0xff]
          %v254 = vld [vmem:[%s0 + $0x48] sm:$0xff]
          %v255 = vld [vmem:[%s0 + $0x50] sm:$0xff]
          %v256 = vld [vmem:[%s0 + $0x58] sm:$0xff]
          %v257 = vld [vmem:[%s0 + $0x60] sm:$0xff]
          %v258 = vld [vmem:[%s0 + $0x68] sm:$0xff]
          %v259 = vld [vmem:[%s0 + $0x70] sm:$0xff]
          %v260 = vld [vmem:[%s0 + $0x78] sm:$0xff]
          %261 = vst [vmem:[#allocation2] sm:$0xff] %v245
          %262 = vst [vmem:[#allocation2 + $0x8] sm:$0xff] %v246
          %263 = vst [vmem:[#allocation2 + $0x10] sm:$0xff] %v247
          %264 = vst [vmem:[#allocation2 + $0x18] sm:$0xff] %v248
          %265 = vst [vmem:[#allocation2 + $0x20] sm:$0xff] %v249
          %266 = vst [vmem:[#allocation2 + $0x28] sm:$0xff] %v250
          %267 = vst [vmem:[#allocation2 + $0x30] sm:$0xff] %v251
          %268 = vst [vmem:[#allocation2 + $0x38] sm:$0xff] %v252
          %269 = vst [vmem:[#allocation2 + $0x40] sm:$0xff] %v253
          %270 = vst [vmem:[#allocation2 + $0x48] sm:$0xff] %v254
          %271 = vst [vmem:[#allocation2 + $0x50] sm:$0xff] %v255
          %272 = vst [vmem:[#allocation2 + $0x58] sm:$0xff] %v256
          %273 = vst [vmem:[#allocation2 + $0x60] sm:$0xff] %v257
          %274 = vst [vmem:[#allocation2 + $0x68] sm:$0xff] %v258
          %275 = vst [vmem:[#allocation2 + $0x70] sm:$0xff] %v259
          %276 = vst [vmem:[#allocation2 + $0x78] sm:$0xff] %v260
        $region44: #{net_forward.4} parent=31 // pred_fallthru
          _
        %v277 = vld [vmem:[#allocation2] sm:$0xff]
        %v278 = vld [vmem:[#allocation2 + $0x8] sm:$0xff]
        %v279 = vld [vmem:[#allocation2 + $0x10] sm:$0xff]
        %v280 = vld [vmem:[#allocation2 + $0x18] sm:$0xff]
        %v281 = vld [vmem:[#allocation2 + $0x20] sm:$0xff]
        %v282 = vld [vmem:[#allocation2 + $0x28] sm:$0xff]
        %v283 = vld [vmem:[#allocation2 + $0x30] sm:$0xff]
        %v284 = vld [vmem:[#allocation2 + $0x38] sm:$0xff]
        %v285 = vld [vmem:[#allocation2 + $0x40] sm:$0xff]
        %v286 = vld [vmem:[#allocation2 + $0x48] sm:$0xff]
        %v287 = vld [vmem:[#allocation2 + $0x50] sm:$0xff]
        %v288 = vld [vmem:[#allocation2 + $0x58] sm:$0xff]
        %v289 = vld [vmem:[#allocation2 + $0x60] sm:$0xff]
        %v290 = vld [vmem:[#allocation2 + $0x68] sm:$0xff]
        %v291 = vld [vmem:[#allocation2 + $0x70] sm:$0xff]
        %v292 = vld [vmem:[#allocation2 + $0x78] sm:$0xff]
        %v293 = vld [vmem:[%s203] sm:$0xff]
        %v294 = vld [vmem:[%s203 + $0x8] sm:$0xff]
        %v295 = vld [vmem:[%s203 + $0x10] sm:$0xff]
        %v296 = vld [vmem:[%s203 + $0x18] sm:$0xff]
        %v297 = vld [vmem:[%s203 + $0x20] sm:$0xff]
        %v298 = vld [vmem:[%s203 + $0x28] sm:$0xff]
        %v299 = vld [vmem:[%s203 + $0x30] sm:$0xff]
        %v300 = vld [vmem:[%s203 + $0x38] sm:$0xff]
        %v301 = vld [vmem:[%s203 + $0x40] sm:$0xff]
        %v302 = vld [vmem:[%s203 + $0x48] sm:$0xff]
        %v303 = vld [vmem:[%s203 + $0x50] sm:$0xff]
        %v304 = vld [vmem:[%s203 + $0x58] sm:$0xff]
        %v305 = vld [vmem:[%s203 + $0x60] sm:$0xff]
        %v306 = vld [vmem:[%s203 + $0x68] sm:$0xff]
        %v307 = vld [vmem:[%s203 + $0x70] sm:$0xff]
        %v308 = vld [vmem:[%s203 + $0x78] sm:$0xff]
        %v309 = vld [vmem:[%s203 + $0x80] sm:$0xff]
        %v310 = vld [vmem:[%s203 + $0x88] sm:$0xff]
        %v311 = vld [vmem:[%s203 + $0x90] sm:$0xff]
        %v312 = vld [vmem:[%s203 + $0x98] sm:$0xff]
        %v313 = vld [vmem:[%s203 + $0xa0] sm:$0xff]
        %v314 = vld [vmem:[%s203 + $0xa8] sm:$0xff]
        %v315 = vld [vmem:[%s203 + $0xb0] sm:$0xff]
        %v316 = vld [vmem:[%s203 + $0xb8] sm:$0xff]
        %v317 = vld [vmem:[%s203 + $0xc0] sm:$0xff]
        %v318 = vld [vmem:[%s203 + $0xc8] sm:$0xff]
        %v319 = vld [vmem:[%s203 + $0xd0] sm:$0xff]
        %v320 = vld [vmem:[%s203 + $0xd8] sm:$0xff]
        %v321 = vld [vmem:[%s203 + $0xe0] sm:$0xff]
        %v322 = vld [vmem:[%s203 + $0xe8] sm:$0xff]
        %v323 = vld [vmem:[%s203 + $0xf0] sm:$0xff]
        %v324 = vld [vmem:[%s203 + $0xf8] sm:$0xff]
        %v325 = vld [vmem:[%s203 + $0x100] sm:$0xff]
        %v326 = vld [vmem:[%s203 + $0x108] sm:$0xff]
        %v327 = vld [vmem:[%s203 + $0x110] sm:$0xff]
        %v328 = vld [vmem:[%s203 + $0x118] sm:$0xff]
        %v329 = vld [vmem:[%s203 + $0x120] sm:$0xff]
        %v330 = vld [vmem:[%s203 + $0x128] sm:$0xff]
        %v331 = vld [vmem:[%s203 + $0x130] sm:$0xff]
        %v332 = vld [vmem:[%s203 + $0x138] sm:$0xff]
        %v333 = vld [vmem:[%s203 + $0x140] sm:$0xff]
        %v334 = vld [vmem:[%s203 + $0x148] sm:$0xff]
        %v335 = vld [vmem:[%s203 + $0x150] sm:$0xff]
        %v336 = vld [vmem:[%s203 + $0x158] sm:$0xff]
        %v337 = vld [vmem:[%s203 + $0x160] sm:$0xff]
        %v338 = vld [vmem:[%s203 + $0x168] sm:$0xff]
        %v339 = vld [vmem:[%s203 + $0x170] sm:$0xff]
        %v340 = vld [vmem:[%s203 + $0x178] sm:$0xff]
        %v341 = vld [vmem:[%s203 + $0x180] sm:$0xff]
        %v342 = vld [vmem:[%s203 + $0x188] sm:$0xff]
        %v343 = vld [vmem:[%s203 + $0x190] sm:$0xff]
        %v344 = vld [vmem:[%s203 + $0x198] sm:$0xff]
        %v345 = vld [vmem:[%s203 + $0x1a0] sm:$0xff]
        %v346 = vld [vmem:[%s203 + $0x1a8] sm:$0xff]
        %v347 = vld [vmem:[%s203 + $0x1b0] sm:$0xff]
        %v348 = vld [vmem:[%s203 + $0x1b8] sm:$0xff]
        %v349 = vld [vmem:[%s203 + $0x1c0] sm:$0xff]
        %v350 = vld [vmem:[%s203 + $0x1c8] sm:$0xff]
        %v351 = vld [vmem:[%s203 + $0x1d0] sm:$0xff]
        %v352 = vld [vmem:[%s203 + $0x1d8] sm:$0xff]
        %v353 = vld [vmem:[%s203 + $0x1e0] sm:$0xff]
        %v354 = vld [vmem:[%s203 + $0x1e8] sm:$0xff]
        %v355 = vld [vmem:[%s203 + $0x1f0] sm:$0xff]
        %v356 = vld [vmem:[%s203 + $0x1f8] sm:$0xff]
        %v357 = vld [vmem:[%s203 + $0x200] sm:$0xff]
        %v358 = vld [vmem:[%s203 + $0x208] sm:$0xff]
        %v359 = vld [vmem:[%s203 + $0x210] sm:$0xff]
        %v360 = vld [vmem:[%s203 + $0x218] sm:$0xff]
        %v361 = vld [vmem:[%s203 + $0x220] sm:$0xff]
        %v362 = vld [vmem:[%s203 + $0x228] sm:$0xff]
        %v363 = vld [vmem:[%s203 + $0x230] sm:$0xff]
        %v364 = vld [vmem:[%s203 + $0x238] sm:$0xff]
        %v365 = vld [vmem:[%s203 + $0x240] sm:$0xff]
        %v366 = vld [vmem:[%s203 + $0x248] sm:$0xff]
        %v367 = vld [vmem:[%s203 + $0x250] sm:$0xff]
        %v368 = vld [vmem:[%s203 + $0x258] sm:$0xff]
        %v369 = vld [vmem:[%s203 + $0x260] sm:$0xff]
        %v370 = vld [vmem:[%s203 + $0x268] sm:$0xff]
        %v371 = vld [vmem:[%s203 + $0x270] sm:$0xff]
        %v372 = vld [vmem:[%s203 + $0x278] sm:$0xff]
        %v373 = vld [vmem:[%s203 + $0x280] sm:$0xff]
        %v374 = vld [vmem:[%s203 + $0x288] sm:$0xff]
        %v375 = vld [vmem:[%s203 + $0x290] sm:$0xff]
        %v376 = vld [vmem:[%s203 + $0x298] sm:$0xff]
        %v377 = vld [vmem:[%s203 + $0x2a0] sm:$0xff]
        %v378 = vld [vmem:[%s203 + $0x2a8] sm:$0xff]
        %v379 = vld [vmem:[%s203 + $0x2b0] sm:$0xff]
        %v380 = vld [vmem:[%s203 + $0x2b8] sm:$0xff]
        %v381 = vld [vmem:[%s203 + $0x2c0] sm:$0xff]
        %v382 = vld [vmem:[%s203 + $0x2c8] sm:$0xff]
        %v383 = vld [vmem:[%s203 + $0x2d0] sm:$0xff]
        %v384 = vld [vmem:[%s203 + $0x2d8] sm:$0xff]
        %v385 = vld [vmem:[%s203 + $0x2e0] sm:$0xff]
        %v386 = vld [vmem:[%s203 + $0x2e8] sm:$0xff]
        %v387 = vld [vmem:[%s203 + $0x2f0] sm:$0xff]
        %v388 = vld [vmem:[%s203 + $0x2f8] sm:$0xff]
        %v389 = vld [vmem:[%s203 + $0x300] sm:$0xff]
        %v390 = vld [vmem:[%s203 + $0x308] sm:$0xff]
        %v391 = vld [vmem:[%s203 + $0x310] sm:$0xff]
        %v392 = vld [vmem:[%s203 + $0x318] sm:$0xff]
        %v393 = vld [vmem:[%s203 + $0x320] sm:$0xff]
        %v394 = vld [vmem:[%s203 + $0x328] sm:$0xff]
        %v395 = vld [vmem:[%s203 + $0x330] sm:$0xff]
        %v396 = vld [vmem:[%s203 + $0x338] sm:$0xff]
        %v397 = vld [vmem:[%s203 + $0x340] sm:$0xff]
        %v398 = vld [vmem:[%s203 + $0x348] sm:$0xff]
        %v399 = vld [vmem:[%s203 + $0x350] sm:$0xff]
        %v400 = vld [vmem:[%s203 + $0x358] sm:$0xff]
        %v401 = vld [vmem:[%s203 + $0x360] sm:$0xff]
        %v402 = vld [vmem:[%s203 + $0x368] sm:$0xff]
        %v403 = vld [vmem:[%s203 + $0x370] sm:$0xff]
        %v404 = vld [vmem:[%s203 + $0x378] sm:$0xff]
        %v405 = vld [vmem:[%s203 + $0x380] sm:$0xff]
        %v406 = vld [vmem:[%s203 + $0x388] sm:$0xff]
        %v407 = vld [vmem:[%s203 + $0x390] sm:$0xff]
        %v408 = vld [vmem:[%s203 + $0x398] sm:$0xff]
        %v409 = vld [vmem:[%s203 + $0x3a0] sm:$0xff]
        %v410 = vld [vmem:[%s203 + $0x3a8] sm:$0xff]
        %v411 = vld [vmem:[%s203 + $0x3b0] sm:$0xff]
        %v412 = vld [vmem:[%s203 + $0x3b8] sm:$0xff]
        %v413 = vld [vmem:[%s203 + $0x3c0] sm:$0xff]
        %v414 = vld [vmem:[%s203 + $0x3c8] sm:$0xff]
        %v415 = vld [vmem:[%s203 + $0x3d0] sm:$0xff]
        %v416 = vld [vmem:[%s203 + $0x3d8] sm:$0xff]
        %v417 = vld [vmem:[%s203 + $0x3e0] sm:$0xff]
        %v418 = vld [vmem:[%s203 + $0x3e8] sm:$0xff]
        %v419 = vld [vmem:[%s203 + $0x3f0] sm:$0xff]
        %v420 = vld [vmem:[%s203 + $0x3f8] sm:$0xff]
        %v421 = vld [vmem:[%s203 + $0x400] sm:$0xff]
        %v422 = vld [vmem:[%s203 + $0x408] sm:$0xff]
        %v423 = vld [vmem:[%s203 + $0x410] sm:$0xff]
        %v424 = vld [vmem:[%s203 + $0x418] sm:$0xff]
        %v425 = vld [vmem:[%s203 + $0x420] sm:$0xff]
        %v426 = vld [vmem:[%s203 + $0x428] sm:$0xff]
        %v427 = vld [vmem:[%s203 + $0x430] sm:$0xff]
        %v428 = vld [vmem:[%s203 + $0x438] sm:$0xff]
        %v429 = vld [vmem:[%s203 + $0x440] sm:$0xff]
        %v430 = vld [vmem:[%s203 + $0x448] sm:$0xff]
        %v431 = vld [vmem:[%s203 + $0x450] sm:$0xff]
        %v432 = vld [vmem:[%s203 + $0x458] sm:$0xff]
        %v433 = vld [vmem:[%s203 + $0x460] sm:$0xff]
        %v434 = vld [vmem:[%s203 + $0x468] sm:$0xff]
        %v435 = vld [vmem:[%s203 + $0x470] sm:$0xff]
        %v436 = vld [vmem:[%s203 + $0x478] sm:$0xff]
        %v437 = vld [vmem:[%s203 + $0x480] sm:$0xff]
        %v438 = vld [vmem:[%s203 + $0x488] sm:$0xff]
        %v439 = vld [vmem:[%s203 + $0x490] sm:$0xff]
        %v440 = vld [vmem:[%s203 + $0x498] sm:$0xff]
        %v441 = vld [vmem:[%s203 + $0x4a0] sm:$0xff]
        %v442 = vld [vmem:[%s203 + $0x4a8] sm:$0xff]
        %v443 = vld [vmem:[%s203 + $0x4b0] sm:$0xff]
        %v444 = vld [vmem:[%s203 + $0x4b8] sm:$0xff]
        %v445 = vld [vmem:[%s203 + $0x4c0] sm:$0xff]
        %v446 = vld [vmem:[%s203 + $0x4c8] sm:$0xff]
        %v447 = vld [vmem:[%s203 + $0x4d0] sm:$0xff]
        %v448 = vld [vmem:[%s203 + $0x4d8] sm:$0xff]
        %v449 = vld [vmem:[%s203 + $0x4e0] sm:$0xff]
        %v450 = vld [vmem:[%s203 + $0x4e8] sm:$0xff]
        %v451 = vld [vmem:[%s203 + $0x4f0] sm:$0xff]
        %v452 = vld [vmem:[%s203 + $0x4f8] sm:$0xff]
        %v453 = vld [vmem:[%s203 + $0x500] sm:$0xff]
        %v454 = vld [vmem:[%s203 + $0x508] sm:$0xff]
        %v455 = vld [vmem:[%s203 + $0x510] sm:$0xff]
        %v456 = vld [vmem:[%s203 + $0x518] sm:$0xff]
        %v457 = vld [vmem:[%s203 + $0x520] sm:$0xff]
        %v458 = vld [vmem:[%s203 + $0x528] sm:$0xff]
        %v459 = vld [vmem:[%s203 + $0x530] sm:$0xff]
        %v460 = vld [vmem:[%s203 + $0x538] sm:$0xff]
        %v461 = vld [vmem:[%s203 + $0x540] sm:$0xff]
        %v462 = vld [vmem:[%s203 + $0x548] sm:$0xff]
        %v463 = vld [vmem:[%s203 + $0x550] sm:$0xff]
        %v464 = vld [vmem:[%s203 + $0x558] sm:$0xff]
        %v465 = vld [vmem:[%s203 + $0x560] sm:$0xff]
        %v466 = vld [vmem:[%s203 + $0x568] sm:$0xff]
        %v467 = vld [vmem:[%s203 + $0x570] sm:$0xff]
        %v468 = vld [vmem:[%s203 + $0x578] sm:$0xff]
        %v469 = vld [vmem:[%s203 + $0x580] sm:$0xff]
        %v470 = vld [vmem:[%s203 + $0x588] sm:$0xff]
        %v471 = vld [vmem:[%s203 + $0x590] sm:$0xff]
        %v472 = vld [vmem:[%s203 + $0x598] sm:$0xff]
        %v473 = vld [vmem:[%s203 + $0x5a0] sm:$0xff]
        %v474 = vld [vmem:[%s203 + $0x5a8] sm:$0xff]
        %v475 = vld [vmem:[%s203 + $0x5b0] sm:$0xff]
        %v476 = vld [vmem:[%s203 + $0x5b8] sm:$0xff]
        %v477 = vld [vmem:[%s203 + $0x5c0] sm:$0xff]
        %v478 = vld [vmem:[%s203 + $0x5c8] sm:$0xff]
        %v479 = vld [vmem:[%s203 + $0x5d0] sm:$0xff]
        %v480 = vld [vmem:[%s203 + $0x5d8] sm:$0xff]
        %v481 = vld [vmem:[%s203 + $0x5e0] sm:$0xff]
        %v482 = vld [vmem:[%s203 + $0x5e8] sm:$0xff]
        %v483 = vld [vmem:[%s203 + $0x5f0] sm:$0xff]
        %v484 = vld [vmem:[%s203 + $0x5f8] sm:$0xff]
        %v485 = vld [vmem:[%s203 + $0x600] sm:$0xff]
        %v486 = vld [vmem:[%s203 + $0x608] sm:$0xff]
        %v487 = vld [vmem:[%s203 + $0x610] sm:$0xff]
        %v488 = vld [vmem:[%s203 + $0x618] sm:$0xff]
        %v489 = vld [vmem:[%s203 + $0x620] sm:$0xff]
        %v490 = vld [vmem:[%s203 + $0x628] sm:$0xff]
        %v491 = vld [vmem:[%s203 + $0x630] sm:$0xff]
        %v492 = vld [vmem:[%s203 + $0x638] sm:$0xff]
        %v493 = vld [vmem:[%s203 + $0x640] sm:$0xff]
        %v494 = vld [vmem:[%s203 + $0x648] sm:$0xff]
        %v495 = vld [vmem:[%s203 + $0x650] sm:$0xff]
        %v496 = vld [vmem:[%s203 + $0x658] sm:$0xff]
        %v497 = vld [vmem:[%s203 + $0x660] sm:$0xff]
        %v498 = vld [vmem:[%s203 + $0x668] sm:$0xff]
        %v499 = vld [vmem:[%s203 + $0x670] sm:$0xff]
        %v500 = vld [vmem:[%s203 + $0x678] sm:$0xff]
        %v501 = vld [vmem:[%s203 + $0x680] sm:$0xff]
        %v502 = vld [vmem:[%s203 + $0x688] sm:$0xff]
        %v503 = vld [vmem:[%s203 + $0x690] sm:$0xff]
        %v504 = vld [vmem:[%s203 + $0x698] sm:$0xff]
        %v505 = vld [vmem:[%s203 + $0x6a0] sm:$0xff]
        %v506 = vld [vmem:[%s203 + $0x6a8] sm:$0xff]
        %v507 = vld [vmem:[%s203 + $0x6b0] sm:$0xff]
        %v508 = vld [vmem:[%s203 + $0x6b8] sm:$0xff]
        %v509 = vld [vmem:[%s203 + $0x6c0] sm:$0xff]
        %v510 = vld [vmem:[%s203 + $0x6c8] sm:$0xff]
        %v511 = vld [vmem:[%s203 + $0x6d0] sm:$0xff]
        %v512 = vld [vmem:[%s203 + $0x6d8] sm:$0xff]
        %v513 = vld [vmem:[%s203 + $0x6e0] sm:$0xff]
        %v514 = vld [vmem:[%s203 + $0x6e8] sm:$0xff]
        %v515 = vld [vmem:[%s203 + $0x6f0] sm:$0xff]
        %v516 = vld [vmem:[%s203 + $0x6f8] sm:$0xff]
        %v517 = vld [vmem:[%s203 + $0x700] sm:$0xff]
        %v518 = vld [vmem:[%s203 + $0x708] sm:$0xff]
        %v519 = vld [vmem:[%s203 + $0x710] sm:$0xff]
        %v520 = vld [vmem:[%s203 + $0x718] sm:$0xff]
        %v521 = vld [vmem:[%s203 + $0x720] sm:$0xff]
        %v522 = vld [vmem:[%s203 + $0x728] sm:$0xff]
        %v523 = vld [vmem:[%s203 + $0x730] sm:$0xff]
        %v524 = vld [vmem:[%s203 + $0x738] sm:$0xff]
        %v525 = vld [vmem:[%s203 + $0x740] sm:$0xff]
        %v526 = vld [vmem:[%s203 + $0x748] sm:$0xff]
        %v527 = vld [vmem:[%s203 + $0x750] sm:$0xff]
        %v528 = vld [vmem:[%s203 + $0x758] sm:$0xff]
        %v529 = vld [vmem:[%s203 + $0x760] sm:$0xff]
        %v530 = vld [vmem:[%s203 + $0x768] sm:$0xff]
        %v531 = vld [vmem:[%s203 + $0x770] sm:$0xff]
        %v532 = vld [vmem:[%s203 + $0x778] sm:$0xff]
        %v533 = vld [vmem:[%s203 + $0x780] sm:$0xff]
        %v534 = vld [vmem:[%s203 + $0x788] sm:$0xff]
        %v535 = vld [vmem:[%s203 + $0x790] sm:$0xff]
        %v536 = vld [vmem:[%s203 + $0x798] sm:$0xff]
        %v537 = vld [vmem:[%s203 + $0x7a0] sm:$0xff]
        %v538 = vld [vmem:[%s203 + $0x7a8] sm:$0xff]
        %v539 = vld [vmem:[%s203 + $0x7b0] sm:$0xff]
        %v540 = vld [vmem:[%s203 + $0x7b8] sm:$0xff]
        %v541 = vld [vmem:[%s203 + $0x7c0] sm:$0xff]
        %v542 = vld [vmem:[%s203 + $0x7c8] sm:$0xff]
        %v543 = vld [vmem:[%s203 + $0x7d0] sm:$0xff]
        %v544 = vld [vmem:[%s203 + $0x7d8] sm:$0xff]
        %v545 = vld [vmem:[%s203 + $0x7e0] sm:$0xff]
        %v546 = vld [vmem:[%s203 + $0x7e8] sm:$0xff]
        %v547 = vld [vmem:[%s203 + $0x7f0] sm:$0xff]
        %v548 = vld [vmem:[%s203 + $0x7f8] sm:$0xff]
        %v549 = vld [vmem:[%s203 + $0x800] sm:$0xff]
        %v550 = vld [vmem:[%s203 + $0x808] sm:$0xff]
        %v551 = vld [vmem:[%s203 + $0x810] sm:$0xff]
        %v552 = vld [vmem:[%s203 + $0x818] sm:$0xff]
        %v553 = vld [vmem:[%s203 + $0x820] sm:$0xff]
        %v554 = vld [vmem:[%s203 + $0x828] sm:$0xff]
        %v555 = vld [vmem:[%s203 + $0x830] sm:$0xff]
        %v556 = vld [vmem:[%s203 + $0x838] sm:$0xff]
        %v557 = vld [vmem:[%s203 + $0x840] sm:$0xff]
        %v558 = vld [vmem:[%s203 + $0x848] sm:$0xff]
        %v559 = vld [vmem:[%s203 + $0x850] sm:$0xff]
        %v560 = vld [vmem:[%s203 + $0x858] sm:$0xff]
        %v561 = vld [vmem:[%s203 + $0x860] sm:$0xff]
        %v562 = vld [vmem:[%s203 + $0x868] sm:$0xff]
        %v563 = vld [vmem:[%s203 + $0x870] sm:$0xff]
        %v564 = vld [vmem:[%s203 + $0x878] sm:$0xff]
        %v565 = vld [vmem:[%s203 + $0x880] sm:$0xff]
        %v566 = vld [vmem:[%s203 + $0x888] sm:$0xff]
        %v567 = vld [vmem:[%s203 + $0x890] sm:$0xff]
        %v568 = vld [vmem:[%s203 + $0x898] sm:$0xff]
        %v569 = vld [vmem:[%s203 + $0x8a0] sm:$0xff]
        %v570 = vld [vmem:[%s203 + $0x8a8] sm:$0xff]
        %v571 = vld [vmem:[%s203 + $0x8b0] sm:$0xff]
        %v572 = vld [vmem:[%s203 + $0x8b8] sm:$0xff]
        %v573 = vld [vmem:[%s203 + $0x8c0] sm:$0xff]
        %v574 = vld [vmem:[%s203 + $0x8c8] sm:$0xff]
        %v575 = vld [vmem:[%s203 + $0x8d0] sm:$0xff]
        %v576 = vld [vmem:[%s203 + $0x8d8] sm:$0xff]
        %v577 = vld [vmem:[%s203 + $0x8e0] sm:$0xff]
        %v578 = vld [vmem:[%s203 + $0x8e8] sm:$0xff]
        %v579 = vld [vmem:[%s203 + $0x8f0] sm:$0xff]
        %v580 = vld [vmem:[%s203 + $0x8f8] sm:$0xff]
        %v581 = vld [vmem:[%s203 + $0x900] sm:$0xff]
        %v582 = vld [vmem:[%s203 + $0x908] sm:$0xff]
        %v583 = vld [vmem:[%s203 + $0x910] sm:$0xff]
        %v584 = vld [vmem:[%s203 + $0x918] sm:$0xff]
        %v585 = vld [vmem:[%s203 + $0x920] sm:$0xff]
        %v586 = vld [vmem:[%s203 + $0x928] sm:$0xff]
        %v587 = vld [vmem:[%s203 + $0x930] sm:$0xff]
        %v588 = vld [vmem:[%s203 + $0x938] sm:$0xff]
        %v589 = vld [vmem:[%s203 + $0x940] sm:$0xff]
        %v590 = vld [vmem:[%s203 + $0x948] sm:$0xff]
        %v591 = vld [vmem:[%s203 + $0x950] sm:$0xff]
        %v592 = vld [vmem:[%s203 + $0x958] sm:$0xff]
        %v593 = vld [vmem:[%s203 + $0x960] sm:$0xff]
        %v594 = vld [vmem:[%s203 + $0x968] sm:$0xff]
        %v595 = vld [vmem:[%s203 + $0x970] sm:$0xff]
        %v596 = vld [vmem:[%s203 + $0x978] sm:$0xff]
        %v597 = vld [vmem:[%s203 + $0x980] sm:$0xff]
        %v598 = vld [vmem:[%s203 + $0x988] sm:$0xff]
        %v599 = vld [vmem:[%s203 + $0x990] sm:$0xff]
        %v600 = vld [vmem:[%s203 + $0x998] sm:$0xff]
        %v601 = vld [vmem:[%s203 + $0x9a0] sm:$0xff]
        %v602 = vld [vmem:[%s203 + $0x9a8] sm:$0xff]
        %v603 = vld [vmem:[%s203 + $0x9b0] sm:$0xff]
        %v604 = vld [vmem:[%s203 + $0x9b8] sm:$0xff]
        %v605 = vld [vmem:[%s203 + $0x9c0] sm:$0xff]
        %v606 = vld [vmem:[%s203 + $0x9c8] sm:$0xff]
        %v607 = vld [vmem:[%s203 + $0x9d0] sm:$0xff]
        %v608 = vld [vmem:[%s203 + $0x9d8] sm:$0xff]
        %v609 = vld [vmem:[%s203 + $0x9e0] sm:$0xff]
        %v610 = vld [vmem:[%s203 + $0x9e8] sm:$0xff]
        %v611 = vld [vmem:[%s203 + $0x9f0] sm:$0xff]
        %v612 = vld [vmem:[%s203 + $0x9f8] sm:$0xff]
        %v613 = vld [vmem:[%s203 + $0xa00] sm:$0xff]
        %v614 = vld [vmem:[%s203 + $0xa08] sm:$0xff]
        %v615 = vld [vmem:[%s203 + $0xa10] sm:$0xff]
        %v616 = vld [vmem:[%s203 + $0xa18] sm:$0xff]
        %v617 = vld [vmem:[%s203 + $0xa20] sm:$0xff]
        %v618 = vld [vmem:[%s203 + $0xa28] sm:$0xff]
        %v619 = vld [vmem:[%s203 + $0xa30] sm:$0xff]
        %v620 = vld [vmem:[%s203 + $0xa38] sm:$0xff]
        %v621 = vld [vmem:[%s203 + $0xa40] sm:$0xff]
        %v622 = vld [vmem:[%s203 + $0xa48] sm:$0xff]
        %v623 = vld [vmem:[%s203 + $0xa50] sm:$0xff]
        %v624 = vld [vmem:[%s203 + $0xa58] sm:$0xff]
        %v625 = vld [vmem:[%s203 + $0xa60] sm:$0xff]
        %v626 = vld [vmem:[%s203 + $0xa68] sm:$0xff]
        %v627 = vld [vmem:[%s203 + $0xa70] sm:$0xff]
        %v628 = vld [vmem:[%s203 + $0xa78] sm:$0xff]
        %v629 = vld [vmem:[%s203 + $0xa80] sm:$0xff]
        %v630 = vld [vmem:[%s203 + $0xa88] sm:$0xff]
        %v631 = vld [vmem:[%s203 + $0xa90] sm:$0xff]
        %v632 = vld [vmem:[%s203 + $0xa98] sm:$0xff]
        %v633 = vld [vmem:[%s203 + $0xaa0] sm:$0xff]
        %v634 = vld [vmem:[%s203 + $0xaa8] sm:$0xff]
        %v635 = vld [vmem:[%s203 + $0xab0] sm:$0xff]
        %v636 = vld [vmem:[%s203 + $0xab8] sm:$0xff]
        %v637 = vld [vmem:[%s203 + $0xac0] sm:$0xff]
        %v638 = vld [vmem:[%s203 + $0xac8] sm:$0xff]
        %v639 = vld [vmem:[%s203 + $0xad0] sm:$0xff]
        %v640 = vld [vmem:[%s203 + $0xad8] sm:$0xff]
        %v641 = vld [vmem:[%s203 + $0xae0] sm:$0xff]
        %v642 = vld [vmem:[%s203 + $0xae8] sm:$0xff]
        %v643 = vld [vmem:[%s203 + $0xaf0] sm:$0xff]
        %v644 = vld [vmem:[%s203 + $0xaf8] sm:$0xff]
        %v645 = vld [vmem:[%s203 + $0xb00] sm:$0xff]
        %v646 = vld [vmem:[%s203 + $0xb08] sm:$0xff]
        %v647 = vld [vmem:[%s203 + $0xb10] sm:$0xff]
        %v648 = vld [vmem:[%s203 + $0xb18] sm:$0xff]
        %v649 = vld [vmem:[%s203 + $0xb20] sm:$0xff]
        %v650 = vld [vmem:[%s203 + $0xb28] sm:$0xff]
        %v651 = vld [vmem:[%s203 + $0xb30] sm:$0xff]
        %v652 = vld [vmem:[%s203 + $0xb38] sm:$0xff]
        %v653 = vld [vmem:[%s203 + $0xb40] sm:$0xff]
        %v654 = vld [vmem:[%s203 + $0xb48] sm:$0xff]
        %v655 = vld [vmem:[%s203 + $0xb50] sm:$0xff]
        %v656 = vld [vmem:[%s203 + $0xb58] sm:$0xff]
        %v657 = vld [vmem:[%s203 + $0xb60] sm:$0xff]
        %v658 = vld [vmem:[%s203 + $0xb68] sm:$0xff]
        %v659 = vld [vmem:[%s203 + $0xb70] sm:$0xff]
        %v660 = vld [vmem:[%s203 + $0xb78] sm:$0xff]
        %v661 = vld [vmem:[%s203 + $0xb80] sm:$0xff]
        %v662 = vld [vmem:[%s203 + $0xb88] sm:$0xff]
        %v663 = vld [vmem:[%s203 + $0xb90] sm:$0xff]
        %v664 = vld [vmem:[%s203 + $0xb98] sm:$0xff]
        %v665 = vld [vmem:[%s203 + $0xba0] sm:$0xff]
        %v666 = vld [vmem:[%s203 + $0xba8] sm:$0xff]
        %v667 = vld [vmem:[%s203 + $0xbb0] sm:$0xff]
        %v668 = vld [vmem:[%s203 + $0xbb8] sm:$0xff]
        %v669 = vld [vmem:[%s203 + $0xbc0] sm:$0xff]
        %v670 = vld [vmem:[%s203 + $0xbc8] sm:$0xff]
        %v671 = vld [vmem:[%s203 + $0xbd0] sm:$0xff]
        %v672 = vld [vmem:[%s203 + $0xbd8] sm:$0xff]
        %v673 = vld [vmem:[%s203 + $0xbe0] sm:$0xff]
        %v674 = vld [vmem:[%s203 + $0xbe8] sm:$0xff]
        %v675 = vld [vmem:[%s203 + $0xbf0] sm:$0xff]
        %v676 = vld [vmem:[%s203 + $0xbf8] sm:$0xff]
        %v677 = vld [vmem:[%s203 + $0xc00] sm:$0xff]
        %v678 = vld [vmem:[%s203 + $0xc08] sm:$0xff]
        %v679 = vld [vmem:[%s203 + $0xc10] sm:$0xff]
        %v680 = vld [vmem:[%s203 + $0xc18] sm:$0xff]
        %v681 = vld [vmem:[%s203 + $0xc20] sm:$0xff]
        %v682 = vld [vmem:[%s203 + $0xc28] sm:$0xff]
        %v683 = vld [vmem:[%s203 + $0xc30] sm:$0xff]
        %v684 = vld [vmem:[%s203 + $0xc38] sm:$0xff]
        %v685 = vld [vmem:[%s203 + $0xc40] sm:$0xff]
        %v686 = vld [vmem:[%s203 + $0xc48] sm:$0xff]
        %v687 = vld [vmem:[%s203 + $0xc50] sm:$0xff]
        %v688 = vld [vmem:[%s203 + $0xc58] sm:$0xff]
        %v689 = vld [vmem:[%s203 + $0xc60] sm:$0xff]
        %v690 = vld [vmem:[%s203 + $0xc68] sm:$0xff]
        %v691 = vld [vmem:[%s203 + $0xc70] sm:$0xff]
        %v692 = vld [vmem:[%s203 + $0xc78] sm:$0xff]
        %v693 = vld [vmem:[%s203 + $0xc80] sm:$0xff]
        %v694 = vld [vmem:[%s203 + $0xc88] sm:$0xff]
        %v695 = vld [vmem:[%s203 + $0xc90] sm:$0xff]
        %v696 = vld [vmem:[%s203 + $0xc98] sm:$0xff]
        %v697 = vld [vmem:[%s203 + $0xca0] sm:$0xff]
        %v698 = vld [vmem:[%s203 + $0xca8] sm:$0xff]
        %v699 = vld [vmem:[%s203 + $0xcb0] sm:$0xff]
        %v700 = vld [vmem:[%s203 + $0xcb8] sm:$0xff]
        %v701 = vld [vmem:[%s203 + $0xcc0] sm:$0xff]
        %v702 = vld [vmem:[%s203 + $0xcc8] sm:$0xff]
        %v703 = vld [vmem:[%s203 + $0xcd0] sm:$0xff]
        %v704 = vld [vmem:[%s203 + $0xcd8] sm:$0xff]
        %v705 = vld [vmem:[%s203 + $0xce0] sm:$0xff]
        %v706 = vld [vmem:[%s203 + $0xce8] sm:$0xff]
        %v707 = vld [vmem:[%s203 + $0xcf0] sm:$0xff]
        %v708 = vld [vmem:[%s203 + $0xcf8] sm:$0xff]
        %v709 = vld [vmem:[%s203 + $0xd00] sm:$0xff]
        %v710 = vld [vmem:[%s203 + $0xd08] sm:$0xff]
        %v711 = vld [vmem:[%s203 + $0xd10] sm:$0xff]
        %v712 = vld [vmem:[%s203 + $0xd18] sm:$0xff]
        %v713 = vld [vmem:[%s203 + $0xd20] sm:$0xff]
        %v714 = vld [vmem:[%s203 + $0xd28] sm:$0xff]
        %v715 = vld [vmem:[%s203 + $0xd30] sm:$0xff]
        %v716 = vld [vmem:[%s203 + $0xd38] sm:$0xff]
        %v717 = vld [vmem:[%s203 + $0xd40] sm:$0xff]
        %v718 = vld [vmem:[%s203 + $0xd48] sm:$0xff]
        %v719 = vld [vmem:[%s203 + $0xd50] sm:$0xff]
        %v720 = vld [vmem:[%s203 + $0xd58] sm:$0xff]
        %v721 = vld [vmem:[%s203 + $0xd60] sm:$0xff]
        %v722 = vld [vmem:[%s203 + $0xd68] sm:$0xff]
        %v723 = vld [vmem:[%s203 + $0xd70] sm:$0xff]
        %v724 = vld [vmem:[%s203 + $0xd78] sm:$0xff]
        %v725 = vld [vmem:[%s203 + $0xd80] sm:$0xff]
        %v726 = vld [vmem:[%s203 + $0xd88] sm:$0xff]
        %v727 = vld [vmem:[%s203 + $0xd90] sm:$0xff]
        %v728 = vld [vmem:[%s203 + $0xd98] sm:$0xff]
        %v729 = vld [vmem:[%s203 + $0xda0] sm:$0xff]
        %v730 = vld [vmem:[%s203 + $0xda8] sm:$0xff]
        %v731 = vld [vmem:[%s203 + $0xdb0] sm:$0xff]
        %v732 = vld [vmem:[%s203 + $0xdb8] sm:$0xff]
        %v733 = vld [vmem:[%s203 + $0xdc0] sm:$0xff]
        %v734 = vld [vmem:[%s203 + $0xdc8] sm:$0xff]
        %v735 = vld [vmem:[%s203 + $0xdd0] sm:$0xff]
        %v736 = vld [vmem:[%s203 + $0xdd8] sm:$0xff]
        %v737 = vld [vmem:[%s203 + $0xde0] sm:$0xff]
        %v738 = vld [vmem:[%s203 + $0xde8] sm:$0xff]
        %v739 = vld [vmem:[%s203 + $0xdf0] sm:$0xff]
        %v740 = vld [vmem:[%s203 + $0xdf8] sm:$0xff]
        %v741 = vld [vmem:[%s203 + $0xe00] sm:$0xff]
        %v742 = vld [vmem:[%s203 + $0xe08] sm:$0xff]
        %v743 = vld [vmem:[%s203 + $0xe10] sm:$0xff]
        %v744 = vld [vmem:[%s203 + $0xe18] sm:$0xff]
        %v745 = vld [vmem:[%s203 + $0xe20] sm:$0xff]
        %v746 = vld [vmem:[%s203 + $0xe28] sm:$0xff]
        %v747 = vld [vmem:[%s203 + $0xe30] sm:$0xff]
        %v748 = vld [vmem:[%s203 + $0xe38] sm:$0xff]
        %v749 = vld [vmem:[%s203 + $0xe40] sm:$0xff]
        %v750 = vld [vmem:[%s203 + $0xe48] sm:$0xff]
        %v751 = vld [vmem:[%s203 + $0xe50] sm:$0xff]
        %v752 = vld [vmem:[%s203 + $0xe58] sm:$0xff]
        %v753 = vld [vmem:[%s203 + $0xe60] sm:$0xff]
        %v754 = vld [vmem:[%s203 + $0xe68] sm:$0xff]
        %v755 = vld [vmem:[%s203 + $0xe70] sm:$0xff]
        %v756 = vld [vmem:[%s203 + $0xe78] sm:$0xff]
        %v757 = vld [vmem:[%s203 + $0xe80] sm:$0xff]
        %v758 = vld [vmem:[%s203 + $0xe88] sm:$0xff]
        %v759 = vld [vmem:[%s203 + $0xe90] sm:$0xff]
        %v760 = vld [vmem:[%s203 + $0xe98] sm:$0xff]
        %v761 = vld [vmem:[%s203 + $0xea0] sm:$0xff]
        %v762 = vld [vmem:[%s203 + $0xea8] sm:$0xff]
        %v763 = vld [vmem:[%s203 + $0xeb0] sm:$0xff]
        %v764 = vld [vmem:[%s203 + $0xeb8] sm:$0xff]
        %v765 = vld [vmem:[%s203 + $0xec0] sm:$0xff]
        %v766 = vld [vmem:[%s203 + $0xec8] sm:$0xff]
        %v767 = vld [vmem:[%s203 + $0xed0] sm:$0xff]
        %v768 = vld [vmem:[%s203 + $0xed8] sm:$0xff]
        %v769 = vld [vmem:[%s203 + $0xee0] sm:$0xff]
        %v770 = vld [vmem:[%s203 + $0xee8] sm:$0xff]
        %v771 = vld [vmem:[%s203 + $0xef0] sm:$0xff]
        %v772 = vld [vmem:[%s203 + $0xef8] sm:$0xff]
        %v773 = vld [vmem:[%s203 + $0xf00] sm:$0xff]
        %v774 = vld [vmem:[%s203 + $0xf08] sm:$0xff]
        %v775 = vld [vmem:[%s203 + $0xf10] sm:$0xff]
        %v776 = vld [vmem:[%s203 + $0xf18] sm:$0xff]
        %v777 = vld [vmem:[%s203 + $0xf20] sm:$0xff]
        %v778 = vld [vmem:[%s203 + $0xf28] sm:$0xff]
        %v779 = vld [vmem:[%s203 + $0xf30] sm:$0xff]
        %v780 = vld [vmem:[%s203 + $0xf38] sm:$0xff]
        %v781 = vld [vmem:[%s203 + $0xf40] sm:$0xff]
        %v782 = vld [vmem:[%s203 + $0xf48] sm:$0xff]
        %v783 = vld [vmem:[%s203 + $0xf50] sm:$0xff]
        %v784 = vld [vmem:[%s203 + $0xf58] sm:$0xff]
        %v785 = vld [vmem:[%s203 + $0xf60] sm:$0xff]
        %v786 = vld [vmem:[%s203 + $0xf68] sm:$0xff]
        %v787 = vld [vmem:[%s203 + $0xf70] sm:$0xff]
        %v788 = vld [vmem:[%s203 + $0xf78] sm:$0xff]
        %v789 = vld [vmem:[%s203 + $0xf80] sm:$0xff]
        %v790 = vld [vmem:[%s203 + $0xf88] sm:$0xff]
        %v791 = vld [vmem:[%s203 + $0xf90] sm:$0xff]
        %v792 = vld [vmem:[%s203 + $0xf98] sm:$0xff]
        %v793 = vld [vmem:[%s203 + $0xfa0] sm:$0xff]
        %v794 = vld [vmem:[%s203 + $0xfa8] sm:$0xff]
        %v795 = vld [vmem:[%s203 + $0xfb0] sm:$0xff]
        %v796 = vld [vmem:[%s203 + $0xfb8] sm:$0xff]
        %v797 = vld [vmem:[%s203 + $0xfc0] sm:$0xff]
        %v798 = vld [vmem:[%s203 + $0xfc8] sm:$0xff]
        %v799 = vld [vmem:[%s203 + $0xfd0] sm:$0xff]
        %v800 = vld [vmem:[%s203 + $0xfd8] sm:$0xff]
        %v801 = vld [vmem:[%s203 + $0xfe0] sm:$0xff]
        %v802 = vld [vmem:[%s203 + $0xfe8] sm:$0xff]
        %v803 = vld [vmem:[%s203 + $0xff0] sm:$0xff]
        %v804 = vld [vmem:[%s203 + $0xff8] sm:$0xff]
        %v805 = vld [vmem:[%s203 + $0x1000] sm:$0xff]
        %v806 = vld [vmem:[%s203 + $0x1008] sm:$0xff]
        %v807 = vld [vmem:[%s203 + $0x1010] sm:$0xff]
        %v808 = vld [vmem:[%s203 + $0x1018] sm:$0xff]
        %v809 = vld [vmem:[%s203 + $0x1020] sm:$0xff]
        %v810 = vld [vmem:[%s203 + $0x1028] sm:$0xff]
        %v811 = vld [vmem:[%s203 + $0x1030] sm:$0xff]
        %v812 = vld [vmem:[%s203 + $0x1038] sm:$0xff]
        %v813 = vld [vmem:[%s203 + $0x1040] sm:$0xff]
        %v814 = vld [vmem:[%s203 + $0x1048] sm:$0xff]
        %v815 = vld [vmem:[%s203 + $0x1050] sm:$0xff]
        %v816 = vld [vmem:[%s203 + $0x1058] sm:$0xff]
        %v817 = vld [vmem:[%s203 + $0x1060] sm:$0xff]
        %v818 = vld [vmem:[%s203 + $0x1068] sm:$0xff]
        %v819 = vld [vmem:[%s203 + $0x1070] sm:$0xff]
        %v820 = vld [vmem:[%s203 + $0x1078] sm:$0xff]
        %v821 = vld [vmem:[%s203 + $0x1080] sm:$0xff]
        %v822 = vld [vmem:[%s203 + $0x1088] sm:$0xff]
        %v823 = vld [vmem:[%s203 + $0x1090] sm:$0xff]
        %v824 = vld [vmem:[%s203 + $0x1098] sm:$0xff]
        %v825 = vld [vmem:[%s203 + $0x10a0] sm:$0xff]
        %v826 = vld [vmem:[%s203 + $0x10a8] sm:$0xff]
        %v827 = vld [vmem:[%s203 + $0x10b0] sm:$0xff]
        %v828 = vld [vmem:[%s203 + $0x10b8] sm:$0xff]
        %v829 = vld [vmem:[%s203 + $0x10c0] sm:$0xff]
        %v830 = vld [vmem:[%s203 + $0x10c8] sm:$0xff]
        %v831 = vld [vmem:[%s203 + $0x10d0] sm:$0xff]
        %v832 = vld [vmem:[%s203 + $0x10d8] sm:$0xff]
        %v833 = vld [vmem:[%s203 + $0x10e0] sm:$0xff]
        %v834 = vld [vmem:[%s203 + $0x10e8] sm:$0xff]
        %v835 = vld [vmem:[%s203 + $0x10f0] sm:$0xff]
        %v836 = vld [vmem:[%s203 + $0x10f8] sm:$0xff]
        %v837 = vld [vmem:[%s203 + $0x1100] sm:$0xff]
        %v838 = vld [vmem:[%s203 + $0x1108] sm:$0xff]
        %v839 = vld [vmem:[%s203 + $0x1110] sm:$0xff]
        %v840 = vld [vmem:[%s203 + $0x1118] sm:$0xff]
        %v841 = vld [vmem:[%s203 + $0x1120] sm:$0xff]
        %v842 = vld [vmem:[%s203 + $0x1128] sm:$0xff]
        %v843 = vld [vmem:[%s203 + $0x1130] sm:$0xff]
        %v844 = vld [vmem:[%s203 + $0x1138] sm:$0xff]
        %v845 = vld [vmem:[%s203 + $0x1140] sm:$0xff]
        %v846 = vld [vmem:[%s203 + $0x1148] sm:$0xff]
        %v847 = vld [vmem:[%s203 + $0x1150] sm:$0xff]
        %v848 = vld [vmem:[%s203 + $0x1158] sm:$0xff]
        %v849 = vld [vmem:[%s203 + $0x1160] sm:$0xff]
        %v850 = vld [vmem:[%s203 + $0x1168] sm:$0xff]
        %v851 = vld [vmem:[%s203 + $0x1170] sm:$0xff]
        %v852 = vld [vmem:[%s203 + $0x1178] sm:$0xff]
        %v853 = vld [vmem:[%s203 + $0x1180] sm:$0xff]
        %v854 = vld [vmem:[%s203 + $0x1188] sm:$0xff]
        %v855 = vld [vmem:[%s203 + $0x1190] sm:$0xff]
        %v856 = vld [vmem:[%s203 + $0x1198] sm:$0xff]
        %v857 = vld [vmem:[%s203 + $0x11a0] sm:$0xff]
        %v858 = vld [vmem:[%s203 + $0x11a8] sm:$0xff]
        %v859 = vld [vmem:[%s203 + $0x11b0] sm:$0xff]
        %v860 = vld [vmem:[%s203 + $0x11b8] sm:$0xff]
        %v861 = vld [vmem:[%s203 + $0x11c0] sm:$0xff]
        %v862 = vld [vmem:[%s203 + $0x11c8] sm:$0xff]
        %v863 = vld [vmem:[%s203 + $0x11d0] sm:$0xff]
        %v864 = vld [vmem:[%s203 + $0x11d8] sm:$0xff]
        %v865 = vld [vmem:[%s203 + $0x11e0] sm:$0xff]
        %v866 = vld [vmem:[%s203 + $0x11e8] sm:$0xff]
        %v867 = vld [vmem:[%s203 + $0x11f0] sm:$0xff]
        %v868 = vld [vmem:[%s203 + $0x11f8] sm:$0xff]
        %v869 = vld [vmem:[%s203 + $0x1200] sm:$0xff]
        %v870 = vld [vmem:[%s203 + $0x1208] sm:$0xff]
        %v871 = vld [vmem:[%s203 + $0x1210] sm:$0xff]
        %v872 = vld [vmem:[%s203 + $0x1218] sm:$0xff]
        %v873 = vld [vmem:[%s203 + $0x1220] sm:$0xff]
        %v874 = vld [vmem:[%s203 + $0x1228] sm:$0xff]
        %v875 = vld [vmem:[%s203 + $0x1230] sm:$0xff]
        %v876 = vld [vmem:[%s203 + $0x1238] sm:$0xff]
        %v877 = vld [vmem:[%s203 + $0x1240] sm:$0xff]
        %v878 = vld [vmem:[%s203 + $0x1248] sm:$0xff]
        %v879 = vld [vmem:[%s203 + $0x1250] sm:$0xff]
        %v880 = vld [vmem:[%s203 + $0x1258] sm:$0xff]
        %v881 = vld [vmem:[%s203 + $0x1260] sm:$0xff]
        %v882 = vld [vmem:[%s203 + $0x1268] sm:$0xff]
        %v883 = vld [vmem:[%s203 + $0x1270] sm:$0xff]
        %v884 = vld [vmem:[%s203 + $0x1278] sm:$0xff]
        %v885 = vld [vmem:[%s203 + $0x1280] sm:$0xff]
        %v886 = vld [vmem:[%s203 + $0x1288] sm:$0xff]
        %v887 = vld [vmem:[%s203 + $0x1290] sm:$0xff]
        %v888 = vld [vmem:[%s203 + $0x1298] sm:$0xff]
        %v889 = vld [vmem:[%s203 + $0x12a0] sm:$0xff]
        %v890 = vld [vmem:[%s203 + $0x12a8] sm:$0xff]
        %v891 = vld [vmem:[%s203 + $0x12b0] sm:$0xff]
        %v892 = vld [vmem:[%s203 + $0x12b8] sm:$0xff]
        %v893 = vld [vmem:[%s203 + $0x12c0] sm:$0xff]
        %v894 = vld [vmem:[%s203 + $0x12c8] sm:$0xff]
        %v895 = vld [vmem:[%s203 + $0x12d0] sm:$0xff]
        %v896 = vld [vmem:[%s203 + $0x12d8] sm:$0xff]
        %v897 = vld [vmem:[%s203 + $0x12e0] sm:$0xff]
        %v898 = vld [vmem:[%s203 + $0x12e8] sm:$0xff]
        %v899 = vld [vmem:[%s203 + $0x12f0] sm:$0xff]
        %v900 = vld [vmem:[%s203 + $0x12f8] sm:$0xff]
        %v901 = vld [vmem:[%s203 + $0x1300] sm:$0xff]
        %v902 = vld [vmem:[%s203 + $0x1308] sm:$0xff]
        %v903 = vld [vmem:[%s203 + $0x1310] sm:$0xff]
        %v904 = vld [vmem:[%s203 + $0x1318] sm:$0xff]
        %v905 = vld [vmem:[%s203 + $0x1320] sm:$0xff]
        %v906 = vld [vmem:[%s203 + $0x1328] sm:$0xff]
        %v907 = vld [vmem:[%s203 + $0x1330] sm:$0xff]
        %v908 = vld [vmem:[%s203 + $0x1338] sm:$0xff]
        %v909 = vld [vmem:[%s203 + $0x1340] sm:$0xff]
        %v910 = vld [vmem:[%s203 + $0x1348] sm:$0xff]
        %v911 = vld [vmem:[%s203 + $0x1350] sm:$0xff]
        %v912 = vld [vmem:[%s203 + $0x1358] sm:$0xff]
        %v913 = vld [vmem:[%s203 + $0x1360] sm:$0xff]
        %v914 = vld [vmem:[%s203 + $0x1368] sm:$0xff]
        %v915 = vld [vmem:[%s203 + $0x1370] sm:$0xff]
        %v916 = vld [vmem:[%s203 + $0x1378] sm:$0xff]
        %v917 = vld [vmem:[%s203 + $0x1380] sm:$0xff]
        %v918 = vld [vmem:[%s203 + $0x1388] sm:$0xff]
        %v919 = vld [vmem:[%s203 + $0x1390] sm:$0xff]
        %v920 = vld [vmem:[%s203 + $0x1398] sm:$0xff]
        %v921 = vld [vmem:[%s203 + $0x13a0] sm:$0xff]
        %v922 = vld [vmem:[%s203 + $0x13a8] sm:$0xff]
        %v923 = vld [vmem:[%s203 + $0x13b0] sm:$0xff]
        %v924 = vld [vmem:[%s203 + $0x13b8] sm:$0xff]
        %v925 = vld [vmem:[%s203 + $0x13c0] sm:$0xff]
        %v926 = vld [vmem:[%s203 + $0x13c8] sm:$0xff]
        %v927 = vld [vmem:[%s203 + $0x13d0] sm:$0xff]
        %v928 = vld [vmem:[%s203 + $0x13d8] sm:$0xff]
        %v929 = vld [vmem:[%s203 + $0x13e0] sm:$0xff]
        %v930 = vld [vmem:[%s203 + $0x13e8] sm:$0xff]
        %v931 = vld [vmem:[%s203 + $0x13f0] sm:$0xff]
        %v932 = vld [vmem:[%s203 + $0x13f8] sm:$0xff]
        %v933 = vld [vmem:[%s203 + $0x1400] sm:$0xff]
        %v934 = vld [vmem:[%s203 + $0x1408] sm:$0xff]
        %v935 = vld [vmem:[%s203 + $0x1410] sm:$0xff]
        %v936 = vld [vmem:[%s203 + $0x1418] sm:$0xff]
        %v937 = vld [vmem:[%s203 + $0x1420] sm:$0xff]
        %v938 = vld [vmem:[%s203 + $0x1428] sm:$0xff]
        %v939 = vld [vmem:[%s203 + $0x1430] sm:$0xff]
        %v940 = vld [vmem:[%s203 + $0x1438] sm:$0xff]
        %v941 = vld [vmem:[%s203 + $0x1440] sm:$0xff]
        %v942 = vld [vmem:[%s203 + $0x1448] sm:$0xff]
        %v943 = vld [vmem:[%s203 + $0x1450] sm:$0xff]
        %v944 = vld [vmem:[%s203 + $0x1458] sm:$0xff]
        %v945 = vld [vmem:[%s203 + $0x1460] sm:$0xff]
        %v946 = vld [vmem:[%s203 + $0x1468] sm:$0xff]
        %v947 = vld [vmem:[%s203 + $0x1470] sm:$0xff]
        %v948 = vld [vmem:[%s203 + $0x1478] sm:$0xff]
        %v949 = vld [vmem:[%s203 + $0x1480] sm:$0xff]
        %v950 = vld [vmem:[%s203 + $0x1488] sm:$0xff]
        %v951 = vld [vmem:[%s203 + $0x1490] sm:$0xff]
        %v952 = vld [vmem:[%s203 + $0x1498] sm:$0xff]
        %v953 = vld [vmem:[%s203 + $0x14a0] sm:$0xff]
        %v954 = vld [vmem:[%s203 + $0x14a8] sm:$0xff]
        %v955 = vld [vmem:[%s203 + $0x14b0] sm:$0xff]
        %v956 = vld [vmem:[%s203 + $0x14b8] sm:$0xff]
        %v957 = vld [vmem:[%s203 + $0x14c0] sm:$0xff]
        %v958 = vld [vmem:[%s203 + $0x14c8] sm:$0xff]
        %v959 = vld [vmem:[%s203 + $0x14d0] sm:$0xff]
        %v960 = vld [vmem:[%s203 + $0x14d8] sm:$0xff]
        %v961 = vld [vmem:[%s203 + $0x14e0] sm:$0xff]
        %v962 = vld [vmem:[%s203 + $0x14e8] sm:$0xff]
        %v963 = vld [vmem:[%s203 + $0x14f0] sm:$0xff]
        %v964 = vld [vmem:[%s203 + $0x14f8] sm:$0xff]
        %v965 = vld [vmem:[%s203 + $0x1500] sm:$0xff]
        %v966 = vld [vmem:[%s203 + $0x1508] sm:$0xff]
        %v967 = vld [vmem:[%s203 + $0x1510] sm:$0xff]
        %v968 = vld [vmem:[%s203 + $0x1518] sm:$0xff]
        %v969 = vld [vmem:[%s203 + $0x1520] sm:$0xff]
        %v970 = vld [vmem:[%s203 + $0x1528] sm:$0xff]
        %v971 = vld [vmem:[%s203 + $0x1530] sm:$0xff]
        %v972 = vld [vmem:[%s203 + $0x1538] sm:$0xff]
        %v973 = vld [vmem:[%s203 + $0x1540] sm:$0xff]
        %v974 = vld [vmem:[%s203 + $0x1548] sm:$0xff]
        %v975 = vld [vmem:[%s203 + $0x1550] sm:$0xff]
        %v976 = vld [vmem:[%s203 + $0x1558] sm:$0xff]
        %v977 = vld [vmem:[%s203 + $0x1560] sm:$0xff]
        %v978 = vld [vmem:[%s203 + $0x1568] sm:$0xff]
        %v979 = vld [vmem:[%s203 + $0x1570] sm:$0xff]
        %v980 = vld [vmem:[%s203 + $0x1578] sm:$0xff]
        %v981 = vld [vmem:[%s203 + $0x1580] sm:$0xff]
        %v982 = vld [vmem:[%s203 + $0x1588] sm:$0xff]
        %v983 = vld [vmem:[%s203 + $0x1590] sm:$0xff]
        %v984 = vld [vmem:[%s203 + $0x1598] sm:$0xff]
        %v985 = vld [vmem:[%s203 + $0x15a0] sm:$0xff]
        %v986 = vld [vmem:[%s203 + $0x15a8] sm:$0xff]
        %v987 = vld [vmem:[%s203 + $0x15b0] sm:$0xff]
        %v988 = vld [vmem:[%s203 + $0x15b8] sm:$0xff]
        %v989 = vld [vmem:[%s203 + $0x15c0] sm:$0xff]
        %v990 = vld [vmem:[%s203 + $0x15c8] sm:$0xff]
        %v991 = vld [vmem:[%s203 + $0x15d0] sm:$0xff]
        %v992 = vld [vmem:[%s203 + $0x15d8] sm:$0xff]
        %v993 = vld [vmem:[%s203 + $0x15e0] sm:$0xff]
        %v994 = vld [vmem:[%s203 + $0x15e8] sm:$0xff]
        %v995 = vld [vmem:[%s203 + $0x15f0] sm:$0xff]
        %v996 = vld [vmem:[%s203 + $0x15f8] sm:$0xff]
        %v997 = vld [vmem:[%s203 + $0x1600] sm:$0xff]
        %v998 = vld [vmem:[%s203 + $0x1608] sm:$0xff]
        %v999 = vld [vmem:[%s203 + $0x1610] sm:$0xff]
        %v1000 = vld [vmem:[%s203 + $0x1618] sm:$0xff]
        %v1001 = vld [vmem:[%s203 + $0x1620] sm:$0xff]
        %v1002 = vld [vmem:[%s203 + $0x1628] sm:$0xff]
        %v1003 = vld [vmem:[%s203 + $0x1630] sm:$0xff]
        %v1004 = vld [vmem:[%s203 + $0x1638] sm:$0xff]
        %v1005 = vld [vmem:[%s203 + $0x1640] sm:$0xff]
        %v1006 = vld [vmem:[%s203 + $0x1648] sm:$0xff]
        %v1007 = vld [vmem:[%s203 + $0x1650] sm:$0xff]
        %v1008 = vld [vmem:[%s203 + $0x1658] sm:$0xff]
        %v1009 = vld [vmem:[%s203 + $0x1660] sm:$0xff]
        %v1010 = vld [vmem:[%s203 + $0x1668] sm:$0xff]
        %v1011 = vld [vmem:[%s203 + $0x1670] sm:$0xff]
        %v1012 = vld [vmem:[%s203 + $0x1678] sm:$0xff]
        %v1013 = vld [vmem:[%s203 + $0x1680] sm:$0xff]
        %v1014 = vld [vmem:[%s203 + $0x1688] sm:$0xff]
        %v1015 = vld [vmem:[%s203 + $0x1690] sm:$0xff]
        %v1016 = vld [vmem:[%s203 + $0x1698] sm:$0xff]
        %v1017 = vld [vmem:[%s203 + $0x16a0] sm:$0xff]
        %v1018 = vld [vmem:[%s203 + $0x16a8] sm:$0xff]
        %v1019 = vld [vmem:[%s203 + $0x16b0] sm:$0xff]
        %v1020 = vld [vmem:[%s203 + $0x16b8] sm:$0xff]
        %v1021 = vld [vmem:[%s203 + $0x16c0] sm:$0xff]
        %v1022 = vld [vmem:[%s203 + $0x16c8] sm:$0xff]
        %v1023 = vld [vmem:[%s203 + $0x16d0] sm:$0xff]
        %v1024 = vld [vmem:[%s203 + $0x16d8] sm:$0xff]
        %v1025 = vld [vmem:[%s203 + $0x16e0] sm:$0xff]
        %v1026 = vld [vmem:[%s203 + $0x16e8] sm:$0xff]
        %v1027 = vld [vmem:[%s203 + $0x16f0] sm:$0xff]
        %v1028 = vld [vmem:[%s203 + $0x16f8] sm:$0xff]
        %v1029 = vld [vmem:[%s203 + $0x1700] sm:$0xff]
        %v1030 = vld [vmem:[%s203 + $0x1708] sm:$0xff]
        %v1031 = vld [vmem:[%s203 + $0x1710] sm:$0xff]
        %v1032 = vld [vmem:[%s203 + $0x1718] sm:$0xff]
        %v1033 = vld [vmem:[%s203 + $0x1720] sm:$0xff]
        %v1034 = vld [vmem:[%s203 + $0x1728] sm:$0xff]
        %v1035 = vld [vmem:[%s203 + $0x1730] sm:$0xff]
        %v1036 = vld [vmem:[%s203 + $0x1738] sm:$0xff]
        %v1037 = vld [vmem:[%s203 + $0x1740] sm:$0xff]
        %v1038 = vld [vmem:[%s203 + $0x1748] sm:$0xff]
        %v1039 = vld [vmem:[%s203 + $0x1750] sm:$0xff]
        %v1040 = vld [vmem:[%s203 + $0x1758] sm:$0xff]
        %v1041 = vld [vmem:[%s203 + $0x1760] sm:$0xff]
        %v1042 = vld [vmem:[%s203 + $0x1768] sm:$0xff]
        %v1043 = vld [vmem:[%s203 + $0x1770] sm:$0xff]
        %v1044 = vld [vmem:[%s203 + $0x1778] sm:$0xff]
        %v1045 = vld [vmem:[%s203 + $0x1780] sm:$0xff]
        %v1046 = vld [vmem:[%s203 + $0x1788] sm:$0xff]
        %v1047 = vld [vmem:[%s203 + $0x1790] sm:$0xff]
        %v1048 = vld [vmem:[%s203 + $0x1798] sm:$0xff]
        %v1049 = vld [vmem:[%s203 + $0x17a0] sm:$0xff]
        %v1050 = vld [vmem:[%s203 + $0x17a8] sm:$0xff]
        %v1051 = vld [vmem:[%s203 + $0x17b0] sm:$0xff]
        %v1052 = vld [vmem:[%s203 + $0x17b8] sm:$0xff]
        %v1053 = vld [vmem:[%s203 + $0x17c0] sm:$0xff]
        %v1054 = vld [vmem:[%s203 + $0x17c8] sm:$0xff]
        %v1055 = vld [vmem:[%s203 + $0x17d0] sm:$0xff]
        %v1056 = vld [vmem:[%s203 + $0x17d8] sm:$0xff]
        %v1057 = vld [vmem:[%s203 + $0x17e0] sm:$0xff]
        %v1058 = vld [vmem:[%s203 + $0x17e8] sm:$0xff]
        %v1059 = vld [vmem:[%s203 + $0x17f0] sm:$0xff]
        %v1060 = vld [vmem:[%s203 + $0x17f8] sm:$0xff]
        %v1061 = vld [vmem:[%s203 + $0x1800] sm:$0xff]
        %v1062 = vld [vmem:[%s203 + $0x1808] sm:$0xff]
        %v1063 = vld [vmem:[%s203 + $0x1810] sm:$0xff]
        %v1064 = vld [vmem:[%s203 + $0x1818] sm:$0xff]
        %v1065 = vld [vmem:[%s203 + $0x1820] sm:$0xff]
        %v1066 = vld [vmem:[%s203 + $0x1828] sm:$0xff]
        %v1067 = vld [vmem:[%s203 + $0x1830] sm:$0xff]
        %v1068 = vld [vmem:[%s203 + $0x1838] sm:$0xff]
        %v1069 = vld [vmem:[%s203 + $0x1840] sm:$0xff]
        %v1070 = vld [vmem:[%s203 + $0x1848] sm:$0xff]
        %v1071 = vld [vmem:[%s203 + $0x1850] sm:$0xff]
        %v1072 = vld [vmem:[%s203 + $0x1858] sm:$0xff]
        %v1073 = vld [vmem:[%s203 + $0x1860] sm:$0xff]
        %v1074 = vld [vmem:[%s203 + $0x1868] sm:$0xff]
        %v1075 = vld [vmem:[%s203 + $0x1870] sm:$0xff]
        %v1076 = vld [vmem:[%s203 + $0x1878] sm:$0xff]
        %v1077 = vld [vmem:[%s203 + $0x1880] sm:$0xff]
        %v1078 = vld [vmem:[%s203 + $0x1888] sm:$0xff]
        %v1079 = vld [vmem:[%s203 + $0x1890] sm:$0xff]
        %v1080 = vld [vmem:[%s203 + $0x1898] sm:$0xff]
        %v1081 = vld [vmem:[%s203 + $0x18a0] sm:$0xff]
        %v1082 = vld [vmem:[%s203 + $0x18a8] sm:$0xff]
        %v1083 = vld [vmem:[%s203 + $0x18b0] sm:$0xff]
        %v1084 = vld [vmem:[%s203 + $0x18b8] sm:$0xff]
        %v1085 = vld [vmem:[%s203 + $0x18c0] sm:$0xff]
        %v1086 = vld [vmem:[%s203 + $0x18c8] sm:$0xff]
        %v1087 = vld [vmem:[%s203 + $0x18d0] sm:$0xff]
        %v1088 = vld [vmem:[%s203 + $0x18d8] sm:$0xff]
        %v1089 = vld [vmem:[%s203 + $0x18e0] sm:$0xff]
        %v1090 = vld [vmem:[%s203 + $0x18e8] sm:$0xff]
        %v1091 = vld [vmem:[%s203 + $0x18f0] sm:$0xff]
        %v1092 = vld [vmem:[%s203 + $0x18f8] sm:$0xff]
        %v1093 = vld [vmem:[%s203 + $0x1900] sm:$0xff]
        %v1094 = vld [vmem:[%s203 + $0x1908] sm:$0xff]
        %v1095 = vld [vmem:[%s203 + $0x1910] sm:$0xff]
        %v1096 = vld [vmem:[%s203 + $0x1918] sm:$0xff]
        %v1097 = vld [vmem:[%s203 + $0x1920] sm:$0xff]
        %v1098 = vld [vmem:[%s203 + $0x1928] sm:$0xff]
        %v1099 = vld [vmem:[%s203 + $0x1930] sm:$0xff]
        %v1100 = vld [vmem:[%s203 + $0x1938] sm:$0xff]
        %v1101 = vld [vmem:[%s203 + $0x1940] sm:$0xff]
        %v1102 = vld [vmem:[%s203 + $0x1948] sm:$0xff]
        %v1103 = vld [vmem:[%s203 + $0x1950] sm:$0xff]
        %v1104 = vld [vmem:[%s203 + $0x1958] sm:$0xff]
        %v1105 = vld [vmem:[%s203 + $0x1960] sm:$0xff]
        %v1106 = vld [vmem:[%s203 + $0x1968] sm:$0xff]
        %v1107 = vld [vmem:[%s203 + $0x1970] sm:$0xff]
        %v1108 = vld [vmem:[%s203 + $0x1978] sm:$0xff]
        %v1109 = vld [vmem:[%s203 + $0x1980] sm:$0xff]
        %v1110 = vld [vmem:[%s203 + $0x1988] sm:$0xff]
        %v1111 = vld [vmem:[%s203 + $0x1990] sm:$0xff]
        %v1112 = vld [vmem:[%s203 + $0x1998] sm:$0xff]
        %v1113 = vld [vmem:[%s203 + $0x19a0] sm:$0xff]
        %v1114 = vld [vmem:[%s203 + $0x19a8] sm:$0xff]
        %v1115 = vld [vmem:[%s203 + $0x19b0] sm:$0xff]
        %v1116 = vld [vmem:[%s203 + $0x19b8] sm:$0xff]
        %v1117 = vld [vmem:[%s203 + $0x19c0] sm:$0xff]
        %v1118 = vld [vmem:[%s203 + $0x19c8] sm:$0xff]
        %v1119 = vld [vmem:[%s203 + $0x19d0] sm:$0xff]
        %v1120 = vld [vmem:[%s203 + $0x19d8] sm:$0xff]
        %v1121 = vld [vmem:[%s203 + $0x19e0] sm:$0xff]
        %v1122 = vld [vmem:[%s203 + $0x19e8] sm:$0xff]
        %v1123 = vld [vmem:[%s203 + $0x19f0] sm:$0xff]
        %v1124 = vld [vmem:[%s203 + $0x19f8] sm:$0xff]
        %v1125 = vld [vmem:[%s203 + $0x1a00] sm:$0xff]
        %v1126 = vld [vmem:[%s203 + $0x1a08] sm:$0xff]
        %v1127 = vld [vmem:[%s203 + $0x1a10] sm:$0xff]
        %v1128 = vld [vmem:[%s203 + $0x1a18] sm:$0xff]
        %v1129 = vld [vmem:[%s203 + $0x1a20] sm:$0xff]
        %v1130 = vld [vmem:[%s203 + $0x1a28] sm:$0xff]
        %v1131 = vld [vmem:[%s203 + $0x1a30] sm:$0xff]
        %v1132 = vld [vmem:[%s203 + $0x1a38] sm:$0xff]
        %v1133 = vld [vmem:[%s203 + $0x1a40] sm:$0xff]
        %v1134 = vld [vmem:[%s203 + $0x1a48] sm:$0xff]
        %v1135 = vld [vmem:[%s203 + $0x1a50] sm:$0xff]
        %v1136 = vld [vmem:[%s203 + $0x1a58] sm:$0xff]
        %v1137 = vld [vmem:[%s203 + $0x1a60] sm:$0xff]
        %v1138 = vld [vmem:[%s203 + $0x1a68] sm:$0xff]
        %v1139 = vld [vmem:[%s203 + $0x1a70] sm:$0xff]
        %v1140 = vld [vmem:[%s203 + $0x1a78] sm:$0xff]
        %v1141 = vld [vmem:[%s203 + $0x1a80] sm:$0xff]
        %v1142 = vld [vmem:[%s203 + $0x1a88] sm:$0xff]
        %v1143 = vld [vmem:[%s203 + $0x1a90] sm:$0xff]
        %v1144 = vld [vmem:[%s203 + $0x1a98] sm:$0xff]
        %v1145 = vld [vmem:[%s203 + $0x1aa0] sm:$0xff]
        %v1146 = vld [vmem:[%s203 + $0x1aa8] sm:$0xff]
        %v1147 = vld [vmem:[%s203 + $0x1ab0] sm:$0xff]
        %v1148 = vld [vmem:[%s203 + $0x1ab8] sm:$0xff]
        %v1149 = vld [vmem:[%s203 + $0x1ac0] sm:$0xff]
        %v1150 = vld [vmem:[%s203 + $0x1ac8] sm:$0xff]
        %v1151 = vld [vmem:[%s203 + $0x1ad0] sm:$0xff]
        %v1152 = vld [vmem:[%s203 + $0x1ad8] sm:$0xff]
        %v1153 = vld [vmem:[%s203 + $0x1ae0] sm:$0xff]
        %v1154 = vld [vmem:[%s203 + $0x1ae8] sm:$0xff]
        %v1155 = vld [vmem:[%s203 + $0x1af0] sm:$0xff]
        %v1156 = vld [vmem:[%s203 + $0x1af8] sm:$0xff]
        %v1157 = vld [vmem:[%s203 + $0x1b00] sm:$0xff]
        %v1158 = vld [vmem:[%s203 + $0x1b08] sm:$0xff]
        %v1159 = vld [vmem:[%s203 + $0x1b10] sm:$0xff]
        %v1160 = vld [vmem:[%s203 + $0x1b18] sm:$0xff]
        %v1161 = vld [vmem:[%s203 + $0x1b20] sm:$0xff]
        %v1162 = vld [vmem:[%s203 + $0x1b28] sm:$0xff]
        %v1163 = vld [vmem:[%s203 + $0x1b30] sm:$0xff]
        %v1164 = vld [vmem:[%s203 + $0x1b38] sm:$0xff]
        %v1165 = vld [vmem:[%s203 + $0x1b40] sm:$0xff]
        %v1166 = vld [vmem:[%s203 + $0x1b48] sm:$0xff]
        %v1167 = vld [vmem:[%s203 + $0x1b50] sm:$0xff]
        %v1168 = vld [vmem:[%s203 + $0x1b58] sm:$0xff]
        %v1169 = vld [vmem:[%s203 + $0x1b60] sm:$0xff]
        %v1170 = vld [vmem:[%s203 + $0x1b68] sm:$0xff]
        %v1171 = vld [vmem:[%s203 + $0x1b70] sm:$0xff]
        %v1172 = vld [vmem:[%s203 + $0x1b78] sm:$0xff]
        %v1173 = vld [vmem:[%s203 + $0x1b80] sm:$0xff]
        %v1174 = vld [vmem:[%s203 + $0x1b88] sm:$0xff]
        %v1175 = vld [vmem:[%s203 + $0x1b90] sm:$0xff]
        %v1176 = vld [vmem:[%s203 + $0x1b98] sm:$0xff]
        %v1177 = vld [vmem:[%s203 + $0x1ba0] sm:$0xff]
        %v1178 = vld [vmem:[%s203 + $0x1ba8] sm:$0xff]
        %v1179 = vld [vmem:[%s203 + $0x1bb0] sm:$0xff]
        %v1180 = vld [vmem:[%s203 + $0x1bb8] sm:$0xff]
        %v1181 = vld [vmem:[%s203 + $0x1bc0] sm:$0xff]
        %v1182 = vld [vmem:[%s203 + $0x1bc8] sm:$0xff]
        %v1183 = vld [vmem:[%s203 + $0x1bd0] sm:$0xff]
        %v1184 = vld [vmem:[%s203 + $0x1bd8] sm:$0xff]
        %v1185 = vld [vmem:[%s203 + $0x1be0] sm:$0xff]
        %v1186 = vld [vmem:[%s203 + $0x1be8] sm:$0xff]
        %v1187 = vld [vmem:[%s203 + $0x1bf0] sm:$0xff]
        %v1188 = vld [vmem:[%s203 + $0x1bf8] sm:$0xff]
        %v1189 = vld [vmem:[%s203 + $0x1c00] sm:$0xff]
        %v1190 = vld [vmem:[%s203 + $0x1c08] sm:$0xff]
        %v1191 = vld [vmem:[%s203 + $0x1c10] sm:$0xff]
        %v1192 = vld [vmem:[%s203 + $0x1c18] sm:$0xff]
        %v1193 = vld [vmem:[%s203 + $0x1c20] sm:$0xff]
        %v1194 = vld [vmem:[%s203 + $0x1c28] sm:$0xff]
        %v1195 = vld [vmem:[%s203 + $0x1c30] sm:$0xff]
        %v1196 = vld [vmem:[%s203 + $0x1c38] sm:$0xff]
        %v1197 = vld [vmem:[%s203 + $0x1c40] sm:$0xff]
        %v1198 = vld [vmem:[%s203 + $0x1c48] sm:$0xff]
        %v1199 = vld [vmem:[%s203 + $0x1c50] sm:$0xff]
        %v1200 = vld [vmem:[%s203 + $0x1c58] sm:$0xff]
        %v1201 = vld [vmem:[%s203 + $0x1c60] sm:$0xff]
        %v1202 = vld [vmem:[%s203 + $0x1c68] sm:$0xff]
        %v1203 = vld [vmem:[%s203 + $0x1c70] sm:$0xff]
        %v1204 = vld [vmem:[%s203 + $0x1c78] sm:$0xff]
        %v1205 = vld [vmem:[%s203 + $0x1c80] sm:$0xff]
        %v1206 = vld [vmem:[%s203 + $0x1c88] sm:$0xff]
        %v1207 = vld [vmem:[%s203 + $0x1c90] sm:$0xff]
        %v1208 = vld [vmem:[%s203 + $0x1c98] sm:$0xff]
        %v1209 = vld [vmem:[%s203 + $0x1ca0] sm:$0xff]
        %v1210 = vld [vmem:[%s203 + $0x1ca8] sm:$0xff]
        %v1211 = vld [vmem:[%s203 + $0x1cb0] sm:$0xff]
        %v1212 = vld [vmem:[%s203 + $0x1cb8] sm:$0xff]
        %v1213 = vld [vmem:[%s203 + $0x1cc0] sm:$0xff]
        %v1214 = vld [vmem:[%s203 + $0x1cc8] sm:$0xff]
        %v1215 = vld [vmem:[%s203 + $0x1cd0] sm:$0xff]
        %v1216 = vld [vmem:[%s203 + $0x1cd8] sm:$0xff]
        %v1217 = vld [vmem:[%s203 + $0x1ce0] sm:$0xff]
        %v1218 = vld [vmem:[%s203 + $0x1ce8] sm:$0xff]
        %v1219 = vld [vmem:[%s203 + $0x1cf0] sm:$0xff]
        %v1220 = vld [vmem:[%s203 + $0x1cf8] sm:$0xff]
        %v1221 = vld [vmem:[%s203 + $0x1d00] sm:$0xff]
        %v1222 = vld [vmem:[%s203 + $0x1d08] sm:$0xff]
        %v1223 = vld [vmem:[%s203 + $0x1d10] sm:$0xff]
        %v1224 = vld [vmem:[%s203 + $0x1d18] sm:$0xff]
        %v1225 = vld [vmem:[%s203 + $0x1d20] sm:$0xff]
        %v1226 = vld [vmem:[%s203 + $0x1d28] sm:$0xff]
        %v1227 = vld [vmem:[%s203 + $0x1d30] sm:$0xff]
        %v1228 = vld [vmem:[%s203 + $0x1d38] sm:$0xff]
        %v1229 = vld [vmem:[%s203 + $0x1d40] sm:$0xff]
        %v1230 = vld [vmem:[%s203 + $0x1d48] sm:$0xff]
        %v1231 = vld [vmem:[%s203 + $0x1d50] sm:$0xff]
        %v1232 = vld [vmem:[%s203 + $0x1d58] sm:$0xff]
        %v1233 = vld [vmem:[%s203 + $0x1d60] sm:$0xff]
        %v1234 = vld [vmem:[%s203 + $0x1d68] sm:$0xff]
        %v1235 = vld [vmem:[%s203 + $0x1d70] sm:$0xff]
        %v1236 = vld [vmem:[%s203 + $0x1d78] sm:$0xff]
        %v1237 = vld [vmem:[%s203 + $0x1d80] sm:$0xff]
        %v1238 = vld [vmem:[%s203 + $0x1d88] sm:$0xff]
        %v1239 = vld [vmem:[%s203 + $0x1d90] sm:$0xff]
        %v1240 = vld [vmem:[%s203 + $0x1d98] sm:$0xff]
        %v1241 = vld [vmem:[%s203 + $0x1da0] sm:$0xff]
        %v1242 = vld [vmem:[%s203 + $0x1da8] sm:$0xff]
        %v1243 = vld [vmem:[%s203 + $0x1db0] sm:$0xff]
        %v1244 = vld [vmem:[%s203 + $0x1db8] sm:$0xff]
        %v1245 = vld [vmem:[%s203 + $0x1dc0] sm:$0xff]
        %v1246 = vld [vmem:[%s203 + $0x1dc8] sm:$0xff]
        %v1247 = vld [vmem:[%s203 + $0x1dd0] sm:$0xff]
        %v1248 = vld [vmem:[%s203 + $0x1dd8] sm:$0xff]
        %v1249 = vld [vmem:[%s203 + $0x1de0] sm:$0xff]
        %v1250 = vld [vmem:[%s203 + $0x1de8] sm:$0xff]
        %v1251 = vld [vmem:[%s203 + $0x1df0] sm:$0xff]
        %v1252 = vld [vmem:[%s203 + $0x1df8] sm:$0xff]
        %v1253 = vld [vmem:[%s203 + $0x1e00] sm:$0xff]
        %v1254 = vld [vmem:[%s203 + $0x1e08] sm:$0xff]
        %v1255 = vld [vmem:[%s203 + $0x1e10] sm:$0xff]
        %v1256 = vld [vmem:[%s203 + $0x1e18] sm:$0xff]
        %v1257 = vld [vmem:[%s203 + $0x1e20] sm:$0xff]
        %v1258 = vld [vmem:[%s203 + $0x1e28] sm:$0xff]
        %v1259 = vld [vmem:[%s203 + $0x1e30] sm:$0xff]
        %v1260 = vld [vmem:[%s203 + $0x1e38] sm:$0xff]
        %v1261 = vld [vmem:[%s203 + $0x1e40] sm:$0xff]
        %v1262 = vld [vmem:[%s203 + $0x1e48] sm:$0xff]
        %v1263 = vld [vmem:[%s203 + $0x1e50] sm:$0xff]
        %v1264 = vld [vmem:[%s203 + $0x1e58] sm:$0xff]
        %v1265 = vld [vmem:[%s203 + $0x1e60] sm:$0xff]
        %v1266 = vld [vmem:[%s203 + $0x1e68] sm:$0xff]
        %v1267 = vld [vmem:[%s203 + $0x1e70] sm:$0xff]
        %v1268 = vld [vmem:[%s203 + $0x1e78] sm:$0xff]
        %v1269 = vld [vmem:[%s203 + $0x1e80] sm:$0xff]
        %v1270 = vld [vmem:[%s203 + $0x1e88] sm:$0xff]
        %v1271 = vld [vmem:[%s203 + $0x1e90] sm:$0xff]
        %v1272 = vld [vmem:[%s203 + $0x1e98] sm:$0xff]
        %v1273 = vld [vmem:[%s203 + $0x1ea0] sm:$0xff]
        %v1274 = vld [vmem:[%s203 + $0x1ea8] sm:$0xff]
        %v1275 = vld [vmem:[%s203 + $0x1eb0] sm:$0xff]
        %v1276 = vld [vmem:[%s203 + $0x1eb8] sm:$0xff]
        %v1277 = vld [vmem:[%s203 + $0x1ec0] sm:$0xff]
        %v1278 = vld [vmem:[%s203 + $0x1ec8] sm:$0xff]
        %v1279 = vld [vmem:[%s203 + $0x1ed0] sm:$0xff]
        %v1280 = vld [vmem:[%s203 + $0x1ed8] sm:$0xff]
        %v1281 = vld [vmem:[%s203 + $0x1ee0] sm:$0xff]
        %v1282 = vld [vmem:[%s203 + $0x1ee8] sm:$0xff]
        %v1283 = vld [vmem:[%s203 + $0x1ef0] sm:$0xff]
        %v1284 = vld [vmem:[%s203 + $0x1ef8] sm:$0xff]
        %v1285 = vld [vmem:[%s203 + $0x1f00] sm:$0xff]
        %v1286 = vld [vmem:[%s203 + $0x1f08] sm:$0xff]
        %v1287 = vld [vmem:[%s203 + $0x1f10] sm:$0xff]
        %v1288 = vld [vmem:[%s203 + $0x1f18] sm:$0xff]
        %v1289 = vld [vmem:[%s203 + $0x1f20] sm:$0xff]
        %v1290 = vld [vmem:[%s203 + $0x1f28] sm:$0xff]
        %v1291 = vld [vmem:[%s203 + $0x1f30] sm:$0xff]
        %v1292 = vld [vmem:[%s203 + $0x1f38] sm:$0xff]
        %v1293 = vld [vmem:[%s203 + $0x1f40] sm:$0xff]
        %v1294 = vld [vmem:[%s203 + $0x1f48] sm:$0xff]
        %v1295 = vld [vmem:[%s203 + $0x1f50] sm:$0xff]
        %v1296 = vld [vmem:[%s203 + $0x1f58] sm:$0xff]
        %v1297 = vld [vmem:[%s203 + $0x1f60] sm:$0xff]
        %v1298 = vld [vmem:[%s203 + $0x1f68] sm:$0xff]
        %v1299 = vld [vmem:[%s203 + $0x1f70] sm:$0xff]
        %v1300 = vld [vmem:[%s203 + $0x1f78] sm:$0xff]
        %v1301 = vld [vmem:[%s203 + $0x1f80] sm:$0xff]
        %v1302 = vld [vmem:[%s203 + $0x1f88] sm:$0xff]
        %v1303 = vld [vmem:[%s203 + $0x1f90] sm:$0xff]
        %v1304 = vld [vmem:[%s203 + $0x1f98] sm:$0xff]
        %v1305 = vld [vmem:[%s203 + $0x1fa0] sm:$0xff]
        %v1306 = vld [vmem:[%s203 + $0x1fa8] sm:$0xff]
        %v1307 = vld [vmem:[%s203 + $0x1fb0] sm:$0xff]
        %v1308 = vld [vmem:[%s203 + $0x1fb8] sm:$0xff]
        %v1309 = vld [vmem:[%s203 + $0x1fc0] sm:$0xff]
        %v1310 = vld [vmem:[%s203 + $0x1fc8] sm:$0xff]
        %v1311 = vld [vmem:[%s203 + $0x1fd0] sm:$0xff]
        %v1312 = vld [vmem:[%s203 + $0x1fd8] sm:$0xff]
        %v1313 = vld [vmem:[%s203 + $0x1fe0] sm:$0xff]
        %v1314 = vld [vmem:[%s203 + $0x1fe8] sm:$0xff]
        %v1315 = vld [vmem:[%s203 + $0x1ff0] sm:$0xff]
        %v1316 = vld [vmem:[%s203 + $0x1ff8] sm:$0xff]
        %v1317 = vld [vmem:[%s213] sm:$0xf]
        %v1319 = vperm.slane %v1317, 0
        %v1320 = vperm.slane %v1317, 1
        %v1321 = vperm.slane %v1317, 2
        %v1322 = vperm.slane %v1317, 3
        %1327 = vmatpush.msra.mxu0 %v353
        %1328 = vmatpush.msra.mxu0 %v349
        %1329 = vmatpush.msra.mxu0 %v345
        %1330 = vmatpush.msra.mxu0 %v341
        %1331 = vmatpush.msra.mxu0 %v337
        %1332 = vmatpush.msra.mxu0 %v333
        %1333 = vmatpush.msra.mxu0 %v329
        %1334 = vmatpush.msra.mxu0 %v325
        %1335 = vmatpush.msra.mxu0 %v321
        %1336 = vmatpush.msra.mxu0 %v317
        %1337 = vmatpush.msra.mxu0 %v313
        %1338 = vmatpush.msra.mxu0 %v309
        %1339 = vmatpush.msra.mxu0 %v305
        %1340 = vmatpush.msra.mxu0 %v301
        %1341 = vmatpush.msra.mxu0 %v297
        %1342 = vmatpush.msra.mxu0 %v293
        %1343 = vmatmul.f32.gmra.mxu0 %v277
        %v1344 = vpop.f32.mrf.mxu0
        %v1345 = vadd.f32 %v1319, %v1344
        %1346 = vdwg.mxu0
        %1347 = vmatpush.msra.mxu0 %v417
        %1348 = vmatpush.msra.mxu0 %v413
        %1349 = vmatpush.msra.mxu0 %v409
        %1350 = vmatpush.msra.mxu0 %v405
        %1351 = vmatpush.msra.mxu0 %v401
        %1352 = vmatpush.msra.mxu0 %v397
        %1353 = vmatpush.msra.mxu0 %v393
        %1354 = vmatpush.msra.mxu0 %v389
        %1355 = vmatpush.msra.mxu0 %v385
        %1356 = vmatpush.msra.mxu0 %v381
        %1357 = vmatpush.msra.mxu0 %v377
        %1358 = vmatpush.msra.mxu0 %v373
        %1359 = vmatpush.msra.mxu0 %v369
        %1360 = vmatpush.msra.mxu0 %v365
        %1361 = vmatpush.msra.mxu0 %v361
        %1362 = vmatpush.msra.mxu0 %v357
        %1363 = vmatmul.f32.gmra.mxu0 %v278
        %v1364 = vpop.f32.mrf.mxu0
        %v1365 = vadd.f32 %v1345, %v1364
        %1366 = vdwg.mxu0
        %1367 = vmatpush.msra.mxu0 %v481
        %1368 = vmatpush.msra.mxu0 %v477
        %1369 = vmatpush.msra.mxu0 %v473
        %1370 = vmatpush.msra.mxu0 %v469
        %1371 = vmatpush.msra.mxu0 %v465
        %1372 = vmatpush.msra.mxu0 %v461
        %1373 = vmatpush.msra.mxu0 %v457
        %1374 = vmatpush.msra.mxu0 %v453
        %1375 = vmatpush.msra.mxu0 %v449
        %1376 = vmatpush.msra.mxu0 %v445
        %1377 = vmatpush.msra.mxu0 %v441
        %1378 = vmatpush.msra.mxu0 %v437
        %1379 = vmatpush.msra.mxu0 %v433
        %1380 = vmatpush.msra.mxu0 %v429
        %1381 = vmatpush.msra.mxu0 %v425
        %1382 = vmatpush.msra.mxu0 %v421
        %1383 = vmatmul.f32.gmra.mxu0 %v279
        %v1384 = vpop.f32.mrf.mxu0
        %v1385 = vadd.f32 %v1365, %v1384
        %1386 = vdwg.mxu0
        %1387 = vmatpush.msra.mxu0 %v545
        %1388 = vmatpush.msra.mxu0 %v541
        %1389 = vmatpush.msra.mxu0 %v537
        %1390 = vmatpush.msra.mxu0 %v533
        %1391 = vmatpush.msra.mxu0 %v529
        %1392 = vmatpush.msra.mxu0 %v525
        %1393 = vmatpush.msra.mxu0 %v521
        %1394 = vmatpush.msra.mxu0 %v517
        %1395 = vmatpush.msra.mxu0 %v513
        %1396 = vmatpush.msra.mxu0 %v509
        %1397 = vmatpush.msra.mxu0 %v505
        %1398 = vmatpush.msra.mxu0 %v501
        %1399 = vmatpush.msra.mxu0 %v497
        %1400 = vmatpush.msra.mxu0 %v493
        %1401 = vmatpush.msra.mxu0 %v489
        %1402 = vmatpush.msra.mxu0 %v485
        %1403 = vmatmul.f32.gmra.mxu0 %v280
        %v1404 = vpop.f32.mrf.mxu0
        %v1405 = vadd.f32 %v1385, %v1404
        %1406 = vdwg.mxu0
        %1407 = vmatpush.msra.mxu0 %v609
        %1408 = vmatpush.msra.mxu0 %v605
        %1409 = vmatpush.msra.mxu0 %v601
        %1410 = vmatpush.msra.mxu0 %v597
        %1411 = vmatpush.msra.mxu0 %v593
        %1412 = vmatpush.msra.mxu0 %v589
        %1413 = vmatpush.msra.mxu0 %v585
        %1414 = vmatpush.msra.mxu0 %v581
        %1415 = vmatpush.msra.mxu0 %v577
        %1416 = vmatpush.msra.mxu0 %v573
        %1417 = vmatpush.msra.mxu0 %v569
        %1418 = vmatpush.msra.mxu0 %v565
        %1419 = vmatpush.msra.mxu0 %v561
        %1420 = vmatpush.msra.mxu0 %v557
        %1421 = vmatpush.msra.mxu0 %v553
        %1422 = vmatpush.msra.mxu0 %v549
        %1423 = vmatmul.f32.gmra.mxu0 %v281
        %v1424 = vpop.f32.mrf.mxu0
        %v1425 = vadd.f32 %v1405, %v1424
        %1426 = vdwg.mxu0
        %1427 = vmatpush.msra.mxu0 %v673
        %1428 = vmatpush.msra.mxu0 %v669
        %1429 = vmatpush.msra.mxu0 %v665
        %1430 = vmatpush.msra.mxu0 %v661
        %1431 = vmatpush.msra.mxu0 %v657
        %1432 = vmatpush.msra.mxu0 %v653
        %1433 = vmatpush.msra.mxu0 %v649
        %1434 = vmatpush.msra.mxu0 %v645
        %1435 = vmatpush.msra.mxu0 %v641
        %1436 = vmatpush.msra.mxu0 %v637
        %1437 = vmatpush.msra.mxu0 %v633
        %1438 = vmatpush.msra.mxu0 %v629
        %1439 = vmatpush.msra.mxu0 %v625
        %1440 = vmatpush.msra.mxu0 %v621
        %1441 = vmatpush.msra.mxu0 %v617
        %1442 = vmatpush.msra.mxu0 %v613
        %1443 = vmatmul.f32.gmra.mxu0 %v282
        %v1444 = vpop.f32.mrf.mxu0
        %v1445 = vadd.f32 %v1425, %v1444
        %1446 = vdwg.mxu0
        %1447 = vmatpush.msra.mxu0 %v737
        %1448 = vmatpush.msra.mxu0 %v733
        %1449 = vmatpush.msra.mxu0 %v729
        %1450 = vmatpush.msra.mxu0 %v725
        %1451 = vmatpush.msra.mxu0 %v721
        %1452 = vmatpush.msra.mxu0 %v717
        %1453 = vmatpush.msra.mxu0 %v713
        %1454 = vmatpush.msra.mxu0 %v709
        %1455 = vmatpush.msra.mxu0 %v705
        %1456 = vmatpush.msra.mxu0 %v701
        %1457 = vmatpush.msra.mxu0 %v697
        %1458 = vmatpush.msra.mxu0 %v693
        %1459 = vmatpush.msra.mxu0 %v689
        %1460 = vmatpush.msra.mxu0 %v685
        %1461 = vmatpush.msra.mxu0 %v681
        %1462 = vmatpush.msra.mxu0 %v677
        %1463 = vmatmul.f32.gmra.mxu0 %v283
        %v1464 = vpop.f32.mrf.mxu0
        %v1465 = vadd.f32 %v1445, %v1464
        %1466 = vdwg.mxu0
        %1467 = vmatpush.msra.mxu0 %v801
        %1468 = vmatpush.msra.mxu0 %v797
        %1469 = vmatpush.msra.mxu0 %v793
        %1470 = vmatpush.msra.mxu0 %v789
        %1471 = vmatpush.msra.mxu0 %v785
        %1472 = vmatpush.msra.mxu0 %v781
        %1473 = vmatpush.msra.mxu0 %v777
        %1474 = vmatpush.msra.mxu0 %v773
        %1475 = vmatpush.msra.mxu0 %v769
        %1476 = vmatpush.msra.mxu0 %v765
        %1477 = vmatpush.msra.mxu0 %v761
        %1478 = vmatpush.msra.mxu0 %v757
        %1479 = vmatpush.msra.mxu0 %v753
        %1480 = vmatpush.msra.mxu0 %v749
        %1481 = vmatpush.msra.mxu0 %v745
        %1482 = vmatpush.msra.mxu0 %v741
        %1483 = vmatmul.f32.gmra.mxu0 %v284
        %v1484 = vpop.f32.mrf.mxu0
        %v1485 = vadd.f32 %v1465, %v1484
        %1486 = vdwg.mxu0
        %1487 = vmatpush.msra.mxu0 %v865
        %1488 = vmatpush.msra.mxu0 %v861
        %1489 = vmatpush.msra.mxu0 %v857
        %1490 = vmatpush.msra.mxu0 %v853
        %1491 = vmatpush.msra.mxu0 %v849
        %1492 = vmatpush.msra.mxu0 %v845
        %1493 = vmatpush.msra.mxu0 %v841
        %1494 = vmatpush.msra.mxu0 %v837
        %1495 = vmatpush.msra.mxu0 %v833
        %1496 = vmatpush.msra.mxu0 %v829
        %1497 = vmatpush.msra.mxu0 %v825
        %1498 = vmatpush.msra.mxu0 %v821
        %1499 = vmatpush.msra.mxu0 %v817
        %1500 = vmatpush.msra.mxu0 %v813
        %1501 = vmatpush.msra.mxu0 %v809
        %1502 = vmatpush.msra.mxu0 %v805
        %1503 = vmatmul.f32.gmra.mxu0 %v285
        %v1504 = vpop.f32.mrf.mxu0
        %v1505 = vadd.f32 %v1485, %v1504
        %1506 = vdwg.mxu0
        %1507 = vmatpush.msra.mxu0 %v929
        %1508 = vmatpush.msra.mxu0 %v925
        %1509 = vmatpush.msra.mxu0 %v921
        %1510 = vmatpush.msra.mxu0 %v917
        %1511 = vmatpush.msra.mxu0 %v913
        %1512 = vmatpush.msra.mxu0 %v909
        %1513 = vmatpush.msra.mxu0 %v905
        %1514 = vmatpush.msra.mxu0 %v901
        %1515 = vmatpush.msra.mxu0 %v897
        %1516 = vmatpush.msra.mxu0 %v893
        %1517 = vmatpush.msra.mxu0 %v889
        %1518 = vmatpush.msra.mxu0 %v885
        %1519 = vmatpush.msra.mxu0 %v881
        %1520 = vmatpush.msra.mxu0 %v877
        %1521 = vmatpush.msra.mxu0 %v873
        %1522 = vmatpush.msra.mxu0 %v869
        %1523 = vmatmul.f32.gmra.mxu0 %v286
        %v1524 = vpop.f32.mrf.mxu0
        %v1525 = vadd.f32 %v1505, %v1524
        %1526 = vdwg.mxu0
        %1527 = vmatpush.msra.mxu0 %v993
        %1528 = vmatpush.msra.mxu0 %v989
        %1529 = vmatpush.msra.mxu0 %v985
        %1530 = vmatpush.msra.mxu0 %v981
        %1531 = vmatpush.msra.mxu0 %v977
        %1532 = vmatpush.msra.mxu0 %v973
        %1533 = vmatpush.msra.mxu0 %v969
        %1534 = vmatpush.msra.mxu0 %v965
        %1535 = vmatpush.msra.mxu0 %v961
        %1536 = vmatpush.msra.mxu0 %v957
        %1537 = vmatpush.msra.mxu0 %v953
        %1538 = vmatpush.msra.mxu0 %v949
        %1539 = vmatpush.msra.mxu0 %v945
        %1540 = vmatpush.msra.mxu0 %v941
        %1541 = vmatpush.msra.mxu0 %v937
        %1542 = vmatpush.msra.mxu0 %v933
        %1543 = vmatmul.f32.gmra.mxu0 %v287
        %v1544 = vpop.f32.mrf.mxu0
        %v1545 = vadd.f32 %v1525, %v1544
        %1546 = vdwg.mxu0
        %1547 = vmatpush.msra.mxu0 %v1057
        %1548 = vmatpush.msra.mxu0 %v1053
        %1549 = vmatpush.msra.mxu0 %v1049
        %1550 = vmatpush.msra.mxu0 %v1045
        %1551 = vmatpush.msra.mxu0 %v1041
        %1552 = vmatpush.msra.mxu0 %v1037
        %1553 = vmatpush.msra.mxu0 %v1033
        %1554 = vmatpush.msra.mxu0 %v1029
        %1555 = vmatpush.msra.mxu0 %v1025
        %1556 = vmatpush.msra.mxu0 %v1021
        %1557 = vmatpush.msra.mxu0 %v1017
        %1558 = vmatpush.msra.mxu0 %v1013
        %1559 = vmatpush.msra.mxu0 %v1009
        %1560 = vmatpush.msra.mxu0 %v1005
        %1561 = vmatpush.msra.mxu0 %v1001
        %1562 = vmatpush.msra.mxu0 %v997
        %1563 = vmatmul.f32.gmra.mxu0 %v288
        %v1564 = vpop.f32.mrf.mxu0
        %v1565 = vadd.f32 %v1545, %v1564
        %1566 = vdwg.mxu0
        %1567 = vmatpush.msra.mxu0 %v1121
        %1568 = vmatpush.msra.mxu0 %v1117
        %1569 = vmatpush.msra.mxu0 %v1113
        %1570 = vmatpush.msra.mxu0 %v1109
        %1571 = vmatpush.msra.mxu0 %v1105
        %1572 = vmatpush.msra.mxu0 %v1101
        %1573 = vmatpush.msra.mxu0 %v1097
        %1574 = vmatpush.msra.mxu0 %v1093
        %1575 = vmatpush.msra.mxu0 %v1089
        %1576 = vmatpush.msra.mxu0 %v1085
        %1577 = vmatpush.msra.mxu0 %v1081
        %1578 = vmatpush.msra.mxu0 %v1077
        %1579 = vmatpush.msra.mxu0 %v1073
        %1580 = vmatpush.msra.mxu0 %v1069
        %1581 = vmatpush.msra.mxu0 %v1065
        %1582 = vmatpush.msra.mxu0 %v1061
        %1583 = vmatmul.f32.gmra.mxu0 %v289
        %v1584 = vpop.f32.mrf.mxu0
        %v1585 = vadd.f32 %v1565, %v1584
        %1586 = vdwg.mxu0
        %1587 = vmatpush.msra.mxu0 %v1185
        %1588 = vmatpush.msra.mxu0 %v1181
        %1589 = vmatpush.msra.mxu0 %v1177
        %1590 = vmatpush.msra.mxu0 %v1173
        %1591 = vmatpush.msra.mxu0 %v1169
        %1592 = vmatpush.msra.mxu0 %v1165
        %1593 = vmatpush.msra.mxu0 %v1161
        %1594 = vmatpush.msra.mxu0 %v1157
        %1595 = vmatpush.msra.mxu0 %v1153
        %1596 = vmatpush.msra.mxu0 %v1149
        %1597 = vmatpush.msra.mxu0 %v1145
        %1598 = vmatpush.msra.mxu0 %v1141
        %1599 = vmatpush.msra.mxu0 %v1137
        %1600 = vmatpush.msra.mxu0 %v1133
        %1601 = vmatpush.msra.mxu0 %v1129
        %1602 = vmatpush.msra.mxu0 %v1125
        %1603 = vmatmul.f32.gmra.mxu0 %v290
        %v1604 = vpop.f32.mrf.mxu0
        %v1605 = vadd.f32 %v1585, %v1604
        %1606 = vdwg.mxu0
        %1607 = vmatpush.msra.mxu0 %v1249
        %1608 = vmatpush.msra.mxu0 %v1245
        %1609 = vmatpush.msra.mxu0 %v1241
        %1610 = vmatpush.msra.mxu0 %v1237
        %1611 = vmatpush.msra.mxu0 %v1233
        %1612 = vmatpush.msra.mxu0 %v1229
        %1613 = vmatpush.msra.mxu0 %v1225
        %1614 = vmatpush.msra.mxu0 %v1221
        %1615 = vmatpush.msra.mxu0 %v1217
        %1616 = vmatpush.msra.mxu0 %v1213
        %1617 = vmatpush.msra.mxu0 %v1209
        %1618 = vmatpush.msra.mxu0 %v1205
        %1619 = vmatpush.msra.mxu0 %v1201
        %1620 = vmatpush.msra.mxu0 %v1197
        %1621 = vmatpush.msra.mxu0 %v1193
        %1622 = vmatpush.msra.mxu0 %v1189
        %1623 = vmatmul.f32.gmra.mxu0 %v291
        %v1624 = vpop.f32.mrf.mxu0
        %v1625 = vadd.f32 %v1605, %v1624
        %1626 = vdwg.mxu0
        %1627 = vmatpush.msra.mxu0 %v1313
        %1628 = vmatpush.msra.mxu0 %v1309
        %1629 = vmatpush.msra.mxu0 %v1305
        %1630 = vmatpush.msra.mxu0 %v1301
        %1631 = vmatpush.msra.mxu0 %v1297
        %1632 = vmatpush.msra.mxu0 %v1293
        %1633 = vmatpush.msra.mxu0 %v1289
        %1634 = vmatpush.msra.mxu0 %v1285
        %1635 = vmatpush.msra.mxu0 %v1281
        %1636 = vmatpush.msra.mxu0 %v1277
        %1637 = vmatpush.msra.mxu0 %v1273
        %1638 = vmatpush.msra.mxu0 %v1269
        %1639 = vmatpush.msra.mxu0 %v1265
        %1640 = vmatpush.msra.mxu0 %v1261
        %1641 = vmatpush.msra.mxu0 %v1257
        %1642 = vmatpush.msra.mxu0 %v1253
        %1643 = vmatmul.f32.gmra.mxu0 %v292
        %v1644 = vpop.f32.mrf.mxu0
        %v1645 = vadd.f32 %v1625, %v1644
        %1646 = vdwg.mxu0
        %1647 = vmatpush.msra.mxu0 %v354
        %1648 = vmatpush.msra.mxu0 %v350
        %1649 = vmatpush.msra.mxu0 %v346
        %1650 = vmatpush.msra.mxu0 %v342
        %1651 = vmatpush.msra.mxu0 %v338
        %1652 = vmatpush.msra.mxu0 %v334
        %1653 = vmatpush.msra.mxu0 %v330
        %1654 = vmatpush.msra.mxu0 %v326
        %1655 = vmatpush.msra.mxu0 %v322
        %1656 = vmatpush.msra.mxu0 %v318
        %1657 = vmatpush.msra.mxu0 %v314
        %1658 = vmatpush.msra.mxu0 %v310
        %1659 = vmatpush.msra.mxu0 %v306
        %1660 = vmatpush.msra.mxu0 %v302
        %1661 = vmatpush.msra.mxu0 %v298
        %1662 = vmatpush.msra.mxu0 %v294
        %1663 = vmatmul.f32.gmra.mxu0 %v277
        %v1664 = vpop.f32.mrf.mxu0
        %v1665 = vadd.f32 %v1320, %v1664
        %1666 = vdwg.mxu0
        %1667 = vmatpush.msra.mxu0 %v418
        %1668 = vmatpush.msra.mxu0 %v414
        %1669 = vmatpush.msra.mxu0 %v410
        %1670 = vmatpush.msra.mxu0 %v406
        %1671 = vmatpush.msra.mxu0 %v402
        %1672 = vmatpush.msra.mxu0 %v398
        %1673 = vmatpush.msra.mxu0 %v394
        %1674 = vmatpush.msra.mxu0 %v390
        %1675 = vmatpush.msra.mxu0 %v386
        %1676 = vmatpush.msra.mxu0 %v382
        %1677 = vmatpush.msra.mxu0 %v378
        %1678 = vmatpush.msra.mxu0 %v374
        %1679 = vmatpush.msra.mxu0 %v370
        %1680 = vmatpush.msra.mxu0 %v366
        %1681 = vmatpush.msra.mxu0 %v362
        %1682 = vmatpush.msra.mxu0 %v358
        %1683 = vmatmul.f32.gmra.mxu0 %v278
        %v1684 = vpop.f32.mrf.mxu0
        %v1685 = vadd.f32 %v1665, %v1684
        %1686 = vdwg.mxu0
        %1687 = vmatpush.msra.mxu0 %v482
        %1688 = vmatpush.msra.mxu0 %v478
        %1689 = vmatpush.msra.mxu0 %v474
        %1690 = vmatpush.msra.mxu0 %v470
        %1691 = vmatpush.msra.mxu0 %v466
        %1692 = vmatpush.msra.mxu0 %v462
        %1693 = vmatpush.msra.mxu0 %v458
        %1694 = vmatpush.msra.mxu0 %v454
        %1695 = vmatpush.msra.mxu0 %v450
        %1696 = vmatpush.msra.mxu0 %v446
        %1697 = vmatpush.msra.mxu0 %v442
        %1698 = vmatpush.msra.mxu0 %v438
        %1699 = vmatpush.msra.mxu0 %v434
        %1700 = vmatpush.msra.mxu0 %v430
        %1701 = vmatpush.msra.mxu0 %v426
        %1702 = vmatpush.msra.mxu0 %v422
        %1703 = vmatmul.f32.gmra.mxu0 %v279
        %v1704 = vpop.f32.mrf.mxu0
        %v1705 = vadd.f32 %v1685, %v1704
        %1706 = vdwg.mxu0
        %1707 = vmatpush.msra.mxu0 %v546
        %1708 = vmatpush.msra.mxu0 %v542
        %1709 = vmatpush.msra.mxu0 %v538
        %1710 = vmatpush.msra.mxu0 %v534
        %1711 = vmatpush.msra.mxu0 %v530
        %1712 = vmatpush.msra.mxu0 %v526
        %1713 = vmatpush.msra.mxu0 %v522
        %1714 = vmatpush.msra.mxu0 %v518
        %1715 = vmatpush.msra.mxu0 %v514
        %1716 = vmatpush.msra.mxu0 %v510
        %1717 = vmatpush.msra.mxu0 %v506
        %1718 = vmatpush.msra.mxu0 %v502
        %1719 = vmatpush.msra.mxu0 %v498
        %1720 = vmatpush.msra.mxu0 %v494
        %1721 = vmatpush.msra.mxu0 %v490
        %1722 = vmatpush.msra.mxu0 %v486
        %1723 = vmatmul.f32.gmra.mxu0 %v280
        %v1724 = vpop.f32.mrf.mxu0
        %v1725 = vadd.f32 %v1705, %v1724
        %1726 = vdwg.mxu0
        %1727 = vmatpush.msra.mxu0 %v610
        %1728 = vmatpush.msra.mxu0 %v606
        %1729 = vmatpush.msra.mxu0 %v602
        %1730 = vmatpush.msra.mxu0 %v598
        %1731 = vmatpush.msra.mxu0 %v594
        %1732 = vmatpush.msra.mxu0 %v590
        %1733 = vmatpush.msra.mxu0 %v586
        %1734 = vmatpush.msra.mxu0 %v582
        %1735 = vmatpush.msra.mxu0 %v578
        %1736 = vmatpush.msra.mxu0 %v574
        %1737 = vmatpush.msra.mxu0 %v570
        %1738 = vmatpush.msra.mxu0 %v566
        %1739 = vmatpush.msra.mxu0 %v562
        %1740 = vmatpush.msra.mxu0 %v558
        %1741 = vmatpush.msra.mxu0 %v554
        %1742 = vmatpush.msra.mxu0 %v550
        %1743 = vmatmul.f32.gmra.mxu0 %v281
        %v1744 = vpop.f32.mrf.mxu0
        %v1745 = vadd.f32 %v1725, %v1744
        %1746 = vdwg.mxu0
        %1747 = vmatpush.msra.mxu0 %v674
        %1748 = vmatpush.msra.mxu0 %v670
        %1749 = vmatpush.msra.mxu0 %v666
        %1750 = vmatpush.msra.mxu0 %v662
        %1751 = vmatpush.msra.mxu0 %v658
        %1752 = vmatpush.msra.mxu0 %v654
        %1753 = vmatpush.msra.mxu0 %v650
        %1754 = vmatpush.msra.mxu0 %v646
        %1755 = vmatpush.msra.mxu0 %v642
        %1756 = vmatpush.msra.mxu0 %v638
        %1757 = vmatpush.msra.mxu0 %v634
        %1758 = vmatpush.msra.mxu0 %v630
        %1759 = vmatpush.msra.mxu0 %v626
        %1760 = vmatpush.msra.mxu0 %v622
        %1761 = vmatpush.msra.mxu0 %v618
        %1762 = vmatpush.msra.mxu0 %v614
        %1763 = vmatmul.f32.gmra.mxu0 %v282
        %v1764 = vpop.f32.mrf.mxu0
        %v1765 = vadd.f32 %v1745, %v1764
        %1766 = vdwg.mxu0
        %1767 = vmatpush.msra.mxu0 %v738
        %1768 = vmatpush.msra.mxu0 %v734
        %1769 = vmatpush.msra.mxu0 %v730
        %1770 = vmatpush.msra.mxu0 %v726
        %1771 = vmatpush.msra.mxu0 %v722
        %1772 = vmatpush.msra.mxu0 %v718
        %1773 = vmatpush.msra.mxu0 %v714
        %1774 = vmatpush.msra.mxu0 %v710
        %1775 = vmatpush.msra.mxu0 %v706
        %1776 = vmatpush.msra.mxu0 %v702
        %1777 = vmatpush.msra.mxu0 %v698
        %1778 = vmatpush.msra.mxu0 %v694
        %1779 = vmatpush.msra.mxu0 %v690
        %1780 = vmatpush.msra.mxu0 %v686
        %1781 = vmatpush.msra.mxu0 %v682
        %1782 = vmatpush.msra.mxu0 %v678
        %1783 = vmatmul.f32.gmra.mxu0 %v283
        %v1784 = vpop.f32.mrf.mxu0
        %v1785 = vadd.f32 %v1765, %v1784
        %1786 = vdwg.mxu0
        %1787 = vmatpush.msra.mxu0 %v802
        %1788 = vmatpush.msra.mxu0 %v798
        %1789 = vmatpush.msra.mxu0 %v794
        %1790 = vmatpush.msra.mxu0 %v790
        %1791 = vmatpush.msra.mxu0 %v786
        %1792 = vmatpush.msra.mxu0 %v782
        %1793 = vmatpush.msra.mxu0 %v778
        %1794 = vmatpush.msra.mxu0 %v774
        %1795 = vmatpush.msra.mxu0 %v770
        %1796 = vmatpush.msra.mxu0 %v766
        %1797 = vmatpush.msra.mxu0 %v762
        %1798 = vmatpush.msra.mxu0 %v758
        %1799 = vmatpush.msra.mxu0 %v754
        %1800 = vmatpush.msra.mxu0 %v750
        %1801 = vmatpush.msra.mxu0 %v746
        %1802 = vmatpush.msra.mxu0 %v742
        %1803 = vmatmul.f32.gmra.mxu0 %v284
        %v1804 = vpop.f32.mrf.mxu0
        %v1805 = vadd.f32 %v1785, %v1804
        %1806 = vdwg.mxu0
        %1807 = vmatpush.msra.mxu0 %v866
        %1808 = vmatpush.msra.mxu0 %v862
        %1809 = vmatpush.msra.mxu0 %v858
        %1810 = vmatpush.msra.mxu0 %v854
        %1811 = vmatpush.msra.mxu0 %v850
        %1812 = vmatpush.msra.mxu0 %v846
        %1813 = vmatpush.msra.mxu0 %v842
        %1814 = vmatpush.msra.mxu0 %v838
        %1815 = vmatpush.msra.mxu0 %v834
        %1816 = vmatpush.msra.mxu0 %v830
        %1817 = vmatpush.msra.mxu0 %v826
        %1818 = vmatpush.msra.mxu0 %v822
        %1819 = vmatpush.msra.mxu0 %v818
        %1820 = vmatpush.msra.mxu0 %v814
        %1821 = vmatpush.msra.mxu0 %v810
        %1822 = vmatpush.msra.mxu0 %v806
        %1823 = vmatmul.f32.gmra.mxu0 %v285
        %v1824 = vpop.f32.mrf.mxu0
        %v1825 = vadd.f32 %v1805, %v1824
        %1826 = vdwg.mxu0
        %1827 = vmatpush.msra.mxu0 %v930
        %1828 = vmatpush.msra.mxu0 %v926
        %1829 = vmatpush.msra.mxu0 %v922
        %1830 = vmatpush.msra.mxu0 %v918
        %1831 = vmatpush.msra.mxu0 %v914
        %1832 = vmatpush.msra.mxu0 %v910
        %1833 = vmatpush.msra.mxu0 %v906
        %1834 = vmatpush.msra.mxu0 %v902
        %1835 = vmatpush.msra.mxu0 %v898
        %1836 = vmatpush.msra.mxu0 %v894
        %1837 = vmatpush.msra.mxu0 %v890
        %1838 = vmatpush.msra.mxu0 %v886
        %1839 = vmatpush.msra.mxu0 %v882
        %1840 = vmatpush.msra.mxu0 %v878
        %1841 = vmatpush.msra.mxu0 %v874
        %1842 = vmatpush.msra.mxu0 %v870
        %1843 = vmatmul.f32.gmra.mxu0 %v286
        %v1844 = vpop.f32.mrf.mxu0
        %v1845 = vadd.f32 %v1825, %v1844
        %1846 = vdwg.mxu0
        %1847 = vmatpush.msra.mxu0 %v994
        %1848 = vmatpush.msra.mxu0 %v990
        %1849 = vmatpush.msra.mxu0 %v986
        %1850 = vmatpush.msra.mxu0 %v982
        %1851 = vmatpush.msra.mxu0 %v978
        %1852 = vmatpush.msra.mxu0 %v974
        %1853 = vmatpush.msra.mxu0 %v970
        %1854 = vmatpush.msra.mxu0 %v966
        %1855 = vmatpush.msra.mxu0 %v962
        %1856 = vmatpush.msra.mxu0 %v958
        %1857 = vmatpush.msra.mxu0 %v954
        %1858 = vmatpush.msra.mxu0 %v950
        %1859 = vmatpush.msra.mxu0 %v946
        %1860 = vmatpush.msra.mxu0 %v942
        %1861 = vmatpush.msra.mxu0 %v938
        %1862 = vmatpush.msra.mxu0 %v934
        %1863 = vmatmul.f32.gmra.mxu0 %v287
        %v1864 = vpop.f32.mrf.mxu0
        %v1865 = vadd.f32 %v1845, %v1864
        %1866 = vdwg.mxu0
        %1867 = vmatpush.msra.mxu0 %v1058
        %1868 = vmatpush.msra.mxu0 %v1054
        %1869 = vmatpush.msra.mxu0 %v1050
        %1870 = vmatpush.msra.mxu0 %v1046
        %1871 = vmatpush.msra.mxu0 %v1042
        %1872 = vmatpush.msra.mxu0 %v1038
        %1873 = vmatpush.msra.mxu0 %v1034
        %1874 = vmatpush.msra.mxu0 %v1030
        %1875 = vmatpush.msra.mxu0 %v1026
        %1876 = vmatpush.msra.mxu0 %v1022
        %1877 = vmatpush.msra.mxu0 %v1018
        %1878 = vmatpush.msra.mxu0 %v1014
        %1879 = vmatpush.msra.mxu0 %v1010
        %1880 = vmatpush.msra.mxu0 %v1006
        %1881 = vmatpush.msra.mxu0 %v1002
        %1882 = vmatpush.msra.mxu0 %v998
        %1883 = vmatmul.f32.gmra.mxu0 %v288
        %v1884 = vpop.f32.mrf.mxu0
        %v1885 = vadd.f32 %v1865, %v1884
        %1886 = vdwg.mxu0
        %1887 = vmatpush.msra.mxu0 %v1122
        %1888 = vmatpush.msra.mxu0 %v1118
        %1889 = vmatpush.msra.mxu0 %v1114
        %1890 = vmatpush.msra.mxu0 %v1110
        %1891 = vmatpush.msra.mxu0 %v1106
        %1892 = vmatpush.msra.mxu0 %v1102
        %1893 = vmatpush.msra.mxu0 %v1098
        %1894 = vmatpush.msra.mxu0 %v1094
        %1895 = vmatpush.msra.mxu0 %v1090
        %1896 = vmatpush.msra.mxu0 %v1086
        %1897 = vmatpush.msra.mxu0 %v1082
        %1898 = vmatpush.msra.mxu0 %v1078
        %1899 = vmatpush.msra.mxu0 %v1074
        %1900 = vmatpush.msra.mxu0 %v1070
        %1901 = vmatpush.msra.mxu0 %v1066
        %1902 = vmatpush.msra.mxu0 %v1062
        %1903 = vmatmul.f32.gmra.mxu0 %v289
        %v1904 = vpop.f32.mrf.mxu0
        %v1905 = vadd.f32 %v1885, %v1904
        %1906 = vdwg.mxu0
        %1907 = vmatpush.msra.mxu0 %v1186
        %1908 = vmatpush.msra.mxu0 %v1182
        %1909 = vmatpush.msra.mxu0 %v1178
        %1910 = vmatpush.msra.mxu0 %v1174
        %1911 = vmatpush.msra.mxu0 %v1170
        %1912 = vmatpush.msra.mxu0 %v1166
        %1913 = vmatpush.msra.mxu0 %v1162
        %1914 = vmatpush.msra.mxu0 %v1158
        %1915 = vmatpush.msra.mxu0 %v1154
        %1916 = vmatpush.msra.mxu0 %v1150
        %1917 = vmatpush.msra.mxu0 %v1146
        %1918 = vmatpush.msra.mxu0 %v1142
        %1919 = vmatpush.msra.mxu0 %v1138
        %1920 = vmatpush.msra.mxu0 %v1134
        %1921 = vmatpush.msra.mxu0 %v1130
        %1922 = vmatpush.msra.mxu0 %v1126
        %1923 = vmatmul.f32.gmra.mxu0 %v290
        %v1924 = vpop.f32.mrf.mxu0
        %v1925 = vadd.f32 %v1905, %v1924
        %1926 = vdwg.mxu0
        %1927 = vmatpush.msra.mxu0 %v1250
        %1928 = vmatpush.msra.mxu0 %v1246
        %1929 = vmatpush.msra.mxu0 %v1242
        %1930 = vmatpush.msra.mxu0 %v1238
        %1931 = vmatpush.msra.mxu0 %v1234
        %1932 = vmatpush.msra.mxu0 %v1230
        %1933 = vmatpush.msra.mxu0 %v1226
        %1934 = vmatpush.msra.mxu0 %v1222
        %1935 = vmatpush.msra.mxu0 %v1218
        %1936 = vmatpush.msra.mxu0 %v1214
        %1937 = vmatpush.msra.mxu0 %v1210
        %1938 = vmatpush.msra.mxu0 %v1206
        %1939 = vmatpush.msra.mxu0 %v1202
        %1940 = vmatpush.msra.mxu0 %v1198
        %1941 = vmatpush.msra.mxu0 %v1194
        %1942 = vmatpush.msra.mxu0 %v1190
        %1943 = vmatmul.f32.gmra.mxu0 %v291
        %v1944 = vpop.f32.mrf.mxu0
        %v1945 = vadd.f32 %v1925, %v1944
        %1946 = vdwg.mxu0
        %1947 = vmatpush.msra.mxu0 %v1314
        %1948 = vmatpush.msra.mxu0 %v1310
        %1949 = vmatpush.msra.mxu0 %v1306
        %1950 = vmatpush.msra.mxu0 %v1302
        %1951 = vmatpush.msra.mxu0 %v1298
        %1952 = vmatpush.msra.mxu0 %v1294
        %1953 = vmatpush.msra.mxu0 %v1290
        %1954 = vmatpush.msra.mxu0 %v1286
        %1955 = vmatpush.msra.mxu0 %v1282
        %1956 = vmatpush.msra.mxu0 %v1278
        %1957 = vmatpush.msra.mxu0 %v1274
        %1958 = vmatpush.msra.mxu0 %v1270
        %1959 = vmatpush.msra.mxu0 %v1266
        %1960 = vmatpush.msra.mxu0 %v1262
        %1961 = vmatpush.msra.mxu0 %v1258
        %1962 = vmatpush.msra.mxu0 %v1254
        %1963 = vmatmul.f32.gmra.mxu0 %v292
        %v1964 = vpop.f32.mrf.mxu0
        %v1965 = vadd.f32 %v1945, %v1964
        %1966 = vdwg.mxu0
        %1967 = vmatpush.msra.mxu0 %v355
        %1968 = vmatpush.msra.mxu0 %v351
        %1969 = vmatpush.msra.mxu0 %v347
        %1970 = vmatpush.msra.mxu0 %v343
        %1971 = vmatpush.msra.mxu0 %v339
        %1972 = vmatpush.msra.mxu0 %v335
        %1973 = vmatpush.msra.mxu0 %v331
        %1974 = vmatpush.msra.mxu0 %v327
        %1975 = vmatpush.msra.mxu0 %v323
        %1976 = vmatpush.msra.mxu0 %v319
        %1977 = vmatpush.msra.mxu0 %v315
        %1978 = vmatpush.msra.mxu0 %v311
        %1979 = vmatpush.msra.mxu0 %v307
        %1980 = vmatpush.msra.mxu0 %v303
        %1981 = vmatpush.msra.mxu0 %v299
        %1982 = vmatpush.msra.mxu0 %v295
        %1983 = vmatmul.f32.gmra.mxu0 %v277
        %v1984 = vpop.f32.mrf.mxu0
        %v1985 = vadd.f32 %v1321, %v1984
        %1986 = vdwg.mxu0
        %1987 = vmatpush.msra.mxu0 %v419
        %1988 = vmatpush.msra.mxu0 %v415
        %1989 = vmatpush.msra.mxu0 %v411
        %1990 = vmatpush.msra.mxu0 %v407
        %1991 = vmatpush.msra.mxu0 %v403
        %1992 = vmatpush.msra.mxu0 %v399
        %1993 = vmatpush.msra.mxu0 %v395
        %1994 = vmatpush.msra.mxu0 %v391
        %1995 = vmatpush.msra.mxu0 %v387
        %1996 = vmatpush.msra.mxu0 %v383
        %1997 = vmatpush.msra.mxu0 %v379
        %1998 = vmatpush.msra.mxu0 %v375
        %1999 = vmatpush.msra.mxu0 %v371
        %2000 = vmatpush.msra.mxu0 %v367
        %2001 = vmatpush.msra.mxu0 %v363
        %2002 = vmatpush.msra.mxu0 %v359
        %2003 = vmatmul.f32.gmra.mxu0 %v278
        %v2004 = vpop.f32.mrf.mxu0
        %v2005 = vadd.f32 %v1985, %v2004
        %2006 = vdwg.mxu0
        %2007 = vmatpush.msra.mxu0 %v483
        %2008 = vmatpush.msra.mxu0 %v479
        %2009 = vmatpush.msra.mxu0 %v475
        %2010 = vmatpush.msra.mxu0 %v471
        %2011 = vmatpush.msra.mxu0 %v467
        %2012 = vmatpush.msra.mxu0 %v463
        %2013 = vmatpush.msra.mxu0 %v459
        %2014 = vmatpush.msra.mxu0 %v455
        %2015 = vmatpush.msra.mxu0 %v451
        %2016 = vmatpush.msra.mxu0 %v447
        %2017 = vmatpush.msra.mxu0 %v443
        %2018 = vmatpush.msra.mxu0 %v439
        %2019 = vmatpush.msra.mxu0 %v435
        %2020 = vmatpush.msra.mxu0 %v431
        %2021 = vmatpush.msra.mxu0 %v427
        %2022 = vmatpush.msra.mxu0 %v423
        %2023 = vmatmul.f32.gmra.mxu0 %v279
        %v2024 = vpop.f32.mrf.mxu0
        %v2025 = vadd.f32 %v2005, %v2024
        %2026 = vdwg.mxu0
        %2027 = vmatpush.msra.mxu0 %v547
        %2028 = vmatpush.msra.mxu0 %v543
        %2029 = vmatpush.msra.mxu0 %v539
        %2030 = vmatpush.msra.mxu0 %v535
        %2031 = vmatpush.msra.mxu0 %v531
        %2032 = vmatpush.msra.mxu0 %v527
        %2033 = vmatpush.msra.mxu0 %v523
        %2034 = vmatpush.msra.mxu0 %v519
        %2035 = vmatpush.msra.mxu0 %v515
        %2036 = vmatpush.msra.mxu0 %v511
        %2037 = vmatpush.msra.mxu0 %v507
        %2038 = vmatpush.msra.mxu0 %v503
        %2039 = vmatpush.msra.mxu0 %v499
        %2040 = vmatpush.msra.mxu0 %v495
        %2041 = vmatpush.msra.mxu0 %v491
        %2042 = vmatpush.msra.mxu0 %v487
        %2043 = vmatmul.f32.gmra.mxu0 %v280
        %v2044 = vpop.f32.mrf.mxu0
        %v2045 = vadd.f32 %v2025, %v2044
        %2046 = vdwg.mxu0
        %2047 = vmatpush.msra.mxu0 %v611
        %2048 = vmatpush.msra.mxu0 %v607
        %2049 = vmatpush.msra.mxu0 %v603
        %2050 = vmatpush.msra.mxu0 %v599
        %2051 = vmatpush.msra.mxu0 %v595
        %2052 = vmatpush.msra.mxu0 %v591
        %2053 = vmatpush.msra.mxu0 %v587
        %2054 = vmatpush.msra.mxu0 %v583
        %2055 = vmatpush.msra.mxu0 %v579
        %2056 = vmatpush.msra.mxu0 %v575
        %2057 = vmatpush.msra.mxu0 %v571
        %2058 = vmatpush.msra.mxu0 %v567
        %2059 = vmatpush.msra.mxu0 %v563
        %2060 = vmatpush.msra.mxu0 %v559
        %2061 = vmatpush.msra.mxu0 %v555
        %2062 = vmatpush.msra.mxu0 %v551
        %2063 = vmatmul.f32.gmra.mxu0 %v281
        %v2064 = vpop.f32.mrf.mxu0
        %v2065 = vadd.f32 %v2045, %v2064
        %2066 = vdwg.mxu0
        %2067 = vmatpush.msra.mxu0 %v675
        %2068 = vmatpush.msra.mxu0 %v671
        %2069 = vmatpush.msra.mxu0 %v667
        %2070 = vmatpush.msra.mxu0 %v663
        %2071 = vmatpush.msra.mxu0 %v659
        %2072 = vmatpush.msra.mxu0 %v655
        %2073 = vmatpush.msra.mxu0 %v651
        %2074 = vmatpush.msra.mxu0 %v647
        %2075 = vmatpush.msra.mxu0 %v643
        %2076 = vmatpush.msra.mxu0 %v639
        %2077 = vmatpush.msra.mxu0 %v635
        %2078 = vmatpush.msra.mxu0 %v631
        %2079 = vmatpush.msra.mxu0 %v627
        %2080 = vmatpush.msra.mxu0 %v623
        %2081 = vmatpush.msra.mxu0 %v619
        %2082 = vmatpush.msra.mxu0 %v615
        %2083 = vmatmul.f32.gmra.mxu0 %v282
        %v2084 = vpop.f32.mrf.mxu0
        %v2085 = vadd.f32 %v2065, %v2084
        %2086 = vdwg.mxu0
        %2087 = vmatpush.msra.mxu0 %v739
        %2088 = vmatpush.msra.mxu0 %v735
        %2089 = vmatpush.msra.mxu0 %v731
        %2090 = vmatpush.msra.mxu0 %v727
        %2091 = vmatpush.msra.mxu0 %v723
        %2092 = vmatpush.msra.mxu0 %v719
        %2093 = vmatpush.msra.mxu0 %v715
        %2094 = vmatpush.msra.mxu0 %v711
        %2095 = vmatpush.msra.mxu0 %v707
        %2096 = vmatpush.msra.mxu0 %v703
        %2097 = vmatpush.msra.mxu0 %v699
        %2098 = vmatpush.msra.mxu0 %v695
        %2099 = vmatpush.msra.mxu0 %v691
        %2100 = vmatpush.msra.mxu0 %v687
        %2101 = vmatpush.msra.mxu0 %v683
        %2102 = vmatpush.msra.mxu0 %v679
        %2103 = vmatmul.f32.gmra.mxu0 %v283
        %v2104 = vpop.f32.mrf.mxu0
        %v2105 = vadd.f32 %v2085, %v2104
        %2106 = vdwg.mxu0
        %2107 = vmatpush.msra.mxu0 %v803
        %2108 = vmatpush.msra.mxu0 %v799
        %2109 = vmatpush.msra.mxu0 %v795
        %2110 = vmatpush.msra.mxu0 %v791
        %2111 = vmatpush.msra.mxu0 %v787
        %2112 = vmatpush.msra.mxu0 %v783
        %2113 = vmatpush.msra.mxu0 %v779
        %2114 = vmatpush.msra.mxu0 %v775
        %2115 = vmatpush.msra.mxu0 %v771
        %2116 = vmatpush.msra.mxu0 %v767
        %2117 = vmatpush.msra.mxu0 %v763
        %2118 = vmatpush.msra.mxu0 %v759
        %2119 = vmatpush.msra.mxu0 %v755
        %2120 = vmatpush.msra.mxu0 %v751
        %2121 = vmatpush.msra.mxu0 %v747
        %2122 = vmatpush.msra.mxu0 %v743
        %2123 = vmatmul.f32.gmra.mxu0 %v284
        %v2124 = vpop.f32.mrf.mxu0
        %v2125 = vadd.f32 %v2105, %v2124
        %2126 = vdwg.mxu0
        %2127 = vmatpush.msra.mxu0 %v867
        %2128 = vmatpush.msra.mxu0 %v863
        %2129 = vmatpush.msra.mxu0 %v859
        %2130 = vmatpush.msra.mxu0 %v855
        %2131 = vmatpush.msra.mxu0 %v851
        %2132 = vmatpush.msra.mxu0 %v847
        %2133 = vmatpush.msra.mxu0 %v843
        %2134 = vmatpush.msra.mxu0 %v839
        %2135 = vmatpush.msra.mxu0 %v835
        %2136 = vmatpush.msra.mxu0 %v831
        %2137 = vmatpush.msra.mxu0 %v827
        %2138 = vmatpush.msra.mxu0 %v823
        %2139 = vmatpush.msra.mxu0 %v819
        %2140 = vmatpush.msra.mxu0 %v815
        %2141 = vmatpush.msra.mxu0 %v811
        %2142 = vmatpush.msra.mxu0 %v807
        %2143 = vmatmul.f32.gmra.mxu0 %v285
        %v2144 = vpop.f32.mrf.mxu0
        %v2145 = vadd.f32 %v2125, %v2144
        %2146 = vdwg.mxu0
        %2147 = vmatpush.msra.mxu0 %v931
        %2148 = vmatpush.msra.mxu0 %v927
        %2149 = vmatpush.msra.mxu0 %v923
        %2150 = vmatpush.msra.mxu0 %v919
        %2151 = vmatpush.msra.mxu0 %v915
        %2152 = vmatpush.msra.mxu0 %v911
        %2153 = vmatpush.msra.mxu0 %v907
        %2154 = vmatpush.msra.mxu0 %v903
        %2155 = vmatpush.msra.mxu0 %v899
        %2156 = vmatpush.msra.mxu0 %v895
        %2157 = vmatpush.msra.mxu0 %v891
        %2158 = vmatpush.msra.mxu0 %v887
        %2159 = vmatpush.msra.mxu0 %v883
        %2160 = vmatpush.msra.mxu0 %v879
        %2161 = vmatpush.msra.mxu0 %v875
        %2162 = vmatpush.msra.mxu0 %v871
        %2163 = vmatmul.f32.gmra.mxu0 %v286
        %v2164 = vpop.f32.mrf.mxu0
        %v2165 = vadd.f32 %v2145, %v2164
        %2166 = vdwg.mxu0
        %2167 = vmatpush.msra.mxu0 %v995
        %2168 = vmatpush.msra.mxu0 %v991
        %2169 = vmatpush.msra.mxu0 %v987
        %2170 = vmatpush.msra.mxu0 %v983
        %2171 = vmatpush.msra.mxu0 %v979
        %2172 = vmatpush.msra.mxu0 %v975
        %2173 = vmatpush.msra.mxu0 %v971
        %2174 = vmatpush.msra.mxu0 %v967
        %2175 = vmatpush.msra.mxu0 %v963
        %2176 = vmatpush.msra.mxu0 %v959
        %2177 = vmatpush.msra.mxu0 %v955
        %2178 = vmatpush.msra.mxu0 %v951
        %2179 = vmatpush.msra.mxu0 %v947
        %2180 = vmatpush.msra.mxu0 %v943
        %2181 = vmatpush.msra.mxu0 %v939
        %2182 = vmatpush.msra.mxu0 %v935
        %2183 = vmatmul.f32.gmra.mxu0 %v287
        %v2184 = vpop.f32.mrf.mxu0
        %v2185 = vadd.f32 %v2165, %v2184
        %2186 = vdwg.mxu0
        %2187 = vmatpush.msra.mxu0 %v1059
        %2188 = vmatpush.msra.mxu0 %v1055
        %2189 = vmatpush.msra.mxu0 %v1051
        %2190 = vmatpush.msra.mxu0 %v1047
        %2191 = vmatpush.msra.mxu0 %v1043
        %2192 = vmatpush.msra.mxu0 %v1039
        %2193 = vmatpush.msra.mxu0 %v1035
        %2194 = vmatpush.msra.mxu0 %v1031
        %2195 = vmatpush.msra.mxu0 %v1027
        %2196 = vmatpush.msra.mxu0 %v1023
        %2197 = vmatpush.msra.mxu0 %v1019
        %2198 = vmatpush.msra.mxu0 %v1015
        %2199 = vmatpush.msra.mxu0 %v1011
        %2200 = vmatpush.msra.mxu0 %v1007
        %2201 = vmatpush.msra.mxu0 %v1003
        %2202 = vmatpush.msra.mxu0 %v999
        %2203 = vmatmul.f32.gmra.mxu0 %v288
        %v2204 = vpop.f32.mrf.mxu0
        %v2205 = vadd.f32 %v2185, %v2204
        %2206 = vdwg.mxu0
        %2207 = vmatpush.msra.mxu0 %v1123
        %2208 = vmatpush.msra.mxu0 %v1119
        %2209 = vmatpush.msra.mxu0 %v1115
        %2210 = vmatpush.msra.mxu0 %v1111
        %2211 = vmatpush.msra.mxu0 %v1107
        %2212 = vmatpush.msra.mxu0 %v1103
        %2213 = vmatpush.msra.mxu0 %v1099
        %2214 = vmatpush.msra.mxu0 %v1095
        %2215 = vmatpush.msra.mxu0 %v1091
        %2216 = vmatpush.msra.mxu0 %v1087
        %2217 = vmatpush.msra.mxu0 %v1083
        %2218 = vmatpush.msra.mxu0 %v1079
        %2219 = vmatpush.msra.mxu0 %v1075
        %2220 = vmatpush.msra.mxu0 %v1071
        %2221 = vmatpush.msra.mxu0 %v1067
        %2222 = vmatpush.msra.mxu0 %v1063
        %2223 = vmatmul.f32.gmra.mxu0 %v289
        %v2224 = vpop.f32.mrf.mxu0
        %v2225 = vadd.f32 %v2205, %v2224
        %2226 = vdwg.mxu0
        %2227 = vmatpush.msra.mxu0 %v1187
        %2228 = vmatpush.msra.mxu0 %v1183
        %2229 = vmatpush.msra.mxu0 %v1179
        %2230 = vmatpush.msra.mxu0 %v1175
        %2231 = vmatpush.msra.mxu0 %v1171
        %2232 = vmatpush.msra.mxu0 %v1167
        %2233 = vmatpush.msra.mxu0 %v1163
        %2234 = vmatpush.msra.mxu0 %v1159
        %2235 = vmatpush.msra.mxu0 %v1155
        %2236 = vmatpush.msra.mxu0 %v1151
        %2237 = vmatpush.msra.mxu0 %v1147
        %2238 = vmatpush.msra.mxu0 %v1143
        %2239 = vmatpush.msra.mxu0 %v1139
        %2240 = vmatpush.msra.mxu0 %v1135
        %2241 = vmatpush.msra.mxu0 %v1131
        %2242 = vmatpush.msra.mxu0 %v1127
        %2243 = vmatmul.f32.gmra.mxu0 %v290
        %v2244 = vpop.f32.mrf.mxu0
        %v2245 = vadd.f32 %v2225, %v2244
        %2246 = vdwg.mxu0
        %2247 = vmatpush.msra.mxu0 %v1251
        %2248 = vmatpush.msra.mxu0 %v1247
        %2249 = vmatpush.msra.mxu0 %v1243
        %2250 = vmatpush.msra.mxu0 %v1239
        %2251 = vmatpush.msra.mxu0 %v1235
        %2252 = vmatpush.msra.mxu0 %v1231
        %2253 = vmatpush.msra.mxu0 %v1227
        %2254 = vmatpush.msra.mxu0 %v1223
        %2255 = vmatpush.msra.mxu0 %v1219
        %2256 = vmatpush.msra.mxu0 %v1215
        %2257 = vmatpush.msra.mxu0 %v1211
        %2258 = vmatpush.msra.mxu0 %v1207
        %2259 = vmatpush.msra.mxu0 %v1203
        %2260 = vmatpush.msra.mxu0 %v1199
        %2261 = vmatpush.msra.mxu0 %v1195
        %2262 = vmatpush.msra.mxu0 %v1191
        %2263 = vmatmul.f32.gmra.mxu0 %v291
        %v2264 = vpop.f32.mrf.mxu0
        %v2265 = vadd.f32 %v2245, %v2264
        %2266 = vdwg.mxu0
        %2267 = vmatpush.msra.mxu0 %v1315
        %2268 = vmatpush.msra.mxu0 %v1311
        %2269 = vmatpush.msra.mxu0 %v1307
        %2270 = vmatpush.msra.mxu0 %v1303
        %2271 = vmatpush.msra.mxu0 %v1299
        %2272 = vmatpush.msra.mxu0 %v1295
        %2273 = vmatpush.msra.mxu0 %v1291
        %2274 = vmatpush.msra.mxu0 %v1287
        %2275 = vmatpush.msra.mxu0 %v1283
        %2276 = vmatpush.msra.mxu0 %v1279
        %2277 = vmatpush.msra.mxu0 %v1275
        %2278 = vmatpush.msra.mxu0 %v1271
        %2279 = vmatpush.msra.mxu0 %v1267
        %2280 = vmatpush.msra.mxu0 %v1263
        %2281 = vmatpush.msra.mxu0 %v1259
        %2282 = vmatpush.msra.mxu0 %v1255
        %2283 = vmatmul.f32.gmra.mxu0 %v292
        %v2284 = vpop.f32.mrf.mxu0
        %v2285 = vadd.f32 %v2265, %v2284
        %2286 = vdwg.mxu0
        %2287 = vmatpush.msra.mxu0 %v356
        %2288 = vmatpush.msra.mxu0 %v352
        %2289 = vmatpush.msra.mxu0 %v348
        %2290 = vmatpush.msra.mxu0 %v344
        %2291 = vmatpush.msra.mxu0 %v340
        %2292 = vmatpush.msra.mxu0 %v336
        %2293 = vmatpush.msra.mxu0 %v332
        %2294 = vmatpush.msra.mxu0 %v328
        %2295 = vmatpush.msra.mxu0 %v324
        %2296 = vmatpush.msra.mxu0 %v320
        %2297 = vmatpush.msra.mxu0 %v316
        %2298 = vmatpush.msra.mxu0 %v312
        %2299 = vmatpush.msra.mxu0 %v308
        %2300 = vmatpush.msra.mxu0 %v304
        %2301 = vmatpush.msra.mxu0 %v300
        %2302 = vmatpush.msra.mxu0 %v296
        %2303 = vmatmul.f32.gmra.mxu0 %v277
        %v2304 = vpop.f32.mrf.mxu0
        %v2305 = vadd.f32 %v1322, %v2304
        %2306 = vdwg.mxu0
        %2307 = vmatpush.msra.mxu0 %v420
        %2308 = vmatpush.msra.mxu0 %v416
        %2309 = vmatpush.msra.mxu0 %v412
        %2310 = vmatpush.msra.mxu0 %v408
        %2311 = vmatpush.msra.mxu0 %v404
        %2312 = vmatpush.msra.mxu0 %v400
        %2313 = vmatpush.msra.mxu0 %v396
        %2314 = vmatpush.msra.mxu0 %v392
        %2315 = vmatpush.msra.mxu0 %v388
        %2316 = vmatpush.msra.mxu0 %v384
        %2317 = vmatpush.msra.mxu0 %v380
        %2318 = vmatpush.msra.mxu0 %v376
        %2319 = vmatpush.msra.mxu0 %v372
        %2320 = vmatpush.msra.mxu0 %v368
        %2321 = vmatpush.msra.mxu0 %v364
        %2322 = vmatpush.msra.mxu0 %v360
        %2323 = vmatmul.f32.gmra.mxu0 %v278
        %v2324 = vpop.f32.mrf.mxu0
        %v2325 = vadd.f32 %v2305, %v2324
        %2326 = vdwg.mxu0
        %2327 = vmatpush.msra.mxu0 %v484
        %2328 = vmatpush.msra.mxu0 %v480
        %2329 = vmatpush.msra.mxu0 %v476
        %2330 = vmatpush.msra.mxu0 %v472
        %2331 = vmatpush.msra.mxu0 %v468
        %2332 = vmatpush.msra.mxu0 %v464
        %2333 = vmatpush.msra.mxu0 %v460
        %2334 = vmatpush.msra.mxu0 %v456
        %2335 = vmatpush.msra.mxu0 %v452
        %2336 = vmatpush.msra.mxu0 %v448
        %2337 = vmatpush.msra.mxu0 %v444
        %2338 = vmatpush.msra.mxu0 %v440
        %2339 = vmatpush.msra.mxu0 %v436
        %2340 = vmatpush.msra.mxu0 %v432
        %2341 = vmatpush.msra.mxu0 %v428
        %2342 = vmatpush.msra.mxu0 %v424
        %2343 = vmatmul.f32.gmra.mxu0 %v279
        %v2344 = vpop.f32.mrf.mxu0
        %v2345 = vadd.f32 %v2325, %v2344
        %2346 = vdwg.mxu0
        %2347 = vmatpush.msra.mxu0 %v548
        %2348 = vmatpush.msra.mxu0 %v544
        %2349 = vmatpush.msra.mxu0 %v540
        %2350 = vmatpush.msra.mxu0 %v536
        %2351 = vmatpush.msra.mxu0 %v532
        %2352 = vmatpush.msra.mxu0 %v528
        %2353 = vmatpush.msra.mxu0 %v524
        %2354 = vmatpush.msra.mxu0 %v520
        %2355 = vmatpush.msra.mxu0 %v516
        %2356 = vmatpush.msra.mxu0 %v512
        %2357 = vmatpush.msra.mxu0 %v508
        %2358 = vmatpush.msra.mxu0 %v504
        %2359 = vmatpush.msra.mxu0 %v500
        %2360 = vmatpush.msra.mxu0 %v496
        %2361 = vmatpush.msra.mxu0 %v492
        %2362 = vmatpush.msra.mxu0 %v488
        %2363 = vmatmul.f32.gmra.mxu0 %v280
        %v2364 = vpop.f32.mrf.mxu0
        %v2365 = vadd.f32 %v2345, %v2364
        %2366 = vdwg.mxu0
        %2367 = vmatpush.msra.mxu0 %v612
        %2368 = vmatpush.msra.mxu0 %v608
        %2369 = vmatpush.msra.mxu0 %v604
        %2370 = vmatpush.msra.mxu0 %v600
        %2371 = vmatpush.msra.mxu0 %v596
        %2372 = vmatpush.msra.mxu0 %v592
        %2373 = vmatpush.msra.mxu0 %v588
        %2374 = vmatpush.msra.mxu0 %v584
        %2375 = vmatpush.msra.mxu0 %v580
        %2376 = vmatpush.msra.mxu0 %v576
        %2377 = vmatpush.msra.mxu0 %v572
        %2378 = vmatpush.msra.mxu0 %v568
        %2379 = vmatpush.msra.mxu0 %v564
        %2380 = vmatpush.msra.mxu0 %v560
        %2381 = vmatpush.msra.mxu0 %v556
        %2382 = vmatpush.msra.mxu0 %v552
        %2383 = vmatmul.f32.gmra.mxu0 %v281
        %v2384 = vpop.f32.mrf.mxu0
        %v2385 = vadd.f32 %v2365, %v2384
        %2386 = vdwg.mxu0
        %2387 = vmatpush.msra.mxu0 %v676
        %2388 = vmatpush.msra.mxu0 %v672
        %2389 = vmatpush.msra.mxu0 %v668
        %2390 = vmatpush.msra.mxu0 %v664
        %2391 = vmatpush.msra.mxu0 %v660
        %2392 = vmatpush.msra.mxu0 %v656
        %2393 = vmatpush.msra.mxu0 %v652
        %2394 = vmatpush.msra.mxu0 %v648
        %2395 = vmatpush.msra.mxu0 %v644
        %2396 = vmatpush.msra.mxu0 %v640
        %2397 = vmatpush.msra.mxu0 %v636
        %2398 = vmatpush.msra.mxu0 %v632
        %2399 = vmatpush.msra.mxu0 %v628
        %2400 = vmatpush.msra.mxu0 %v624
        %2401 = vmatpush.msra.mxu0 %v620
        %2402 = vmatpush.msra.mxu0 %v616
        %2403 = vmatmul.f32.gmra.mxu0 %v282
        %v2404 = vpop.f32.mrf.mxu0
        %v2405 = vadd.f32 %v2385, %v2404
        %2406 = vdwg.mxu0
        %2407 = vmatpush.msra.mxu0 %v740
        %2408 = vmatpush.msra.mxu0 %v736
        %2409 = vmatpush.msra.mxu0 %v732
        %2410 = vmatpush.msra.mxu0 %v728
        %2411 = vmatpush.msra.mxu0 %v724
        %2412 = vmatpush.msra.mxu0 %v720
        %2413 = vmatpush.msra.mxu0 %v716
        %2414 = vmatpush.msra.mxu0 %v712
        %2415 = vmatpush.msra.mxu0 %v708
        %2416 = vmatpush.msra.mxu0 %v704
        %2417 = vmatpush.msra.mxu0 %v700
        %2418 = vmatpush.msra.mxu0 %v696
        %2419 = vmatpush.msra.mxu0 %v692
        %2420 = vmatpush.msra.mxu0 %v688
        %2421 = vmatpush.msra.mxu0 %v684
        %2422 = vmatpush.msra.mxu0 %v680
        %2423 = vmatmul.f32.gmra.mxu0 %v283
        %v2424 = vpop.f32.mrf.mxu0
        %v2425 = vadd.f32 %v2405, %v2424
        %2426 = vdwg.mxu0
        %2427 = vmatpush.msra.mxu0 %v804
        %2428 = vmatpush.msra.mxu0 %v800
        %2429 = vmatpush.msra.mxu0 %v796
        %2430 = vmatpush.msra.mxu0 %v792
        %2431 = vmatpush.msra.mxu0 %v788
        %2432 = vmatpush.msra.mxu0 %v784
        %2433 = vmatpush.msra.mxu0 %v780
        %2434 = vmatpush.msra.mxu0 %v776
        %2435 = vmatpush.msra.mxu0 %v772
        %2436 = vmatpush.msra.mxu0 %v768
        %2437 = vmatpush.msra.mxu0 %v764
        %2438 = vmatpush.msra.mxu0 %v760
        %2439 = vmatpush.msra.mxu0 %v756
        %2440 = vmatpush.msra.mxu0 %v752
        %2441 = vmatpush.msra.mxu0 %v748
        %2442 = vmatpush.msra.mxu0 %v744
        %2443 = vmatmul.f32.gmra.mxu0 %v284
        %v2444 = vpop.f32.mrf.mxu0
        %v2445 = vadd.f32 %v2425, %v2444
        %2446 = vdwg.mxu0
        %2447 = vmatpush.msra.mxu0 %v868
        %2448 = vmatpush.msra.mxu0 %v864
        %2449 = vmatpush.msra.mxu0 %v860
        %2450 = vmatpush.msra.mxu0 %v856
        %2451 = vmatpush.msra.mxu0 %v852
        %2452 = vmatpush.msra.mxu0 %v848
        %2453 = vmatpush.msra.mxu0 %v844
        %2454 = vmatpush.msra.mxu0 %v840
        %2455 = vmatpush.msra.mxu0 %v836
        %2456 = vmatpush.msra.mxu0 %v832
        %2457 = vmatpush.msra.mxu0 %v828
        %2458 = vmatpush.msra.mxu0 %v824
        %2459 = vmatpush.msra.mxu0 %v820
        %2460 = vmatpush.msra.mxu0 %v816
        %2461 = vmatpush.msra.mxu0 %v812
        %2462 = vmatpush.msra.mxu0 %v808
        %2463 = vmatmul.f32.gmra.mxu0 %v285
        %v2464 = vpop.f32.mrf.mxu0
        %v2465 = vadd.f32 %v2445, %v2464
        %2466 = vdwg.mxu0
        %2467 = vmatpush.msra.mxu0 %v932
        %2468 = vmatpush.msra.mxu0 %v928
        %2469 = vmatpush.msra.mxu0 %v924
        %2470 = vmatpush.msra.mxu0 %v920
        %2471 = vmatpush.msra.mxu0 %v916
        %2472 = vmatpush.msra.mxu0 %v912
        %2473 = vmatpush.msra.mxu0 %v908
        %2474 = vmatpush.msra.mxu0 %v904
        %2475 = vmatpush.msra.mxu0 %v900
        %2476 = vmatpush.msra.mxu0 %v896
        %2477 = vmatpush.msra.mxu0 %v892
        %2478 = vmatpush.msra.mxu0 %v888
        %2479 = vmatpush.msra.mxu0 %v884
        %2480 = vmatpush.msra.mxu0 %v880
        %2481 = vmatpush.msra.mxu0 %v876
        %2482 = vmatpush.msra.mxu0 %v872
        %2483 = vmatmul.f32.gmra.mxu0 %v286
        %v2484 = vpop.f32.mrf.mxu0
        %v2485 = vadd.f32 %v2465, %v2484
        %2486 = vdwg.mxu0
        %2487 = vmatpush.msra.mxu0 %v996
        %2488 = vmatpush.msra.mxu0 %v992
        %2489 = vmatpush.msra.mxu0 %v988
        %2490 = vmatpush.msra.mxu0 %v984
        %2491 = vmatpush.msra.mxu0 %v980
        %2492 = vmatpush.msra.mxu0 %v976
        %2493 = vmatpush.msra.mxu0 %v972
        %2494 = vmatpush.msra.mxu0 %v968
        %2495 = vmatpush.msra.mxu0 %v964
        %2496 = vmatpush.msra.mxu0 %v960
        %2497 = vmatpush.msra.mxu0 %v956
        %2498 = vmatpush.msra.mxu0 %v952
        %2499 = vmatpush.msra.mxu0 %v948
        %2500 = vmatpush.msra.mxu0 %v944
        %2501 = vmatpush.msra.mxu0 %v940
        %2502 = vmatpush.msra.mxu0 %v936
        %2503 = vmatmul.f32.gmra.mxu0 %v287
        %v2504 = vpop.f32.mrf.mxu0
        %v2505 = vadd.f32 %v2485, %v2504
        %2506 = vdwg.mxu0
        %2507 = vmatpush.msra.mxu0 %v1060
        %2508 = vmatpush.msra.mxu0 %v1056
        %2509 = vmatpush.msra.mxu0 %v1052
        %2510 = vmatpush.msra.mxu0 %v1048
        %2511 = vmatpush.msra.mxu0 %v1044
        %2512 = vmatpush.msra.mxu0 %v1040
        %2513 = vmatpush.msra.mxu0 %v1036
        %2514 = vmatpush.msra.mxu0 %v1032
        %2515 = vmatpush.msra.mxu0 %v1028
        %2516 = vmatpush.msra.mxu0 %v1024
        %2517 = vmatpush.msra.mxu0 %v1020
        %2518 = vmatpush.msra.mxu0 %v1016
        %2519 = vmatpush.msra.mxu0 %v1012
        %2520 = vmatpush.msra.mxu0 %v1008
        %2521 = vmatpush.msra.mxu0 %v1004
        %2522 = vmatpush.msra.mxu0 %v1000
        %2523 = vmatmul.f32.gmra.mxu0 %v288
        %v2524 = vpop.f32.mrf.mxu0
        %v2525 = vadd.f32 %v2505, %v2524
        %2526 = vdwg.mxu0
        %2527 = vmatpush.msra.mxu0 %v1124
        %2528 = vmatpush.msra.mxu0 %v1120
        %2529 = vmatpush.msra.mxu0 %v1116
        %2530 = vmatpush.msra.mxu0 %v1112
        %2531 = vmatpush.msra.mxu0 %v1108
        %2532 = vmatpush.msra.mxu0 %v1104
        %2533 = vmatpush.msra.mxu0 %v1100
        %2534 = vmatpush.msra.mxu0 %v1096
        %2535 = vmatpush.msra.mxu0 %v1092
        %2536 = vmatpush.msra.mxu0 %v1088
        %2537 = vmatpush.msra.mxu0 %v1084
        %2538 = vmatpush.msra.mxu0 %v1080
        %2539 = vmatpush.msra.mxu0 %v1076
        %2540 = vmatpush.msra.mxu0 %v1072
        %2541 = vmatpush.msra.mxu0 %v1068
        %2542 = vmatpush.msra.mxu0 %v1064
        %2543 = vmatmul.f32.gmra.mxu0 %v289
        %v2544 = vpop.f32.mrf.mxu0
        %v2545 = vadd.f32 %v2525, %v2544
        %2546 = vdwg.mxu0
        %2547 = vmatpush.msra.mxu0 %v1188
        %2548 = vmatpush.msra.mxu0 %v1184
        %2549 = vmatpush.msra.mxu0 %v1180
        %2550 = vmatpush.msra.mxu0 %v1176
        %2551 = vmatpush.msra.mxu0 %v1172
        %2552 = vmatpush.msra.mxu0 %v1168
        %2553 = vmatpush.msra.mxu0 %v1164
        %2554 = vmatpush.msra.mxu0 %v1160
        %2555 = vmatpush.msra.mxu0 %v1156
        %2556 = vmatpush.msra.mxu0 %v1152
        %2557 = vmatpush.msra.mxu0 %v1148
        %2558 = vmatpush.msra.mxu0 %v1144
        %2559 = vmatpush.msra.mxu0 %v1140
        %2560 = vmatpush.msra.mxu0 %v1136
        %2561 = vmatpush.msra.mxu0 %v1132
        %2562 = vmatpush.msra.mxu0 %v1128
        %2563 = vmatmul.f32.gmra.mxu0 %v290
        %v2564 = vpop.f32.mrf.mxu0
        %v2565 = vadd.f32 %v2545, %v2564
        %2566 = vdwg.mxu0
        %2567 = vmatpush.msra.mxu0 %v1252
        %2568 = vmatpush.msra.mxu0 %v1248
        %2569 = vmatpush.msra.mxu0 %v1244
        %2570 = vmatpush.msra.mxu0 %v1240
        %2571 = vmatpush.msra.mxu0 %v1236
        %2572 = vmatpush.msra.mxu0 %v1232
        %2573 = vmatpush.msra.mxu0 %v1228
        %2574 = vmatpush.msra.mxu0 %v1224
        %2575 = vmatpush.msra.mxu0 %v1220
        %2576 = vmatpush.msra.mxu0 %v1216
        %2577 = vmatpush.msra.mxu0 %v1212
        %2578 = vmatpush.msra.mxu0 %v1208
        %2579 = vmatpush.msra.mxu0 %v1204
        %2580 = vmatpush.msra.mxu0 %v1200
        %2581 = vmatpush.msra.mxu0 %v1196
        %2582 = vmatpush.msra.mxu0 %v1192
        %2583 = vmatmul.f32.gmra.mxu0 %v291
        %v2584 = vpop.f32.mrf.mxu0
        %v2585 = vadd.f32 %v2565, %v2584
        %2586 = vdwg.mxu0
        %2587 = vmatpush.msra.mxu0 %v1316
        %2588 = vmatpush.msra.mxu0 %v1312
        %2589 = vmatpush.msra.mxu0 %v1308
        %2590 = vmatpush.msra.mxu0 %v1304
        %2591 = vmatpush.msra.mxu0 %v1300
        %2592 = vmatpush.msra.mxu0 %v1296
        %2593 = vmatpush.msra.mxu0 %v1292
        %2594 = vmatpush.msra.mxu0 %v1288
        %2595 = vmatpush.msra.mxu0 %v1284
        %2596 = vmatpush.msra.mxu0 %v1280
        %2597 = vmatpush.msra.mxu0 %v1276
        %2598 = vmatpush.msra.mxu0 %v1272
        %2599 = vmatpush.msra.mxu0 %v1268
        %2600 = vmatpush.msra.mxu0 %v1264
        %2601 = vmatpush.msra.mxu0 %v1260
        %2602 = vmatpush.msra.mxu0 %v1256
        %2603 = vmatmul.f32.gmra.mxu0 %v292
        %v2604 = vpop.f32.mrf.mxu0
        %v2605 = vadd.f32 %v2585, %v2604
        %2606 = vdwg.mxu0
        %v2607 = vmax.f32 %v1645, 0.0
        %v2608 = vmax.f32 %v1965, 0.0
        %v2609 = vmax.f32 %v2285, 0.0
        %v2610 = vmax.f32 %v2605, 0.0
        %s2611 = smul.u32 %s25, 4
        %s2612 = smul.addr %s2611, 8
        %s2613 = scalar_lea.vmem [#allocation3], %s2612
        %2614 = vst [vmem:[%s2613] sm:$0xff] %v2607
        %2615 = vst [vmem:[%s2613 + $0x8] sm:$0xff] %v2608
        %2616 = vst [vmem:[%s2613 + $0x10] sm:$0xff] %v2609
        %2617 = vst [vmem:[%s2613 + $0x18] sm:$0xff] %v2610
        %p2618 = scmp.eq.s32.totalorder %s25, 3
        // Predicated region
        $region45: #{net_forward.4} parent=31 // pred_check
          %p2619 = pneg %p2618
        $region46: #{net_forward.4} parent=31 // pred_check_branch
          %2621 = sbr.rel (%p2619) target = $region48
        $region47: #{net_forward.4} parent=31 // pred_region
          %v2622 = vld [vmem:[#allocation3] sm:$0xff]
          %v2623 = vld [vmem:[#allocation3 + $0x8] sm:$0xff]
          %v2624 = vld [vmem:[#allocation3 + $0x10] sm:$0xff]
          %v2625 = vld [vmem:[#allocation3 + $0x18] sm:$0xff]
          %2626 = vst [vmem:[#allocation2] sm:$0xff] %v2622
          %2627 = vst [vmem:[#allocation2 + $0x8] sm:$0xff] %v2623
          %2628 = vst [vmem:[#allocation2 + $0x10] sm:$0xff] %v2624
          %2629 = vst [vmem:[#allocation2 + $0x18] sm:$0xff] %v2625
          %s2630 = scalar_lea.vmem [#allocation3], 32
          %v2631 = vld [vmem:[%s2630] sm:$0xff]
          %v2632 = vld [vmem:[%s2630 + $0x8] sm:$0xff]
          %v2633 = vld [vmem:[%s2630 + $0x10] sm:$0xff]
          %v2634 = vld [vmem:[%s2630 + $0x18] sm:$0xff]
          %2635 = vst [vmem:[#allocation2 + $0x20] sm:$0xff] %v2631
          %2636 = vst [vmem:[#allocation2 + $0x28] sm:$0xff] %v2632
          %2637 = vst [vmem:[#allocation2 + $0x30] sm:$0xff] %v2633
          %2638 = vst [vmem:[#allocation2 + $0x38] sm:$0xff] %v2634
          %s2639 = scalar_lea.vmem [#allocation3], 64
          %v2640 = vld [vmem:[%s2639] sm:$0xff]
          %v2641 = vld [vmem:[%s2639 + $0x8] sm:$0xff]
          %v2642 = vld [vmem:[%s2639 + $0x10] sm:$0xff]
          %v2643 = vld [vmem:[%s2639 + $0x18] sm:$0xff]
          %2644 = vst [vmem:[#allocation2 + $0x40] sm:$0xff] %v2640
          %2645 = vst [vmem:[#allocation2 + $0x48] sm:$0xff] %v2641
          %2646 = vst [vmem:[#allocation2 + $0x50] sm:$0xff] %v2642
          %2647 = vst [vmem:[#allocation2 + $0x58] sm:$0xff] %v2643
          %s2648 = scalar_lea.vmem [#allocation3], 96
          %v2649 = vld [vmem:[%s2648] sm:$0xff]
          %v2650 = vld [vmem:[%s2648 + $0x8] sm:$0xff]
          %v2651 = vld [vmem:[%s2648 + $0x10] sm:$0xff]
          %v2652 = vld [vmem:[%s2648 + $0x18] sm:$0xff]
          %2653 = vst [vmem:[#allocation2 + $0x60] sm:$0xff] %v2649
          %2654 = vst [vmem:[#allocation2 + $0x68] sm:$0xff] %v2650
          %2655 = vst [vmem:[#allocation2 + $0x70] sm:$0xff] %v2651
          %2656 = vst [vmem:[#allocation2 + $0x78] sm:$0xff] %v2652
        $region48: #{net_forward.4} parent=31 // pred_fallthru
          _
        %p2657 = scmp.eq.s32.totalorder %s24, 4
        %p2658 = pnand %p2657, %p2618
        %p2659 = pneg %p2658
        // Predicated region
        $region49: #{net_forward.4} parent=31 // pred_check
          _
        $region50: #{net_forward.4} parent=31 // pred_check_branch
          %2661 = sbr.rel (%p2658) target = $region52
        $region51: #{net_forward.4} parent=31 // pred_region
          %v2662 = vld [vmem:[#allocation2] sm:$0xff]
          %v2663 = vld [vmem:[#allocation2 + $0x8] sm:$0xff]
          %v2664 = vld [vmem:[#allocation2 + $0x10] sm:$0xff]
          %v2665 = vld [vmem:[#allocation2 + $0x18] sm:$0xff]
          %v2666 = vld [vmem:[#allocation2 + $0x20] sm:$0xff]
          %v2667 = vld [vmem:[#allocation2 + $0x28] sm:$0xff]
          %v2668 = vld [vmem:[#allocation2 + $0x30] sm:$0xff]
          %v2669 = vld [vmem:[#allocation2 + $0x38] sm:$0xff]
          %v2670 = vld [vmem:[#allocation2 + $0x40] sm:$0xff]
          %v2671 = vld [vmem:[#allocation2 + $0x48] sm:$0xff]
          %v2672 = vld [vmem:[#allocation2 + $0x50] sm:$0xff]
          %v2673 = vld [vmem:[#allocation2 + $0x58] sm:$0xff]
          %v2674 = vld [vmem:[#allocation2 + $0x60] sm:$0xff]
          %v2675 = vld [vmem:[#allocation2 + $0x68] sm:$0xff]
          %v2676 = vld [vmem:[#allocation2 + $0x70] sm:$0xff]
          %v2677 = vld [vmem:[#allocation2 + $0x78] sm:$0xff]
          %2678 = vst [vmem:[%s3] sm:$0xff] %v2662
          %2679 = vst [vmem:[%s3 + $0x8] sm:$0xff] %v2663
          %2680 = vst [vmem:[%s3 + $0x10] sm:$0xff] %v2664
          %2681 = vst [vmem:[%s3 + $0x18] sm:$0xff] %v2665
          %2682 = vst [vmem:[%s3 + $0x20] sm:$0xff] %v2666
          %2683 = vst [vmem:[%s3 + $0x28] sm:$0xff] %v2667
          %2684 = vst [vmem:[%s3 + $0x30] sm:$0xff] %v2668
          %2685 = vst [vmem:[%s3 + $0x38] sm:$0xff] %v2669
          %2686 = vst [vmem:[%s3 + $0x40] sm:$0xff] %v2670
          %2687 = vst [vmem:[%s3 + $0x48] sm:$0xff] %v2671
          %2688 = vst [vmem:[%s3 + $0x50] sm:$0xff] %v2672
          %2689 = vst [vmem:[%s3 + $0x58] sm:$0xff] %v2673
          %2690 = vst [vmem:[%s3 + $0x60] sm:$0xff] %v2674
          %2691 = vst [vmem:[%s3 + $0x68] sm:$0xff] %v2675
          %2692 = vst [vmem:[%s3 + $0x70] sm:$0xff] %v2676
          %2693 = vst [vmem:[%s3 + $0x78] sm:$0xff] %v2677
        $region52: #{net_forward.4} parent=31 // pred_fallthru
          _
        // Predicated region
        $region53: #{net_forward.4} parent=31 // pred_check
          %p2694 = pneg %p122
        $region54: #{net_forward.4} parent=31 // pred_check_branch
          %2696 = sbr.rel (%p2694) target = $region56
        $region55: #{net_forward.4} parent=31 // pred_region
          _
        $region56: #{net_forward.4} parent=31 // pred_fallthru
          _
        // Predicated region
        $region57: #{net_forward.4} parent=31 // pred_check
          %p2697 = pneg %p122
        $region58: #{net_forward.4} parent=31 // pred_check_branch
          %2699 = sbr.rel (%p2697) target = $region60
        $region59: #{net_forward.4} parent=31 // pred_region
          _
        $region60: #{net_forward.4} parent=31 // pred_fallthru
          _
      $region32: #{net_forward.4} parent=5 // pred_fallthru
        _
      %p2700 = scmp.le.s32.totalorder 2, %s15
      // Predicated region
      $region61: #{net_forward.4} parent=5 // pred_check
        %p2701 = pneg %p2700
      $region62: #{net_forward.4} parent=5 // pred_check_branch
        %2703 = sbr.rel (%p2701) target = $region64
      $region63: #{net_forward.4} parent=5 // pred_region
        %s2704 = ssub.s32 %s15, 2
      $region64: #{net_forward.4} parent=5 // pred_fallthru
        _
    $region6: #{net_forward.4} parent=1 // loop_footer
      %s19 = sadd.s32 1, %s15
    $region7: #{net_forward.4} parent=1 // loop_footer_branch
      %14 = sbr.rel target = $region3
    $region8: #{net_forward.4} parent=1 // loop_exit
      _
    %2705 = vsyncpa [#allocation5], 1
    %s2706 = scalar_lea.sflag [#allocation5], 1
    %2707 = vsyncpa %s2706, 1
    %2708 = vsyncpa [#allocation7], 1
    %s2709 = scalar_lea.sflag [#allocation7], 1
    %2710 = vsyncpa %s2709, 1

</llo_original>
